<compile_context>
chip_gen: v7x
topology: tpu7x:2x2x1
jax: 0.10.0
libtpu: 0.0.40
codegen_flags: <defaults>
</compile_context>

<pallas_src>
import functools

import jax
import jax.numpy as jnp
from jax.experimental import pallas as pl
from jax.experimental.pallas import tpu as pltpu

C_IN = 512
C_OUT = 6
_LANE = 128


def net_kernel(x_ref, wt_ref, o_ref, acc_ref, *, inv_s):
    # x_ref:  (TN, 512, TS) block of the flattened input
    # wt_ref: (512, 6)      transposed Linear weight (resident)
    # o_ref:  (TN, 6)       output block (revisited across the spatial axis)
    # acc_ref:(TN, 512) f32 pooled-sum accumulator (VMEM scratch)
    s_idx = pl.program_id(1)
    n_s = pl.num_programs(1)

    @pl.when(s_idx == 0)
    def _init():
        acc_ref[...] = jnp.zeros_like(acc_ref)

    x = x_ref[...]                       # (TN, 512, TS)
    ts = x.shape[-1]

    # Mostly-VPU spatial reduction: elementwise adds of lane-aligned 128-wide
    # chunks (cheap cross-vreg VPU work), then one final 128-lane reduce.
    if ts % _LANE == 0 and ts > _LANE:
        chunk = x[..., 0:_LANE].astype(jnp.float32)
        for j in range(1, ts // _LANE):
            chunk = chunk + x[..., j * _LANE:(j + 1) * _LANE].astype(jnp.float32)
        partial = jnp.sum(chunk, axis=-1)            # (TN, 512) f32
    else:
        partial = jnp.sum(x.astype(jnp.float32), axis=-1)

    acc_ref[...] += partial

    @pl.when(s_idx == n_s - 1)
    def _finalize():
        pooled = acc_ref[...] * jnp.float32(inv_s)   # (TN, 512), mean over true S
        out = jnp.dot(pooled, wt_ref[...].astype(jnp.float32),
                      preferred_element_type=jnp.float32)   # (TN, 6)
        o_ref[...] = out.astype(o_ref.dtype)


def _choose_batch_tile(n, max_tn=8):
    # TN must equal N or be a multiple of 8 that divides N (output block is
    # (TN, 6): sublane dim must be %8 or full-extent).
    if n <= max_tn:
        return n
    for tn in range(min(max_tn, n), 0, -1):
        if n % tn == 0 and (tn % 8 == 0):
            return tn
    return n


def _choose_spatial_tile(s, max_ts):
    # Largest multiple-of-128 divisor of s that is <= max_ts (None if no such).
    best = None
    ts = _LANE
    while ts <= max_ts:
        if s % ts == 0:
            best = ts
        ts += _LANE
    return best


def net_forward(x, weight, *, max_tn=8, block_bytes=8 * 1024 * 1024):
    """x: (N, 512, H, W); weight: (6, 512) (PyTorch Linear layout)."""
    n, c, h, w = x.shape
    assert c == C_IN, f"expected {C_IN} channels, got {c}"
    s = h * w
    x_flat = x.reshape(n, c, s)           # the `view(dim, 512, -1)`
    w_t = weight.T                        # (512, 6)

    itemsize = jnp.dtype(x.dtype).itemsize
    tn = _choose_batch_tile(n, max_tn)
    nb = n // tn if n % tn == 0 else 1
    if n % tn != 0:
        tn = n                            # fall back to a single batch tile
        nb = 1

    # Spatial tile: target ~block_bytes per x block (double-buffered by Pallas).
    max_ts = max(_LANE, (block_bytes // (tn * c * itemsize) // _LANE) * _LANE)
    if s <= max_ts:
        ts = s                            # full-extent last dim (always legal)
        s_pad = s
    else:
        ts = _choose_spatial_tile(s, max_ts)
        if ts is None:
            ts = max_ts
            s_pad = ((s + ts - 1) // ts) * ts
            # Zero padding is exact for the mean: zeros add nothing to the sum
            # and we divide by the true S.
            x_flat = jnp.pad(x_flat, ((0, 0), (0, 0), (0, s_pad - s)))
        else:
            s_pad = s
    ns = s_pad // ts

    kernel = functools.partial(net_kernel, inv_s=1.0 / float(s))

    out = pl.pallas_call(
        kernel,
        out_shape=jax.ShapeDtypeStruct((n, C_OUT), x.dtype),
        grid_spec=pltpu.PrefetchScalarGridSpec(
            num_scalar_prefetch=0,
            grid=(nb, ns),
            in_specs=[
                pl.BlockSpec((tn, c, ts), lambda b, si: (b, 0, si)),
                pl.BlockSpec((C_IN, C_OUT), lambda b, si: (0, 0)),
            ],
            out_specs=pl.BlockSpec((tn, C_OUT), lambda b, si: (b, 0)),
            scratch_shapes=[pltpu.VMEM((tn, C_IN), jnp.float32)],
        ),
        compiler_params=pltpu.CompilerParams(
            dimension_semantics=("parallel", "arbitrary"),
            vmem_limit_bytes=48 * 1024 * 1024,
        ),
        cost_estimate=pl.CostEstimate(
            flops=n * c * s + 2 * n * c * C_OUT,
            transcendentals=0,
            bytes_accessed=(x_flat.size * itemsize
                            + C_IN * C_OUT * 4 + n * C_OUT * 4),
        ),
    )(x_flat, w_t)
    return out                            # (N, 6)  == the final `.view(-1, 6)`


def reference_forward(x, weight):
    n = x.shape[0]
    pooled = x.reshape(n, C_IN, -1).astype(jnp.float32).mean(axis=2)
    return pooled @ weight.T.astype(jnp.float32)


def _check(x, weight, **kwargs):
    out = jax.block_until_ready(net_forward(x, weight, **kwargs))
    ref = reference_forward(x, weight)
    assert out.shape == (x.shape[0], C_OUT), out.shape
    assert jnp.allclose(out, ref, atol=1e-4, rtol=1e-4), (out, ref)


if __name__ == "__main__":
    key = jax.random.PRNGKey(0)
    kx1, kx2, kx3, kx4, kw = jax.random.split(key, 5)

    bound = 1.0 / (C_IN ** 0.5)
    weight = jax.random.uniform(kw, (C_OUT, C_IN), dtype=jnp.float32,
                                minval=-bound, maxval=bound)

    # 1) Small default path: single batch tile, single spatial tile.
    x1 = jax.random.normal(kx1, (2, C_IN, 16, 16), dtype=jnp.float32)
    _check(x1, weight)

    # 2) Force spatial tiling (accumulator across 4 spatial tiles).
    x2 = jax.random.normal(kx2, (2, C_IN, 32, 32), dtype=jnp.float32)
    _check(x2, weight, block_bytes=1 * 1024 * 1024)

    # 3) Force batch tiling (TN=8, two batch tiles).
    x3 = jax.random.normal(kx3, (16, C_IN, 4, 4), dtype=jnp.float32)
    _check(x3, weight)

    # 4) Ragged spatial size -> zero-pad path (S=300, TS=256).
    x4 = jax.random.normal(kx4, (2, C_IN, 10, 30), dtype=jnp.float32)
    _check(x4, weight, block_bytes=1 * 1024 * 1024)

    print("KERNEL_OK")
</pallas_src>

<mosaic_0001>
module attributes {stable_mosaic.version = 11 : i64} {
  func.func @net_kernel(%arg0: i32, %arg1: i32, %arg2: memref<2x512x256xf32, #tpu.memory_space<vmem>>, %arg3: memref<512x6xf32, #tpu.memory_space<vmem>>, %arg4: memref<2x6xf32, #tpu.memory_space<vmem>>, %arg5: memref<2x512xf32, #tpu.memory_space<vmem>>) attributes {dimension_semantics = [#tpu.dimension_semantics<parallel>, #tpu.dimension_semantics<arbitrary>], iteration_bounds = array<i64: 1, 1>, scalar_prefetch = 0 : i64, scratch_operands = 1 : i64, tpu.core_type = #tpu.core_type<tc>, window_params = [{transform_indices = @transform_0, window_bounds = array<i64: 2, 512, 256>}, {pipeline_mode = #tpu.pipeline_mode<synchronous>, transform_indices = @transform_1, window_bounds = array<i64: 512, 6>}, {transform_indices = @transform_2, window_bounds = array<i64: 2, 6>}]} {
    %c0_i32 = arith.constant 0 : i32
    %0 = arith.cmpi eq, %arg1, %c0_i32 : i32
    %1 = arith.extui %0 : i1 to i32
    %c0_i32_0 = arith.constant 0 : i32
    %2 = arith.cmpi ne, %1, %c0_i32_0 : i32
    scf.if %2 {
      %cst_9 = arith.constant 0.000000e+00 : f32
      %14 = vector.broadcast %cst_9 : f32 to vector<2x512xf32>
      %c0_10 = arith.constant 0 : index
      %c0_11 = arith.constant 0 : index
      %15 = vector.load %arg5[%c0_10, %c0_11] : memref<2x512xf32, #tpu.memory_space<vmem>>, vector<2x512xf32>
      tpu.vector_store %arg5[%c0_10, %c0_11], %14 {strides = array<i32>} : memref<2x512xf32, #tpu.memory_space<vmem>>, vector<2x512xf32>,
    } else {
    }
    %c0 = arith.constant 0 : index
    %c0_1 = arith.constant 0 : index
    %c0_2 = arith.constant 0 : index
    %3 = vector.load %arg2[%c0, %c0_1, %c0_2] : memref<2x512x256xf32, #tpu.memory_space<vmem>>, vector<2x512x256xf32>
    %4 = vector.extract_strided_slice %3 {offsets = [0, 0, 0], sizes = [2, 512, 128], strides = [1, 1, 1]} : vector<2x512x256xf32> to vector<2x512x128xf32>
    %5 = vector.extract_strided_slice %3 {offsets = [0, 0, 128], sizes = [2, 512, 128], strides = [1, 1, 1]} : vector<2x512x256xf32> to vector<2x512x128xf32>
    %6 = arith.addf %4, %5 : vector<2x512x128xf32>
    %cst = arith.constant dense<0.000000e+00> : vector<2x512xf32>
    %7 = vector.multi_reduction <add>, %6, %cst [2] : vector<2x512x128xf32> to vector<2x512xf32>
    %c0_3 = arith.constant 0 : index
    %c0_4 = arith.constant 0 : index
    %8 = vector.load %arg5[%c0_3, %c0_4] : memref<2x512xf32, #tpu.memory_space<vmem>>, vector<2x512xf32>
    %9 = arith.addf %8, %7 : vector<2x512xf32>
    %c0_5 = arith.constant 0 : index
    %c0_6 = arith.constant 0 : index
    %10 = vector.load %arg5[%c0_5, %c0_6] : memref<2x512xf32, #tpu.memory_space<vmem>>, vector<2x512xf32>
    tpu.vector_store %arg5[%c0_5, %c0_6], %9 {strides = array<i32>} : memref<2x512xf32, #tpu.memory_space<vmem>>, vector<2x512xf32>,
    %c0_i32_7 = arith.constant 0 : i32
    %11 = arith.cmpi eq, %arg1, %c0_i32_7 : i32
    %12 = arith.extui %11 : i1 to i32
    %c0_i32_8 = arith.constant 0 : i32
    %13 = arith.cmpi ne, %12, %c0_i32_8 : i32
    scf.if %13 {
      %c0_9 = arith.constant 0 : index
      %c0_10 = arith.constant 0 : index
      %14 = vector.load %arg5[%c0_9, %c0_10] : memref<2x512xf32, #tpu.memory_space<vmem>>, vector<2x512xf32>
      %cst_11 = arith.constant 3.906250e-03 : f32
      %15 = vector.broadcast %cst_11 : f32 to vector<2x512xf32>
      %16 = arith.mulf %14, %15 : vector<2x512xf32>
      %c0_12 = arith.constant 0 : index
      %c0_13 = arith.constant 0 : index
      %17 = vector.load %arg3[%c0_12, %c0_13] : memref<512x6xf32, #tpu.memory_space<vmem>>, vector<512x6xf32>
      %cst_14 = arith.constant dense<0.000000e+00> : vector<2x6xf32>
      %18 = tpu.matmul %16, %17, %cst_14 {dimension_numbers = #tpu.dot_dimension_numbers<[1], [0], [0], [1], [0, 0, 1, 1], [], []>} : vector<2x512xf32>, vector<512x6xf32>, vector<2x6xf32> -> vector<2x6xf32>
      %c0_15 = arith.constant 0 : index
      %c0_16 = arith.constant 0 : index
      %19 = vector.load %arg4[%c0_15, %c0_16] : memref<2x6xf32, #tpu.memory_space<vmem>>, vector<2x6xf32>
      tpu.vector_store %arg4[%c0_15, %c0_16], %18 {strides = array<i32>} : memref<2x6xf32, #tpu.memory_space<vmem>>, vector<2x6xf32>,
    } else {
    }
    return
  }
  func.func @transform_0(%arg0: i32, %arg1: i32) -> (i32, i32, i32) {
    %c0_i32 = arith.constant 0 : i32
    %c0_i32_0 = arith.constant 0 : i32
    return %arg0, %c0_i32, %arg1 : i32, i32, i32
  }
  func.func @transform_1(%arg0: i32, %arg1: i32) -> (i32, i32) {
    %c0_i32 = arith.constant 0 : i32
    %c0_i32_0 = arith.constant 0 : i32
    %c0_i32_1 = arith.constant 0 : i32
    return %c0_i32, %c0_i32_0 : i32, i32
  }
  func.func @transform_2(%arg0: i32, %arg1: i32) -> (i32, i32) {
    %c0_i32 = arith.constant 0 : i32
    %c0_i32_0 = arith.constant 0 : i32
    return %arg0, %c0_i32 : i32, i32
  }
}

</mosaic_0001>

<llo_original>
// kernel: tpu_custom_call.1
$region0: #{tpu_custom_call.1}
  #allocation0 [shape = 'u32[]', space=smem, size = 0x4, offset = 0x4, fixed_abs, tag = 'smem constant byte address 0x4 - core index']
  #allocation1 [shape = 'u32[144,128]{1,0:T(1,128)}', space=vmem, size = 0x12000, scoped, tag = 'internal scratch']
  #allocation2 [shape = 'f32[2,512]{1,0:T(2,128)}', space=vmem, size = 0x1000, scoped, tag = 'scratch operand']
  %s0 = inlined_call_operand.hbm [shape: f32[2,512,256], index: 0, kind: input, shape index: {}]
  %s1 = inlined_call_operand.vmem [shape: f32[512,6], index: 1, kind: input, shape index: {}]
  %s2 = inlined_call_operand.hbm [shape: f32[2,6], index: 2, kind: output, shape index: {}]
  %s3 = sld [smem:[#allocation0]]
  $region30: #{tpu_custom_call.1} parent=0
    _
  %s5 = ssub.s32 1, %s3
  %s6 = scalar_select 0, %s5, %s3
  $region1: #{tpu_custom_call.1} parent=0
    #allocation3 [shape = 'u8[1048576]{0}', space=vmem, size = 0x100000, scoped, tag = 'input window, operand 0, single buffered']
    #allocation4 [shape = 's32[1]{0}', space=sflag, size = 0x4, scoped, tag = 'scoped memory for tpu_custom_call.1']
    #allocation5 [shape = 's32[1]{0}', space=sflag, size = 0x4, scoped, tag = 'scoped memory for tpu_custom_call.1']
    #allocation6 [shape = 'u8[1024]{0}', space=vmem, size = 0x400, scoped, tag = 'output window, operand 0, single buffered']
    %7 = vsyncpa [#allocation4], 0
    %8 = vsyncpa [#allocation5], 0
    // Predicated region
    $region2: #{tpu_custom_call.1} parent=1 // pred_check
      _
    $region3: #{tpu_custom_call.1} parent=1 // pred_check_branch
      %10 = sbr.rel (0) target = $region5
    $region4: #{tpu_custom_call.1} parent=1 // pred_region
      %s12 = ssub.s32 32768, 32768
      %13 = vsyncadd [#allocation4], %s12
      %s14 = sshll.u32 [#allocation3], 4
      %s15 = int_to_ptr.vmem [resolvable:$true] %s14
      %20 = dma.hbm_to_vmem [thread:$0]  %s0, 32768, %s15, [#allocation4], 256, 256, 16
    $region5: #{tpu_custom_call.1} parent=1 // pred_fallthru
      _
    // Predicated region
    $region6: #{tpu_custom_call.1} parent=1 // pred_check
      _
    $region7: #{tpu_custom_call.1} parent=1 // pred_check_branch
      %22 = sbr.rel (0) target = $region9
    $region8: #{tpu_custom_call.1} parent=1 // pred_region
      _
    $region9: #{tpu_custom_call.1} parent=1 // pred_fallthru
      _
    // Predicated region
    $region10: #{tpu_custom_call.1} parent=1 // pred_check
      _
    $region11: #{tpu_custom_call.1} parent=1 // pred_check_branch
      %24 = sbr.rel (0) target = $region13
    $region12: #{tpu_custom_call.1} parent=1 // pred_region
      %25 = dma.done [#allocation4], 32768
    $region13: #{tpu_custom_call.1} parent=1 // pred_fallthru
      _
    %p26 = scmp.eq.s32.totalorder 0, 0
    // Predicated region
    $region14: #{tpu_custom_call.1} parent=1 // pred_check
      %p27 = pneg %p26
    $region15: #{tpu_custom_call.1} parent=1 // pred_check_branch
      %29 = sbr.rel (%p27) target = $region17
    $region16: #{tpu_custom_call.1} parent=1 // pred_region
      %30 = vst [vmem:[#allocation2] sm:$0xff] 0.0
    $region17: #{tpu_custom_call.1} parent=1 // pred_fallthru
      _
    %v31 = vld [vmem:[#allocation3] sm:$0xff]
    %v32 = vld [vmem:[#allocation3 + $0x8] sm:$0xff]
    %v33 = vld [vmem:[#allocation3 + $0x10] sm:$0xff]
    %v34 = vld [vmem:[#allocation3 + $0x18] sm:$0xff]
    %v35 = vld [vmem:[#allocation3 + $0x20] sm:$0xff]
    %v36 = vld [vmem:[#allocation3 + $0x28] sm:$0xff]
    %v37 = vld [vmem:[#allocation3 + $0x30] sm:$0xff]
    %v38 = vld [vmem:[#allocation3 + $0x38] sm:$0xff]
    %v39 = vld [vmem:[#allocation3 + $0x40] sm:$0xff]
    %v40 = vld [vmem:[#allocation3 + $0x48] sm:$0xff]
    %v41 = vld [vmem:[#allocation3 + $0x50] sm:$0xff]
    %v42 = vld [vmem:[#allocation3 + $0x58] sm:$0xff]
    %v43 = vld [vmem:[#allocation3 + $0x60] sm:$0xff]
    %v44 = vld [vmem:[#allocation3 + $0x68] sm:$0xff]
    %v45 = vld [vmem:[#allocation3 + $0x70] sm:$0xff]
    %v46 = vld [vmem:[#allocation3 + $0x78] sm:$0xff]
    %v47 = vld [vmem:[#allocation3 + $0x80] sm:$0xff]
    %v48 = vld [vmem:[#allocation3 + $0x88] sm:$0xff]
    %v49 = vld [vmem:[#allocation3 + $0x90] sm:$0xff]
    %v50 = vld [vmem:[#allocation3 + $0x98] sm:$0xff]
    %v51 = vld [vmem:[#allocation3 + $0xa0] sm:$0xff]
    %v52 = vld [vmem:[#allocation3 + $0xa8] sm:$0xff]
    %v53 = vld [vmem:[#allocation3 + $0xb0] sm:$0xff]
    %v54 = vld [vmem:[#allocation3 + $0xb8] sm:$0xff]
    %v55 = vld [vmem:[#allocation3 + $0xc0] sm:$0xff]
    %v56 = vld [vmem:[#allocation3 + $0xc8] sm:$0xff]
    %v57 = vld [vmem:[#allocation3 + $0xd0] sm:$0xff]
    %v58 = vld [vmem:[#allocation3 + $0xd8] sm:$0xff]
    %v59 = vld [vmem:[#allocation3 + $0xe0] sm:$0xff]
    %v60 = vld [vmem:[#allocation3 + $0xe8] sm:$0xff]
    %v61 = vld [vmem:[#allocation3 + $0xf0] sm:$0xff]
    %v62 = vld [vmem:[#allocation3 + $0xf8] sm:$0xff]
    %v63 = vld [vmem:[#allocation3 + $0x100] sm:$0xff]
    %v64 = vld [vmem:[#allocation3 + $0x108] sm:$0xff]
    %v65 = vld [vmem:[#allocation3 + $0x110] sm:$0xff]
    %v66 = vld [vmem:[#allocation3 + $0x118] sm:$0xff]
    %v67 = vld [vmem:[#allocation3 + $0x120] sm:$0xff]
    %v68 = vld [vmem:[#allocation3 + $0x128] sm:$0xff]
    %v69 = vld [vmem:[#allocation3 + $0x130] sm:$0xff]
    %v70 = vld [vmem:[#allocation3 + $0x138] sm:$0xff]
    %v71 = vld [vmem:[#allocation3 + $0x140] sm:$0xff]
    %v72 = vld [vmem:[#allocation3 + $0x148] sm:$0xff]
    %v73 = vld [vmem:[#allocation3 + $0x150] sm:$0xff]
    %v74 = vld [vmem:[#allocation3 + $0x158] sm:$0xff]
    %v75 = vld [vmem:[#allocation3 + $0x160] sm:$0xff]
    %v76 = vld [vmem:[#allocation3 + $0x168] sm:$0xff]
    %v77 = vld [vmem:[#allocation3 + $0x170] sm:$0xff]
    %v78 = vld [vmem:[#allocation3 + $0x178] sm:$0xff]
    %v79 = vld [vmem:[#allocation3 + $0x180] sm:$0xff]
    %v80 = vld [vmem:[#allocation3 + $0x188] sm:$0xff]
    %v81 = vld [vmem:[#allocation3 + $0x190] sm:$0xff]
    %v82 = vld [vmem:[#allocation3 + $0x198] sm:$0xff]
    %v83 = vld [vmem:[#allocation3 + $0x1a0] sm:$0xff]
    %v84 = vld [vmem:[#allocation3 + $0x1a8] sm:$0xff]
    %v85 = vld [vmem:[#allocation3 + $0x1b0] sm:$0xff]
    %v86 = vld [vmem:[#allocation3 + $0x1b8] sm:$0xff]
    %v87 = vld [vmem:[#allocation3 + $0x1c0] sm:$0xff]
    %v88 = vld [vmem:[#allocation3 + $0x1c8] sm:$0xff]
    %v89 = vld [vmem:[#allocation3 + $0x1d0] sm:$0xff]
    %v90 = vld [vmem:[#allocation3 + $0x1d8] sm:$0xff]
    %v91 = vld [vmem:[#allocation3 + $0x1e0] sm:$0xff]
    %v92 = vld [vmem:[#allocation3 + $0x1e8] sm:$0xff]
    %v93 = vld [vmem:[#allocation3 + $0x1f0] sm:$0xff]
    %v94 = vld [vmem:[#allocation3 + $0x1f8] sm:$0xff]
    %v95 = vld [vmem:[#allocation3 + $0x200] sm:$0xff]
    %v96 = vld [vmem:[#allocation3 + $0x208] sm:$0xff]
    %v97 = vld [vmem:[#allocation3 + $0x210] sm:$0xff]
    %v98 = vld [vmem:[#allocation3 + $0x218] sm:$0xff]
    %v99 = vld [vmem:[#allocation3 + $0x220] sm:$0xff]
    %v100 = vld [vmem:[#allocation3 + $0x228] sm:$0xff]
    %v101 = vld [vmem:[#allocation3 + $0x230] sm:$0xff]
    %v102 = vld [vmem:[#allocation3 + $0x238] sm:$0xff]
    %v103 = vld [vmem:[#allocation3 + $0x240] sm:$0xff]
    %v104 = vld [vmem:[#allocation3 + $0x248] sm:$0xff]
    %v105 = vld [vmem:[#allocation3 + $0x250] sm:$0xff]
    %v106 = vld [vmem:[#allocation3 + $0x258] sm:$0xff]
    %v107 = vld [vmem:[#allocation3 + $0x260] sm:$0xff]
    %v108 = vld [vmem:[#allocation3 + $0x268] sm:$0xff]
    %v109 = vld [vmem:[#allocation3 + $0x270] sm:$0xff]
    %v110 = vld [vmem:[#allocation3 + $0x278] sm:$0xff]
    %v111 = vld [vmem:[#allocation3 + $0x280] sm:$0xff]
    %v112 = vld [vmem:[#allocation3 + $0x288] sm:$0xff]
    %v113 = vld [vmem:[#allocation3 + $0x290] sm:$0xff]
    %v114 = vld [vmem:[#allocation3 + $0x298] sm:$0xff]
    %v115 = vld [vmem:[#allocation3 + $0x2a0] sm:$0xff]
    %v116 = vld [vmem:[#allocation3 + $0x2a8] sm:$0xff]
    %v117 = vld [vmem:[#allocation3 + $0x2b0] sm:$0xff]
    %v118 = vld [vmem:[#allocation3 + $0x2b8] sm:$0xff]
    %v119 = vld [vmem:[#allocation3 + $0x2c0] sm:$0xff]
    %v120 = vld [vmem:[#allocation3 + $0x2c8] sm:$0xff]
    %v121 = vld [vmem:[#allocation3 + $0x2d0] sm:$0xff]
    %v122 = vld [vmem:[#allocation3 + $0x2d8] sm:$0xff]
    %v123 = vld [vmem:[#allocation3 + $0x2e0] sm:$0xff]
    %v124 = vld [vmem:[#allocation3 + $0x2e8] sm:$0xff]
    %v125 = vld [vmem:[#allocation3 + $0x2f0] sm:$0xff]
    %v126 = vld [vmem:[#allocation3 + $0x2f8] sm:$0xff]
    %v127 = vld [vmem:[#allocation3 + $0x300] sm:$0xff]
    %v128 = vld [vmem:[#allocation3 + $0x308] sm:$0xff]
    %v129 = vld [vmem:[#allocation3 + $0x310] sm:$0xff]
    %v130 = vld [vmem:[#allocation3 + $0x318] sm:$0xff]
    %v131 = vld [vmem:[#allocation3 + $0x320] sm:$0xff]
    %v132 = vld [vmem:[#allocation3 + $0x328] sm:$0xff]
    %v133 = vld [vmem:[#allocation3 + $0x330] sm:$0xff]
    %v134 = vld [vmem:[#allocation3 + $0x338] sm:$0xff]
    %v135 = vld [vmem:[#allocation3 + $0x340] sm:$0xff]
    %v136 = vld [vmem:[#allocation3 + $0x348] sm:$0xff]
    %v137 = vld [vmem:[#allocation3 + $0x350] sm:$0xff]
    %v138 = vld [vmem:[#allocation3 + $0x358] sm:$0xff]
    %v139 = vld [vmem:[#allocation3 + $0x360] sm:$0xff]
    %v140 = vld [vmem:[#allocation3 + $0x368] sm:$0xff]
    %v141 = vld [vmem:[#allocation3 + $0x370] sm:$0xff]
    %v142 = vld [vmem:[#allocation3 + $0x378] sm:$0xff]
    %v143 = vld [vmem:[#allocation3 + $0x380] sm:$0xff]
    %v144 = vld [vmem:[#allocation3 + $0x388] sm:$0xff]
    %v145 = vld [vmem:[#allocation3 + $0x390] sm:$0xff]
    %v146 = vld [vmem:[#allocation3 + $0x398] sm:$0xff]
    %v147 = vld [vmem:[#allocation3 + $0x3a0] sm:$0xff]
    %v148 = vld [vmem:[#allocation3 + $0x3a8] sm:$0xff]
    %v149 = vld [vmem:[#allocation3 + $0x3b0] sm:$0xff]
    %v150 = vld [vmem:[#allocation3 + $0x3b8] sm:$0xff]
    %v151 = vld [vmem:[#allocation3 + $0x3c0] sm:$0xff]
    %v152 = vld [vmem:[#allocation3 + $0x3c8] sm:$0xff]
    %v153 = vld [vmem:[#allocation3 + $0x3d0] sm:$0xff]
    %v154 = vld [vmem:[#allocation3 + $0x3d8] sm:$0xff]
    %v155 = vld [vmem:[#allocation3 + $0x3e0] sm:$0xff]
    %v156 = vld [vmem:[#allocation3 + $0x3e8] sm:$0xff]
    %v157 = vld [vmem:[#allocation3 + $0x3f0] sm:$0xff]
    %v158 = vld [vmem:[#allocation3 + $0x3f8] sm:$0xff]
    %v159 = vld [vmem:[#allocation3 + $0x400] sm:$0xff]
    %v160 = vld [vmem:[#allocation3 + $0x408] sm:$0xff]
    %v161 = vld [vmem:[#allocation3 + $0x410] sm:$0xff]
    %v162 = vld [vmem:[#allocation3 + $0x418] sm:$0xff]
    %v163 = vld [vmem:[#allocation3 + $0x420] sm:$0xff]
    %v164 = vld [vmem:[#allocation3 + $0x428] sm:$0xff]
    %v165 = vld [vmem:[#allocation3 + $0x430] sm:$0xff]
    %v166 = vld [vmem:[#allocation3 + $0x438] sm:$0xff]
    %v167 = vld [vmem:[#allocation3 + $0x440] sm:$0xff]
    %v168 = vld [vmem:[#allocation3 + $0x448] sm:$0xff]
    %v169 = vld [vmem:[#allocation3 + $0x450] sm:$0xff]
    %v170 = vld [vmem:[#allocation3 + $0x458] sm:$0xff]
    %v171 = vld [vmem:[#allocation3 + $0x460] sm:$0xff]
    %v172 = vld [vmem:[#allocation3 + $0x468] sm:$0xff]
    %v173 = vld [vmem:[#allocation3 + $0x470] sm:$0xff]
    %v174 = vld [vmem:[#allocation3 + $0x478] sm:$0xff]
    %v175 = vld [vmem:[#allocation3 + $0x480] sm:$0xff]
    %v176 = vld [vmem:[#allocation3 + $0x488] sm:$0xff]
    %v177 = vld [vmem:[#allocation3 + $0x490] sm:$0xff]
    %v178 = vld [vmem:[#allocation3 + $0x498] sm:$0xff]
    %v179 = vld [vmem:[#allocation3 + $0x4a0] sm:$0xff]
    %v180 = vld [vmem:[#allocation3 + $0x4a8] sm:$0xff]
    %v181 = vld [vmem:[#allocation3 + $0x4b0] sm:$0xff]
    %v182 = vld [vmem:[#allocation3 + $0x4b8] sm:$0xff]
    %v183 = vld [vmem:[#allocation3 + $0x4c0] sm:$0xff]
    %v184 = vld [vmem:[#allocation3 + $0x4c8] sm:$0xff]
    %v185 = vld [vmem:[#allocation3 + $0x4d0] sm:$0xff]
    %v186 = vld [vmem:[#allocation3 + $0x4d8] sm:$0xff]
    %v187 = vld [vmem:[#allocation3 + $0x4e0] sm:$0xff]
    %v188 = vld [vmem:[#allocation3 + $0x4e8] sm:$0xff]
    %v189 = vld [vmem:[#allocation3 + $0x4f0] sm:$0xff]
    %v190 = vld [vmem:[#allocation3 + $0x4f8] sm:$0xff]
    %v191 = vld [vmem:[#allocation3 + $0x500] sm:$0xff]
    %v192 = vld [vmem:[#allocation3 + $0x508] sm:$0xff]
    %v193 = vld [vmem:[#allocation3 + $0x510] sm:$0xff]
    %v194 = vld [vmem:[#allocation3 + $0x518] sm:$0xff]
    %v195 = vld [vmem:[#allocation3 + $0x520] sm:$0xff]
    %v196 = vld [vmem:[#allocation3 + $0x528] sm:$0xff]
    %v197 = vld [vmem:[#allocation3 + $0x530] sm:$0xff]
    %v198 = vld [vmem:[#allocation3 + $0x538] sm:$0xff]
    %v199 = vld [vmem:[#allocation3 + $0x540] sm:$0xff]
    %v200 = vld [vmem:[#allocation3 + $0x548] sm:$0xff]
    %v201 = vld [vmem:[#allocation3 + $0x550] sm:$0xff]
    %v202 = vld [vmem:[#allocation3 + $0x558] sm:$0xff]
    %v203 = vld [vmem:[#allocation3 + $0x560] sm:$0xff]
    %v204 = vld [vmem:[#allocation3 + $0x568] sm:$0xff]
    %v205 = vld [vmem:[#allocation3 + $0x570] sm:$0xff]
    %v206 = vld [vmem:[#allocation3 + $0x578] sm:$0xff]
    %v207 = vld [vmem:[#allocation3 + $0x580] sm:$0xff]
    %v208 = vld [vmem:[#allocation3 + $0x588] sm:$0xff]
    %v209 = vld [vmem:[#allocation3 + $0x590] sm:$0xff]
    %v210 = vld [vmem:[#allocation3 + $0x598] sm:$0xff]
    %v211 = vld [vmem:[#allocation3 + $0x5a0] sm:$0xff]
    %v212 = vld [vmem:[#allocation3 + $0x5a8] sm:$0xff]
    %v213 = vld [vmem:[#allocation3 + $0x5b0] sm:$0xff]
    %v214 = vld [vmem:[#allocation3 + $0x5b8] sm:$0xff]
    %v215 = vld [vmem:[#allocation3 + $0x5c0] sm:$0xff]
    %v216 = vld [vmem:[#allocation3 + $0x5c8] sm:$0xff]
    %v217 = vld [vmem:[#allocation3 + $0x5d0] sm:$0xff]
    %v218 = vld [vmem:[#allocation3 + $0x5d8] sm:$0xff]
    %v219 = vld [vmem:[#allocation3 + $0x5e0] sm:$0xff]
    %v220 = vld [vmem:[#allocation3 + $0x5e8] sm:$0xff]
    %v221 = vld [vmem:[#allocation3 + $0x5f0] sm:$0xff]
    %v222 = vld [vmem:[#allocation3 + $0x5f8] sm:$0xff]
    %v223 = vld [vmem:[#allocation3 + $0x600] sm:$0xff]
    %v224 = vld [vmem:[#allocation3 + $0x608] sm:$0xff]
    %v225 = vld [vmem:[#allocation3 + $0x610] sm:$0xff]
    %v226 = vld [vmem:[#allocation3 + $0x618] sm:$0xff]
    %v227 = vld [vmem:[#allocation3 + $0x620] sm:$0xff]
    %v228 = vld [vmem:[#allocation3 + $0x628] sm:$0xff]
    %v229 = vld [vmem:[#allocation3 + $0x630] sm:$0xff]
    %v230 = vld [vmem:[#allocation3 + $0x638] sm:$0xff]
    %v231 = vld [vmem:[#allocation3 + $0x640] sm:$0xff]
    %v232 = vld [vmem:[#allocation3 + $0x648] sm:$0xff]
    %v233 = vld [vmem:[#allocation3 + $0x650] sm:$0xff]
    %v234 = vld [vmem:[#allocation3 + $0x658] sm:$0xff]
    %v235 = vld [vmem:[#allocation3 + $0x660] sm:$0xff]
    %v236 = vld [vmem:[#allocation3 + $0x668] sm:$0xff]
    %v237 = vld [vmem:[#allocation3 + $0x670] sm:$0xff]
    %v238 = vld [vmem:[#allocation3 + $0x678] sm:$0xff]
    %v239 = vld [vmem:[#allocation3 + $0x680] sm:$0xff]
    %v240 = vld [vmem:[#allocation3 + $0x688] sm:$0xff]
    %v241 = vld [vmem:[#allocation3 + $0x690] sm:$0xff]
    %v242 = vld [vmem:[#allocation3 + $0x698] sm:$0xff]
    %v243 = vld [vmem:[#allocation3 + $0x6a0] sm:$0xff]
    %v244 = vld [vmem:[#allocation3 + $0x6a8] sm:$0xff]
    %v245 = vld [vmem:[#allocation3 + $0x6b0] sm:$0xff]
    %v246 = vld [vmem:[#allocation3 + $0x6b8] sm:$0xff]
    %v247 = vld [vmem:[#allocation3 + $0x6c0] sm:$0xff]
    %v248 = vld [vmem:[#allocation3 + $0x6c8] sm:$0xff]
    %v249 = vld [vmem:[#allocation3 + $0x6d0] sm:$0xff]
    %v250 = vld [vmem:[#allocation3 + $0x6d8] sm:$0xff]
    %v251 = vld [vmem:[#allocation3 + $0x6e0] sm:$0xff]
    %v252 = vld [vmem:[#allocation3 + $0x6e8] sm:$0xff]
    %v253 = vld [vmem:[#allocation3 + $0x6f0] sm:$0xff]
    %v254 = vld [vmem:[#allocation3 + $0x6f8] sm:$0xff]
    %v255 = vld [vmem:[#allocation3 + $0x700] sm:$0xff]
    %v256 = vld [vmem:[#allocation3 + $0x708] sm:$0xff]
    %v257 = vld [vmem:[#allocation3 + $0x710] sm:$0xff]
    %v258 = vld [vmem:[#allocation3 + $0x718] sm:$0xff]
    %v259 = vld [vmem:[#allocation3 + $0x720] sm:$0xff]
    %v260 = vld [vmem:[#allocation3 + $0x728] sm:$0xff]
    %v261 = vld [vmem:[#allocation3 + $0x730] sm:$0xff]
    %v262 = vld [vmem:[#allocation3 + $0x738] sm:$0xff]
    %v263 = vld [vmem:[#allocation3 + $0x740] sm:$0xff]
    %v264 = vld [vmem:[#allocation3 + $0x748] sm:$0xff]
    %v265 = vld [vmem:[#allocation3 + $0x750] sm:$0xff]
    %v266 = vld [vmem:[#allocation3 + $0x758] sm:$0xff]
    %v267 = vld [vmem:[#allocation3 + $0x760] sm:$0xff]
    %v268 = vld [vmem:[#allocation3 + $0x768] sm:$0xff]
    %v269 = vld [vmem:[#allocation3 + $0x770] sm:$0xff]
    %v270 = vld [vmem:[#allocation3 + $0x778] sm:$0xff]
    %v271 = vld [vmem:[#allocation3 + $0x780] sm:$0xff]
    %v272 = vld [vmem:[#allocation3 + $0x788] sm:$0xff]
    %v273 = vld [vmem:[#allocation3 + $0x790] sm:$0xff]
    %v274 = vld [vmem:[#allocation3 + $0x798] sm:$0xff]
    %v275 = vld [vmem:[#allocation3 + $0x7a0] sm:$0xff]
    %v276 = vld [vmem:[#allocation3 + $0x7a8] sm:$0xff]
    %v277 = vld [vmem:[#allocation3 + $0x7b0] sm:$0xff]
    %v278 = vld [vmem:[#allocation3 + $0x7b8] sm:$0xff]
    %v279 = vld [vmem:[#allocation3 + $0x7c0] sm:$0xff]
    %v280 = vld [vmem:[#allocation3 + $0x7c8] sm:$0xff]
    %v281 = vld [vmem:[#allocation3 + $0x7d0] sm:$0xff]
    %v282 = vld [vmem:[#allocation3 + $0x7d8] sm:$0xff]
    %v283 = vld [vmem:[#allocation3 + $0x7e0] sm:$0xff]
    %v284 = vld [vmem:[#allocation3 + $0x7e8] sm:$0xff]
    %v285 = vld [vmem:[#allocation3 + $0x7f0] sm:$0xff]
    %v286 = vld [vmem:[#allocation3 + $0x7f8] sm:$0xff]
    %v287 = vadd.f32 %v31, %v32
    %v288 = vadd.f32 %v33, %v34
    %v289 = vadd.f32 %v35, %v36
    %v290 = vadd.f32 %v37, %v38
    %v291 = vadd.f32 %v39, %v40
    %v292 = vadd.f32 %v41, %v42
    %v293 = vadd.f32 %v43, %v44
    %v294 = vadd.f32 %v45, %v46
    %v295 = vadd.f32 %v47, %v48
    %v296 = vadd.f32 %v49, %v50
    %v297 = vadd.f32 %v51, %v52
    %v298 = vadd.f32 %v53, %v54
    %v299 = vadd.f32 %v55, %v56
    %v300 = vadd.f32 %v57, %v58
    %v301 = vadd.f32 %v59, %v60
    %v302 = vadd.f32 %v61, %v62
    %v303 = vadd.f32 %v63, %v64
    %v304 = vadd.f32 %v65, %v66
    %v305 = vadd.f32 %v67, %v68
    %v306 = vadd.f32 %v69, %v70
    %v307 = vadd.f32 %v71, %v72
    %v308 = vadd.f32 %v73, %v74
    %v309 = vadd.f32 %v75, %v76
    %v310 = vadd.f32 %v77, %v78
    %v311 = vadd.f32 %v79, %v80
    %v312 = vadd.f32 %v81, %v82
    %v313 = vadd.f32 %v83, %v84
    %v314 = vadd.f32 %v85, %v86
    %v315 = vadd.f32 %v87, %v88
    %v316 = vadd.f32 %v89, %v90
    %v317 = vadd.f32 %v91, %v92
    %v318 = vadd.f32 %v93, %v94
    %v319 = vadd.f32 %v95, %v96
    %v320 = vadd.f32 %v97, %v98
    %v321 = vadd.f32 %v99, %v100
    %v322 = vadd.f32 %v101, %v102
    %v323 = vadd.f32 %v103, %v104
    %v324 = vadd.f32 %v105, %v106
    %v325 = vadd.f32 %v107, %v108
    %v326 = vadd.f32 %v109, %v110
    %v327 = vadd.f32 %v111, %v112
    %v328 = vadd.f32 %v113, %v114
    %v329 = vadd.f32 %v115, %v116
    %v330 = vadd.f32 %v117, %v118
    %v331 = vadd.f32 %v119, %v120
    %v332 = vadd.f32 %v121, %v122
    %v333 = vadd.f32 %v123, %v124
    %v334 = vadd.f32 %v125, %v126
    %v335 = vadd.f32 %v127, %v128
    %v336 = vadd.f32 %v129, %v130
    %v337 = vadd.f32 %v131, %v132
    %v338 = vadd.f32 %v133, %v134
    %v339 = vadd.f32 %v135, %v136
    %v340 = vadd.f32 %v137, %v138
    %v341 = vadd.f32 %v139, %v140
    %v342 = vadd.f32 %v141, %v142
    %v343 = vadd.f32 %v143, %v144
    %v344 = vadd.f32 %v145, %v146
    %v345 = vadd.f32 %v147, %v148
    %v346 = vadd.f32 %v149, %v150
    %v347 = vadd.f32 %v151, %v152
    %v348 = vadd.f32 %v153, %v154
    %v349 = vadd.f32 %v155, %v156
    %v350 = vadd.f32 %v157, %v158
    %v351 = vadd.f32 %v159, %v160
    %v352 = vadd.f32 %v161, %v162
    %v353 = vadd.f32 %v163, %v164
    %v354 = vadd.f32 %v165, %v166
    %v355 = vadd.f32 %v167, %v168
    %v356 = vadd.f32 %v169, %v170
    %v357 = vadd.f32 %v171, %v172
    %v358 = vadd.f32 %v173, %v174
    %v359 = vadd.f32 %v175, %v176
    %v360 = vadd.f32 %v177, %v178
    %v361 = vadd.f32 %v179, %v180
    %v362 = vadd.f32 %v181, %v182
    %v363 = vadd.f32 %v183, %v184
    %v364 = vadd.f32 %v185, %v186
    %v365 = vadd.f32 %v187, %v188
    %v366 = vadd.f32 %v189, %v190
    %v367 = vadd.f32 %v191, %v192
    %v368 = vadd.f32 %v193, %v194
    %v369 = vadd.f32 %v195, %v196
    %v370 = vadd.f32 %v197, %v198
    %v371 = vadd.f32 %v199, %v200
    %v372 = vadd.f32 %v201, %v202
    %v373 = vadd.f32 %v203, %v204
    %v374 = vadd.f32 %v205, %v206
    %v375 = vadd.f32 %v207, %v208
    %v376 = vadd.f32 %v209, %v210
    %v377 = vadd.f32 %v211, %v212
    %v378 = vadd.f32 %v213, %v214
    %v379 = vadd.f32 %v215, %v216
    %v380 = vadd.f32 %v217, %v218
    %v381 = vadd.f32 %v219, %v220
    %v382 = vadd.f32 %v221, %v222
    %v383 = vadd.f32 %v223, %v224
    %v384 = vadd.f32 %v225, %v226
    %v385 = vadd.f32 %v227, %v228
    %v386 = vadd.f32 %v229, %v230
    %v387 = vadd.f32 %v231, %v232
    %v388 = vadd.f32 %v233, %v234
    %v389 = vadd.f32 %v235, %v236
    %v390 = vadd.f32 %v237, %v238
    %v391 = vadd.f32 %v239, %v240
    %v392 = vadd.f32 %v241, %v242
    %v393 = vadd.f32 %v243, %v244
    %v394 = vadd.f32 %v245, %v246
    %v395 = vadd.f32 %v247, %v248
    %v396 = vadd.f32 %v249, %v250
    %v397 = vadd.f32 %v251, %v252
    %v398 = vadd.f32 %v253, %v254
    %v399 = vadd.f32 %v255, %v256
    %v400 = vadd.f32 %v257, %v258
    %v401 = vadd.f32 %v259, %v260
    %v402 = vadd.f32 %v261, %v262
    %v403 = vadd.f32 %v263, %v264
    %v404 = vadd.f32 %v265, %v266
    %v405 = vadd.f32 %v267, %v268
    %v406 = vadd.f32 %v269, %v270
    %v407 = vadd.f32 %v271, %v272
    %v408 = vadd.f32 %v273, %v274
    %v409 = vadd.f32 %v275, %v276
    %v410 = vadd.f32 %v277, %v278
    %v411 = vadd.f32 %v279, %v280
    %v412 = vadd.f32 %v281, %v282
    %v413 = vadd.f32 %v283, %v284
    %v414 = vadd.f32 %v285, %v286
    %415 = vadd.xlane.f32.xlu0 %v287
    %v416 = vpop.xlane.xlu0 %415
    %417 = vadd.xlane.f32.xlu0 %v288
    %v418 = vpop.xlane.xlu0 %417
    %419 = vadd.xlane.f32.xlu0 %v289
    %v420 = vpop.xlane.xlu0 %419
    %421 = vadd.xlane.f32.xlu0 %v290
    %v422 = vpop.xlane.xlu0 %421
    %423 = vadd.xlane.f32.xlu0 %v291
    %v424 = vpop.xlane.xlu0 %423
    %425 = vadd.xlane.f32.xlu0 %v292
    %v426 = vpop.xlane.xlu0 %425
    %427 = vadd.xlane.f32.xlu0 %v293
    %v428 = vpop.xlane.xlu0 %427
    %429 = vadd.xlane.f32.xlu0 %v294
    %v430 = vpop.xlane.xlu0 %429
    %431 = vadd.xlane.f32.xlu0 %v295
    %v432 = vpop.xlane.xlu0 %431
    %433 = vadd.xlane.f32.xlu0 %v296
    %v434 = vpop.xlane.xlu0 %433
    %435 = vadd.xlane.f32.xlu0 %v297
    %v436 = vpop.xlane.xlu0 %435
    %437 = vadd.xlane.f32.xlu0 %v298
    %v438 = vpop.xlane.xlu0 %437
    %439 = vadd.xlane.f32.xlu0 %v299
    %v440 = vpop.xlane.xlu0 %439
    %441 = vadd.xlane.f32.xlu0 %v300
    %v442 = vpop.xlane.xlu0 %441
    %443 = vadd.xlane.f32.xlu0 %v301
    %v444 = vpop.xlane.xlu0 %443
    %445 = vadd.xlane.f32.xlu0 %v302
    %v446 = vpop.xlane.xlu0 %445
    %447 = vadd.xlane.f32.xlu0 %v303
    %v448 = vpop.xlane.xlu0 %447
    %449 = vadd.xlane.f32.xlu0 %v304
    %v450 = vpop.xlane.xlu0 %449
    %451 = vadd.xlane.f32.xlu0 %v305
    %v452 = vpop.xlane.xlu0 %451
    %453 = vadd.xlane.f32.xlu0 %v306
    %v454 = vpop.xlane.xlu0 %453
    %455 = vadd.xlane.f32.xlu0 %v307
    %v456 = vpop.xlane.xlu0 %455
    %457 = vadd.xlane.f32.xlu0 %v308
    %v458 = vpop.xlane.xlu0 %457
    %459 = vadd.xlane.f32.xlu0 %v309
    %v460 = vpop.xlane.xlu0 %459
    %461 = vadd.xlane.f32.xlu0 %v310
    %v462 = vpop.xlane.xlu0 %461
    %463 = vadd.xlane.f32.xlu0 %v311
    %v464 = vpop.xlane.xlu0 %463
    %465 = vadd.xlane.f32.xlu0 %v312
    %v466 = vpop.xlane.xlu0 %465
    %467 = vadd.xlane.f32.xlu0 %v313
    %v468 = vpop.xlane.xlu0 %467
    %469 = vadd.xlane.f32.xlu0 %v314
    %v470 = vpop.xlane.xlu0 %469
    %471 = vadd.xlane.f32.xlu0 %v315
    %v472 = vpop.xlane.xlu0 %471
    %473 = vadd.xlane.f32.xlu0 %v316
    %v474 = vpop.xlane.xlu0 %473
    %475 = vadd.xlane.f32.xlu0 %v317
    %v476 = vpop.xlane.xlu0 %475
    %477 = vadd.xlane.f32.xlu0 %v318
    %v478 = vpop.xlane.xlu0 %477
    %479 = vadd.xlane.f32.xlu0 %v319
    %v480 = vpop.xlane.xlu0 %479
    %481 = vadd.xlane.f32.xlu0 %v320
    %v482 = vpop.xlane.xlu0 %481
    %483 = vadd.xlane.f32.xlu0 %v321
    %v484 = vpop.xlane.xlu0 %483
    %485 = vadd.xlane.f32.xlu0 %v322
    %v486 = vpop.xlane.xlu0 %485
    %487 = vadd.xlane.f32.xlu0 %v323
    %v488 = vpop.xlane.xlu0 %487
    %489 = vadd.xlane.f32.xlu0 %v324
    %v490 = vpop.xlane.xlu0 %489
    %491 = vadd.xlane.f32.xlu0 %v325
    %v492 = vpop.xlane.xlu0 %491
    %493 = vadd.xlane.f32.xlu0 %v326
    %v494 = vpop.xlane.xlu0 %493
    %495 = vadd.xlane.f32.xlu0 %v327
    %v496 = vpop.xlane.xlu0 %495
    %497 = vadd.xlane.f32.xlu0 %v328
    %v498 = vpop.xlane.xlu0 %497
    %499 = vadd.xlane.f32.xlu0 %v329
    %v500 = vpop.xlane.xlu0 %499
    %501 = vadd.xlane.f32.xlu0 %v330
    %v502 = vpop.xlane.xlu0 %501
    %503 = vadd.xlane.f32.xlu0 %v331
    %v504 = vpop.xlane.xlu0 %503
    %505 = vadd.xlane.f32.xlu0 %v332
    %v506 = vpop.xlane.xlu0 %505
    %507 = vadd.xlane.f32.xlu0 %v333
    %v508 = vpop.xlane.xlu0 %507
    %509 = vadd.xlane.f32.xlu0 %v334
    %v510 = vpop.xlane.xlu0 %509
    %511 = vadd.xlane.f32.xlu0 %v335
    %v512 = vpop.xlane.xlu0 %511
    %513 = vadd.xlane.f32.xlu0 %v336
    %v514 = vpop.xlane.xlu0 %513
    %515 = vadd.xlane.f32.xlu0 %v337
    %v516 = vpop.xlane.xlu0 %515
    %517 = vadd.xlane.f32.xlu0 %v338
    %v518 = vpop.xlane.xlu0 %517
    %519 = vadd.xlane.f32.xlu0 %v339
    %v520 = vpop.xlane.xlu0 %519
    %521 = vadd.xlane.f32.xlu0 %v340
    %v522 = vpop.xlane.xlu0 %521
    %523 = vadd.xlane.f32.xlu0 %v341
    %v524 = vpop.xlane.xlu0 %523
    %525 = vadd.xlane.f32.xlu0 %v342
    %v526 = vpop.xlane.xlu0 %525
    %527 = vadd.xlane.f32.xlu0 %v343
    %v528 = vpop.xlane.xlu0 %527
    %529 = vadd.xlane.f32.xlu0 %v344
    %v530 = vpop.xlane.xlu0 %529
    %531 = vadd.xlane.f32.xlu0 %v345
    %v532 = vpop.xlane.xlu0 %531
    %533 = vadd.xlane.f32.xlu0 %v346
    %v534 = vpop.xlane.xlu0 %533
    %535 = vadd.xlane.f32.xlu0 %v347
    %v536 = vpop.xlane.xlu0 %535
    %537 = vadd.xlane.f32.xlu0 %v348
    %v538 = vpop.xlane.xlu0 %537
    %539 = vadd.xlane.f32.xlu0 %v349
    %v540 = vpop.xlane.xlu0 %539
    %541 = vadd.xlane.f32.xlu0 %v350
    %v542 = vpop.xlane.xlu0 %541
    %543 = vadd.xlane.f32.xlu0 %v351
    %v544 = vpop.xlane.xlu0 %543
    %545 = vadd.xlane.f32.xlu0 %v352
    %v546 = vpop.xlane.xlu0 %545
    %547 = vadd.xlane.f32.xlu0 %v353
    %v548 = vpop.xlane.xlu0 %547
    %549 = vadd.xlane.f32.xlu0 %v354
    %v550 = vpop.xlane.xlu0 %549
    %551 = vadd.xlane.f32.xlu0 %v355
    %v552 = vpop.xlane.xlu0 %551
    %553 = vadd.xlane.f32.xlu0 %v356
    %v554 = vpop.xlane.xlu0 %553
    %555 = vadd.xlane.f32.xlu0 %v357
    %v556 = vpop.xlane.xlu0 %555
    %557 = vadd.xlane.f32.xlu0 %v358
    %v558 = vpop.xlane.xlu0 %557
    %559 = vadd.xlane.f32.xlu0 %v359
    %v560 = vpop.xlane.xlu0 %559
    %561 = vadd.xlane.f32.xlu0 %v360
    %v562 = vpop.xlane.xlu0 %561
    %563 = vadd.xlane.f32.xlu0 %v361
    %v564 = vpop.xlane.xlu0 %563
    %565 = vadd.xlane.f32.xlu0 %v362
    %v566 = vpop.xlane.xlu0 %565
    %567 = vadd.xlane.f32.xlu0 %v363
    %v568 = vpop.xlane.xlu0 %567
    %569 = vadd.xlane.f32.xlu0 %v364
    %v570 = vpop.xlane.xlu0 %569
    %571 = vadd.xlane.f32.xlu0 %v365
    %v572 = vpop.xlane.xlu0 %571
    %573 = vadd.xlane.f32.xlu0 %v366
    %v574 = vpop.xlane.xlu0 %573
    %575 = vadd.xlane.f32.xlu0 %v367
    %v576 = vpop.xlane.xlu0 %575
    %577 = vadd.xlane.f32.xlu0 %v368
    %v578 = vpop.xlane.xlu0 %577
    %579 = vadd.xlane.f32.xlu0 %v369
    %v580 = vpop.xlane.xlu0 %579
    %581 = vadd.xlane.f32.xlu0 %v370
    %v582 = vpop.xlane.xlu0 %581
    %583 = vadd.xlane.f32.xlu0 %v371
    %v584 = vpop.xlane.xlu0 %583
    %585 = vadd.xlane.f32.xlu0 %v372
    %v586 = vpop.xlane.xlu0 %585
    %587 = vadd.xlane.f32.xlu0 %v373
    %v588 = vpop.xlane.xlu0 %587
    %589 = vadd.xlane.f32.xlu0 %v374
    %v590 = vpop.xlane.xlu0 %589
    %591 = vadd.xlane.f32.xlu0 %v375
    %v592 = vpop.xlane.xlu0 %591
    %593 = vadd.xlane.f32.xlu0 %v376
    %v594 = vpop.xlane.xlu0 %593
    %595 = vadd.xlane.f32.xlu0 %v377
    %v596 = vpop.xlane.xlu0 %595
    %597 = vadd.xlane.f32.xlu0 %v378
    %v598 = vpop.xlane.xlu0 %597
    %599 = vadd.xlane.f32.xlu0 %v379
    %v600 = vpop.xlane.xlu0 %599
    %601 = vadd.xlane.f32.xlu0 %v380
    %v602 = vpop.xlane.xlu0 %601
    %603 = vadd.xlane.f32.xlu0 %v381
    %v604 = vpop.xlane.xlu0 %603
    %605 = vadd.xlane.f32.xlu0 %v382
    %v606 = vpop.xlane.xlu0 %605
    %607 = vadd.xlane.f32.xlu0 %v383
    %v608 = vpop.xlane.xlu0 %607
    %609 = vadd.xlane.f32.xlu0 %v384
    %v610 = vpop.xlane.xlu0 %609
    %611 = vadd.xlane.f32.xlu0 %v385
    %v612 = vpop.xlane.xlu0 %611
    %613 = vadd.xlane.f32.xlu0 %v386
    %v614 = vpop.xlane.xlu0 %613
    %615 = vadd.xlane.f32.xlu0 %v387
    %v616 = vpop.xlane.xlu0 %615
    %617 = vadd.xlane.f32.xlu0 %v388
    %v618 = vpop.xlane.xlu0 %617
    %619 = vadd.xlane.f32.xlu0 %v389
    %v620 = vpop.xlane.xlu0 %619
    %621 = vadd.xlane.f32.xlu0 %v390
    %v622 = vpop.xlane.xlu0 %621
    %623 = vadd.xlane.f32.xlu0 %v391
    %v624 = vpop.xlane.xlu0 %623
    %625 = vadd.xlane.f32.xlu0 %v392
    %v626 = vpop.xlane.xlu0 %625
    %627 = vadd.xlane.f32.xlu0 %v393
    %v628 = vpop.xlane.xlu0 %627
    %629 = vadd.xlane.f32.xlu0 %v394
    %v630 = vpop.xlane.xlu0 %629
    %631 = vadd.xlane.f32.xlu0 %v395
    %v632 = vpop.xlane.xlu0 %631
    %633 = vadd.xlane.f32.xlu0 %v396
    %v634 = vpop.xlane.xlu0 %633
    %635 = vadd.xlane.f32.xlu0 %v397
    %v636 = vpop.xlane.xlu0 %635
    %637 = vadd.xlane.f32.xlu0 %v398
    %v638 = vpop.xlane.xlu0 %637
    %639 = vadd.xlane.f32.xlu0 %v399
    %v640 = vpop.xlane.xlu0 %639
    %641 = vadd.xlane.f32.xlu0 %v400
    %v642 = vpop.xlane.xlu0 %641
    %643 = vadd.xlane.f32.xlu0 %v401
    %v644 = vpop.xlane.xlu0 %643
    %645 = vadd.xlane.f32.xlu0 %v402
    %v646 = vpop.xlane.xlu0 %645
    %647 = vadd.xlane.f32.xlu0 %v403
    %v648 = vpop.xlane.xlu0 %647
    %649 = vadd.xlane.f32.xlu0 %v404
    %v650 = vpop.xlane.xlu0 %649
    %651 = vadd.xlane.f32.xlu0 %v405
    %v652 = vpop.xlane.xlu0 %651
    %653 = vadd.xlane.f32.xlu0 %v406
    %v654 = vpop.xlane.xlu0 %653
    %655 = vadd.xlane.f32.xlu0 %v407
    %v656 = vpop.xlane.xlu0 %655
    %657 = vadd.xlane.f32.xlu0 %v408
    %v658 = vpop.xlane.xlu0 %657
    %659 = vadd.xlane.f32.xlu0 %v409
    %v660 = vpop.xlane.xlu0 %659
    %661 = vadd.xlane.f32.xlu0 %v410
    %v662 = vpop.xlane.xlu0 %661
    %663 = vadd.xlane.f32.xlu0 %v411
    %v664 = vpop.xlane.xlu0 %663
    %665 = vadd.xlane.f32.xlu0 %v412
    %v666 = vpop.xlane.xlu0 %665
    %667 = vadd.xlane.f32.xlu0 %v413
    %v668 = vpop.xlane.xlu0 %667
    %669 = vadd.xlane.f32.xlu0 %v414
    %v670 = vpop.xlane.xlu0 %669
    %v671 = vld [vmem:[#allocation2] sm:$0xff]
    %v801 = vunpack.c.l.s4 269488144
    %v802 = vunpack.c.0.s8 %v801
    %v803 = vlaneseq
    %v804 = vshrl.u32 %v803, 7
    %v805 = vsub.s32 %v802, %v804
    %v806 = vrot.slane %v416, %v805
    %v808 = vunpack.c.l.s4 842150450
    %v809 = vunpack.c.0.s8 %v808
    %v810 = vlaneseq
    %v811 = vshrl.u32 %v810, 7
    %v812 = vsub.s32 %v809, %v811
    %v813 = vrot.slane %v416, %v812
    %v815 = vunpack.c.l.s4 1414812756
    %v816 = vunpack.c.0.s8 %v815
    %v817 = vlaneseq
    %v818 = vshrl.u32 %v817, 7
    %v819 = vsub.s32 %v816, %v818
    %v820 = vrot.slane %v416, %v819
    %v822 = vunpack.c.l.s4 1987475062
    %v823 = vunpack.c.0.s8 %v822
    %v824 = vlaneseq
    %v825 = vshrl.u32 %v824, 7
    %v826 = vsub.s32 %v823, %v825
    %v827 = vrot.slane %v416, %v826
    %v829 = vunpack.c.l.s4 269488144
    %v830 = vunpack.c.0.s8 %v829
    %v831 = vlaneseq
    %v832 = vshrl.u32 %v831, 7
    %v833 = vsub.s32 %v830, %v832
    %v834 = vrot.slane %v418, %v833
    %v836 = vunpack.c.l.s4 842150450
    %v837 = vunpack.c.0.s8 %v836
    %v838 = vlaneseq
    %v839 = vshrl.u32 %v838, 7
    %v840 = vsub.s32 %v837, %v839
    %v841 = vrot.slane %v418, %v840
    %v843 = vunpack.c.l.s4 1414812756
    %v844 = vunpack.c.0.s8 %v843
    %v845 = vlaneseq
    %v846 = vshrl.u32 %v845, 7
    %v847 = vsub.s32 %v844, %v846
    %v848 = vrot.slane %v418, %v847
    %v850 = vunpack.c.l.s4 1987475062
    %v851 = vunpack.c.0.s8 %v850
    %v852 = vlaneseq
    %v853 = vshrl.u32 %v852, 7
    %v854 = vsub.s32 %v851, %v853
    %v855 = vrot.slane %v418, %v854
    %v857 = vunpack.c.l.s4 269488144
    %v858 = vunpack.c.0.s8 %v857
    %v859 = vlaneseq
    %v860 = vshrl.u32 %v859, 7
    %v861 = vsub.s32 %v858, %v860
    %v862 = vrot.slane %v420, %v861
    %v864 = vunpack.c.l.s4 842150450
    %v865 = vunpack.c.0.s8 %v864
    %v866 = vlaneseq
    %v867 = vshrl.u32 %v866, 7
    %v868 = vsub.s32 %v865, %v867
    %v869 = vrot.slane %v420, %v868
    %v871 = vunpack.c.l.s4 1414812756
    %v872 = vunpack.c.0.s8 %v871
    %v873 = vlaneseq
    %v874 = vshrl.u32 %v873, 7
    %v875 = vsub.s32 %v872, %v874
    %v876 = vrot.slane %v420, %v875
    %v878 = vunpack.c.l.s4 1987475062
    %v879 = vunpack.c.0.s8 %v878
    %v880 = vlaneseq
    %v881 = vshrl.u32 %v880, 7
    %v882 = vsub.s32 %v879, %v881
    %v883 = vrot.slane %v420, %v882
    %v885 = vunpack.c.l.s4 269488144
    %v886 = vunpack.c.0.s8 %v885
    %v887 = vlaneseq
    %v888 = vshrl.u32 %v887, 7
    %v889 = vsub.s32 %v886, %v888
    %v890 = vrot.slane %v422, %v889
    %v892 = vunpack.c.l.s4 842150450
    %v893 = vunpack.c.0.s8 %v892
    %v894 = vlaneseq
    %v895 = vshrl.u32 %v894, 7
    %v896 = vsub.s32 %v893, %v895
    %v897 = vrot.slane %v422, %v896
    %v899 = vunpack.c.l.s4 1414812756
    %v900 = vunpack.c.0.s8 %v899
    %v901 = vlaneseq
    %v902 = vshrl.u32 %v901, 7
    %v903 = vsub.s32 %v900, %v902
    %v904 = vrot.slane %v422, %v903
    %v906 = vunpack.c.l.s4 1987475062
    %v907 = vunpack.c.0.s8 %v906
    %v908 = vlaneseq
    %v909 = vshrl.u32 %v908, 7
    %v910 = vsub.s32 %v907, %v909
    %v911 = vrot.slane %v422, %v910
    %v913 = vunpack.c.l.s4 269488144
    %v914 = vunpack.c.0.s8 %v913
    %v915 = vlaneseq
    %v916 = vshrl.u32 %v915, 7
    %v917 = vsub.s32 %v914, %v916
    %v918 = vrot.slane %v424, %v917
    %v920 = vunpack.c.l.s4 842150450
    %v921 = vunpack.c.0.s8 %v920
    %v922 = vlaneseq
    %v923 = vshrl.u32 %v922, 7
    %v924 = vsub.s32 %v921, %v923
    %v925 = vrot.slane %v424, %v924
    %v927 = vunpack.c.l.s4 1414812756
    %v928 = vunpack.c.0.s8 %v927
    %v929 = vlaneseq
    %v930 = vshrl.u32 %v929, 7
    %v931 = vsub.s32 %v928, %v930
    %v932 = vrot.slane %v424, %v931
    %v934 = vunpack.c.l.s4 1987475062
    %v935 = vunpack.c.0.s8 %v934
    %v936 = vlaneseq
    %v937 = vshrl.u32 %v936, 7
    %v938 = vsub.s32 %v935, %v937
    %v939 = vrot.slane %v424, %v938
    %v941 = vunpack.c.l.s4 269488144
    %v942 = vunpack.c.0.s8 %v941
    %v943 = vlaneseq
    %v944 = vshrl.u32 %v943, 7
    %v945 = vsub.s32 %v942, %v944
    %v946 = vrot.slane %v426, %v945
    %v948 = vunpack.c.l.s4 842150450
    %v949 = vunpack.c.0.s8 %v948
    %v950 = vlaneseq
    %v951 = vshrl.u32 %v950, 7
    %v952 = vsub.s32 %v949, %v951
    %v953 = vrot.slane %v426, %v952
    %v955 = vunpack.c.l.s4 1414812756
    %v956 = vunpack.c.0.s8 %v955
    %v957 = vlaneseq
    %v958 = vshrl.u32 %v957, 7
    %v959 = vsub.s32 %v956, %v958
    %v960 = vrot.slane %v426, %v959
    %v962 = vunpack.c.l.s4 1987475062
    %v963 = vunpack.c.0.s8 %v962
    %v964 = vlaneseq
    %v965 = vshrl.u32 %v964, 7
    %v966 = vsub.s32 %v963, %v965
    %v967 = vrot.slane %v426, %v966
    %v969 = vunpack.c.l.s4 269488144
    %v970 = vunpack.c.0.s8 %v969
    %v971 = vlaneseq
    %v972 = vshrl.u32 %v971, 7
    %v973 = vsub.s32 %v970, %v972
    %v974 = vrot.slane %v428, %v973
    %v976 = vunpack.c.l.s4 842150450
    %v977 = vunpack.c.0.s8 %v976
    %v978 = vlaneseq
    %v979 = vshrl.u32 %v978, 7
    %v980 = vsub.s32 %v977, %v979
    %v981 = vrot.slane %v428, %v980
    %v983 = vunpack.c.l.s4 1414812756
    %v984 = vunpack.c.0.s8 %v983
    %v985 = vlaneseq
    %v986 = vshrl.u32 %v985, 7
    %v987 = vsub.s32 %v984, %v986
    %v988 = vrot.slane %v428, %v987
    %v990 = vunpack.c.l.s4 1987475062
    %v991 = vunpack.c.0.s8 %v990
    %v992 = vlaneseq
    %v993 = vshrl.u32 %v992, 7
    %v994 = vsub.s32 %v991, %v993
    %v995 = vrot.slane %v428, %v994
    %v997 = vunpack.c.l.s4 269488144
    %v998 = vunpack.c.0.s8 %v997
    %v999 = vlaneseq
    %v1000 = vshrl.u32 %v999, 7
    %v1001 = vsub.s32 %v998, %v1000
    %v1002 = vrot.slane %v430, %v1001
    %v1004 = vunpack.c.l.s4 842150450
    %v1005 = vunpack.c.0.s8 %v1004
    %v1006 = vlaneseq
    %v1007 = vshrl.u32 %v1006, 7
    %v1008 = vsub.s32 %v1005, %v1007
    %v1009 = vrot.slane %v430, %v1008
    %v1011 = vunpack.c.l.s4 1414812756
    %v1012 = vunpack.c.0.s8 %v1011
    %v1013 = vlaneseq
    %v1014 = vshrl.u32 %v1013, 7
    %v1015 = vsub.s32 %v1012, %v1014
    %v1016 = vrot.slane %v430, %v1015
    %v1018 = vunpack.c.l.s4 1987475062
    %v1019 = vunpack.c.0.s8 %v1018
    %v1020 = vlaneseq
    %v1021 = vshrl.u32 %v1020, 7
    %v1022 = vsub.s32 %v1019, %v1021
    %v1023 = vrot.slane %v430, %v1022
    %v1025 = vunpack.c.l.s4 269488144
    %v1026 = vunpack.c.0.s8 %v1025
    %v1027 = vlaneseq
    %v1028 = vshrl.u32 %v1027, 7
    %v1029 = vsub.s32 %v1026, %v1028
    %v1030 = vrot.slane %v432, %v1029
    %v1032 = vunpack.c.l.s4 842150450
    %v1033 = vunpack.c.0.s8 %v1032
    %v1034 = vlaneseq
    %v1035 = vshrl.u32 %v1034, 7
    %v1036 = vsub.s32 %v1033, %v1035
    %v1037 = vrot.slane %v432, %v1036
    %v1039 = vunpack.c.l.s4 1414812756
    %v1040 = vunpack.c.0.s8 %v1039
    %v1041 = vlaneseq
    %v1042 = vshrl.u32 %v1041, 7
    %v1043 = vsub.s32 %v1040, %v1042
    %v1044 = vrot.slane %v432, %v1043
    %v1046 = vunpack.c.l.s4 1987475062
    %v1047 = vunpack.c.0.s8 %v1046
    %v1048 = vlaneseq
    %v1049 = vshrl.u32 %v1048, 7
    %v1050 = vsub.s32 %v1047, %v1049
    %v1051 = vrot.slane %v432, %v1050
    %v1053 = vunpack.c.l.s4 269488144
    %v1054 = vunpack.c.0.s8 %v1053
    %v1055 = vlaneseq
    %v1056 = vshrl.u32 %v1055, 7
    %v1057 = vsub.s32 %v1054, %v1056
    %v1058 = vrot.slane %v434, %v1057
    %v1060 = vunpack.c.l.s4 842150450
    %v1061 = vunpack.c.0.s8 %v1060
    %v1062 = vlaneseq
    %v1063 = vshrl.u32 %v1062, 7
    %v1064 = vsub.s32 %v1061, %v1063
    %v1065 = vrot.slane %v434, %v1064
    %v1067 = vunpack.c.l.s4 1414812756
    %v1068 = vunpack.c.0.s8 %v1067
    %v1069 = vlaneseq
    %v1070 = vshrl.u32 %v1069, 7
    %v1071 = vsub.s32 %v1068, %v1070
    %v1072 = vrot.slane %v434, %v1071
    %v1074 = vunpack.c.l.s4 1987475062
    %v1075 = vunpack.c.0.s8 %v1074
    %v1076 = vlaneseq
    %v1077 = vshrl.u32 %v1076, 7
    %v1078 = vsub.s32 %v1075, %v1077
    %v1079 = vrot.slane %v434, %v1078
    %v1081 = vunpack.c.l.s4 269488144
    %v1082 = vunpack.c.0.s8 %v1081
    %v1083 = vlaneseq
    %v1084 = vshrl.u32 %v1083, 7
    %v1085 = vsub.s32 %v1082, %v1084
    %v1086 = vrot.slane %v436, %v1085
    %v1088 = vunpack.c.l.s4 842150450
    %v1089 = vunpack.c.0.s8 %v1088
    %v1090 = vlaneseq
    %v1091 = vshrl.u32 %v1090, 7
    %v1092 = vsub.s32 %v1089, %v1091
    %v1093 = vrot.slane %v436, %v1092
    %v1095 = vunpack.c.l.s4 1414812756
    %v1096 = vunpack.c.0.s8 %v1095
    %v1097 = vlaneseq
    %v1098 = vshrl.u32 %v1097, 7
    %v1099 = vsub.s32 %v1096, %v1098
    %v1100 = vrot.slane %v436, %v1099
    %v1102 = vunpack.c.l.s4 1987475062
    %v1103 = vunpack.c.0.s8 %v1102
    %v1104 = vlaneseq
    %v1105 = vshrl.u32 %v1104, 7
    %v1106 = vsub.s32 %v1103, %v1105
    %v1107 = vrot.slane %v436, %v1106
    %v1109 = vunpack.c.l.s4 269488144
    %v1110 = vunpack.c.0.s8 %v1109
    %v1111 = vlaneseq
    %v1112 = vshrl.u32 %v1111, 7
    %v1113 = vsub.s32 %v1110, %v1112
    %v1114 = vrot.slane %v438, %v1113
    %v1116 = vunpack.c.l.s4 842150450
    %v1117 = vunpack.c.0.s8 %v1116
    %v1118 = vlaneseq
    %v1119 = vshrl.u32 %v1118, 7
    %v1120 = vsub.s32 %v1117, %v1119
    %v1121 = vrot.slane %v438, %v1120
    %v1123 = vunpack.c.l.s4 1414812756
    %v1124 = vunpack.c.0.s8 %v1123
    %v1125 = vlaneseq
    %v1126 = vshrl.u32 %v1125, 7
    %v1127 = vsub.s32 %v1124, %v1126
    %v1128 = vrot.slane %v438, %v1127
    %v1130 = vunpack.c.l.s4 1987475062
    %v1131 = vunpack.c.0.s8 %v1130
    %v1132 = vlaneseq
    %v1133 = vshrl.u32 %v1132, 7
    %v1134 = vsub.s32 %v1131, %v1133
    %v1135 = vrot.slane %v438, %v1134
    %v1137 = vunpack.c.l.s4 269488144
    %v1138 = vunpack.c.0.s8 %v1137
    %v1139 = vlaneseq
    %v1140 = vshrl.u32 %v1139, 7
    %v1141 = vsub.s32 %v1138, %v1140
    %v1142 = vrot.slane %v440, %v1141
    %v1144 = vunpack.c.l.s4 842150450
    %v1145 = vunpack.c.0.s8 %v1144
    %v1146 = vlaneseq
    %v1147 = vshrl.u32 %v1146, 7
    %v1148 = vsub.s32 %v1145, %v1147
    %v1149 = vrot.slane %v440, %v1148
    %v1151 = vunpack.c.l.s4 1414812756
    %v1152 = vunpack.c.0.s8 %v1151
    %v1153 = vlaneseq
    %v1154 = vshrl.u32 %v1153, 7
    %v1155 = vsub.s32 %v1152, %v1154
    %v1156 = vrot.slane %v440, %v1155
    %v1158 = vunpack.c.l.s4 1987475062
    %v1159 = vunpack.c.0.s8 %v1158
    %v1160 = vlaneseq
    %v1161 = vshrl.u32 %v1160, 7
    %v1162 = vsub.s32 %v1159, %v1161
    %v1163 = vrot.slane %v440, %v1162
    %v1165 = vunpack.c.l.s4 269488144
    %v1166 = vunpack.c.0.s8 %v1165
    %v1167 = vlaneseq
    %v1168 = vshrl.u32 %v1167, 7
    %v1169 = vsub.s32 %v1166, %v1168
    %v1170 = vrot.slane %v442, %v1169
    %v1172 = vunpack.c.l.s4 842150450
    %v1173 = vunpack.c.0.s8 %v1172
    %v1174 = vlaneseq
    %v1175 = vshrl.u32 %v1174, 7
    %v1176 = vsub.s32 %v1173, %v1175
    %v1177 = vrot.slane %v442, %v1176
    %v1179 = vunpack.c.l.s4 1414812756
    %v1180 = vunpack.c.0.s8 %v1179
    %v1181 = vlaneseq
    %v1182 = vshrl.u32 %v1181, 7
    %v1183 = vsub.s32 %v1180, %v1182
    %v1184 = vrot.slane %v442, %v1183
    %v1186 = vunpack.c.l.s4 1987475062
    %v1187 = vunpack.c.0.s8 %v1186
    %v1188 = vlaneseq
    %v1189 = vshrl.u32 %v1188, 7
    %v1190 = vsub.s32 %v1187, %v1189
    %v1191 = vrot.slane %v442, %v1190
    %v1193 = vunpack.c.l.s4 269488144
    %v1194 = vunpack.c.0.s8 %v1193
    %v1195 = vlaneseq
    %v1196 = vshrl.u32 %v1195, 7
    %v1197 = vsub.s32 %v1194, %v1196
    %v1198 = vrot.slane %v444, %v1197
    %v1200 = vunpack.c.l.s4 842150450
    %v1201 = vunpack.c.0.s8 %v1200
    %v1202 = vlaneseq
    %v1203 = vshrl.u32 %v1202, 7
    %v1204 = vsub.s32 %v1201, %v1203
    %v1205 = vrot.slane %v444, %v1204
    %v1207 = vunpack.c.l.s4 1414812756
    %v1208 = vunpack.c.0.s8 %v1207
    %v1209 = vlaneseq
    %v1210 = vshrl.u32 %v1209, 7
    %v1211 = vsub.s32 %v1208, %v1210
    %v1212 = vrot.slane %v444, %v1211
    %v1214 = vunpack.c.l.s4 1987475062
    %v1215 = vunpack.c.0.s8 %v1214
    %v1216 = vlaneseq
    %v1217 = vshrl.u32 %v1216, 7
    %v1218 = vsub.s32 %v1215, %v1217
    %v1219 = vrot.slane %v444, %v1218
    %v1221 = vunpack.c.l.s4 269488144
    %v1222 = vunpack.c.0.s8 %v1221
    %v1223 = vlaneseq
    %v1224 = vshrl.u32 %v1223, 7
    %v1225 = vsub.s32 %v1222, %v1224
    %v1226 = vrot.slane %v446, %v1225
    %v1228 = vunpack.c.l.s4 842150450
    %v1229 = vunpack.c.0.s8 %v1228
    %v1230 = vlaneseq
    %v1231 = vshrl.u32 %v1230, 7
    %v1232 = vsub.s32 %v1229, %v1231
    %v1233 = vrot.slane %v446, %v1232
    %v1235 = vunpack.c.l.s4 1414812756
    %v1236 = vunpack.c.0.s8 %v1235
    %v1237 = vlaneseq
    %v1238 = vshrl.u32 %v1237, 7
    %v1239 = vsub.s32 %v1236, %v1238
    %v1240 = vrot.slane %v446, %v1239
    %v1242 = vunpack.c.l.s4 1987475062
    %v1243 = vunpack.c.0.s8 %v1242
    %v1244 = vlaneseq
    %v1245 = vshrl.u32 %v1244, 7
    %v1246 = vsub.s32 %v1243, %v1245
    %v1247 = vrot.slane %v446, %v1246
    %v1249 = vunpack.c.l.s4 269488144
    %v1250 = vunpack.c.0.s8 %v1249
    %v1251 = vlaneseq
    %v1252 = vshrl.u32 %v1251, 7
    %v1253 = vsub.s32 %v1250, %v1252
    %v1254 = vrot.slane %v448, %v1253
    %v1256 = vunpack.c.l.s4 842150450
    %v1257 = vunpack.c.0.s8 %v1256
    %v1258 = vlaneseq
    %v1259 = vshrl.u32 %v1258, 7
    %v1260 = vsub.s32 %v1257, %v1259
    %v1261 = vrot.slane %v448, %v1260
    %v1263 = vunpack.c.l.s4 1414812756
    %v1264 = vunpack.c.0.s8 %v1263
    %v1265 = vlaneseq
    %v1266 = vshrl.u32 %v1265, 7
    %v1267 = vsub.s32 %v1264, %v1266
    %v1268 = vrot.slane %v448, %v1267
    %v1270 = vunpack.c.l.s4 1987475062
    %v1271 = vunpack.c.0.s8 %v1270
    %v1272 = vlaneseq
    %v1273 = vshrl.u32 %v1272, 7
    %v1274 = vsub.s32 %v1271, %v1273
    %v1275 = vrot.slane %v448, %v1274
    %v1277 = vunpack.c.l.s4 269488144
    %v1278 = vunpack.c.0.s8 %v1277
    %v1279 = vlaneseq
    %v1280 = vshrl.u32 %v1279, 7
    %v1281 = vsub.s32 %v1278, %v1280
    %v1282 = vrot.slane %v450, %v1281
    %v1284 = vunpack.c.l.s4 842150450
    %v1285 = vunpack.c.0.s8 %v1284
    %v1286 = vlaneseq
    %v1287 = vshrl.u32 %v1286, 7
    %v1288 = vsub.s32 %v1285, %v1287
    %v1289 = vrot.slane %v450, %v1288
    %v1291 = vunpack.c.l.s4 1414812756
    %v1292 = vunpack.c.0.s8 %v1291
    %v1293 = vlaneseq
    %v1294 = vshrl.u32 %v1293, 7
    %v1295 = vsub.s32 %v1292, %v1294
    %v1296 = vrot.slane %v450, %v1295
    %v1298 = vunpack.c.l.s4 1987475062
    %v1299 = vunpack.c.0.s8 %v1298
    %v1300 = vlaneseq
    %v1301 = vshrl.u32 %v1300, 7
    %v1302 = vsub.s32 %v1299, %v1301
    %v1303 = vrot.slane %v450, %v1302
    %v1305 = vunpack.c.l.s4 269488144
    %v1306 = vunpack.c.0.s8 %v1305
    %v1307 = vlaneseq
    %v1308 = vshrl.u32 %v1307, 7
    %v1309 = vsub.s32 %v1306, %v1308
    %v1310 = vrot.slane %v452, %v1309
    %v1312 = vunpack.c.l.s4 842150450
    %v1313 = vunpack.c.0.s8 %v1312
    %v1314 = vlaneseq
    %v1315 = vshrl.u32 %v1314, 7
    %v1316 = vsub.s32 %v1313, %v1315
    %v1317 = vrot.slane %v452, %v1316
    %v1319 = vunpack.c.l.s4 1414812756
    %v1320 = vunpack.c.0.s8 %v1319
    %v1321 = vlaneseq
    %v1322 = vshrl.u32 %v1321, 7
    %v1323 = vsub.s32 %v1320, %v1322
    %v1324 = vrot.slane %v452, %v1323
    %v1326 = vunpack.c.l.s4 1987475062
    %v1327 = vunpack.c.0.s8 %v1326
    %v1328 = vlaneseq
    %v1329 = vshrl.u32 %v1328, 7
    %v1330 = vsub.s32 %v1327, %v1329
    %v1331 = vrot.slane %v452, %v1330
    %v1333 = vunpack.c.l.s4 269488144
    %v1334 = vunpack.c.0.s8 %v1333
    %v1335 = vlaneseq
    %v1336 = vshrl.u32 %v1335, 7
    %v1337 = vsub.s32 %v1334, %v1336
    %v1338 = vrot.slane %v454, %v1337
    %v1340 = vunpack.c.l.s4 842150450
    %v1341 = vunpack.c.0.s8 %v1340
    %v1342 = vlaneseq
    %v1343 = vshrl.u32 %v1342, 7
    %v1344 = vsub.s32 %v1341, %v1343
    %v1345 = vrot.slane %v454, %v1344
    %v1347 = vunpack.c.l.s4 1414812756
    %v1348 = vunpack.c.0.s8 %v1347
    %v1349 = vlaneseq
    %v1350 = vshrl.u32 %v1349, 7
    %v1351 = vsub.s32 %v1348, %v1350
    %v1352 = vrot.slane %v454, %v1351
    %v1354 = vunpack.c.l.s4 1987475062
    %v1355 = vunpack.c.0.s8 %v1354
    %v1356 = vlaneseq
    %v1357 = vshrl.u32 %v1356, 7
    %v1358 = vsub.s32 %v1355, %v1357
    %v1359 = vrot.slane %v454, %v1358
    %v1361 = vunpack.c.l.s4 269488144
    %v1362 = vunpack.c.0.s8 %v1361
    %v1363 = vlaneseq
    %v1364 = vshrl.u32 %v1363, 7
    %v1365 = vsub.s32 %v1362, %v1364
    %v1366 = vrot.slane %v456, %v1365
    %v1368 = vunpack.c.l.s4 842150450
    %v1369 = vunpack.c.0.s8 %v1368
    %v1370 = vlaneseq
    %v1371 = vshrl.u32 %v1370, 7
    %v1372 = vsub.s32 %v1369, %v1371
    %v1373 = vrot.slane %v456, %v1372
    %v1375 = vunpack.c.l.s4 1414812756
    %v1376 = vunpack.c.0.s8 %v1375
    %v1377 = vlaneseq
    %v1378 = vshrl.u32 %v1377, 7
    %v1379 = vsub.s32 %v1376, %v1378
    %v1380 = vrot.slane %v456, %v1379
    %v1382 = vunpack.c.l.s4 1987475062
    %v1383 = vunpack.c.0.s8 %v1382
    %v1384 = vlaneseq
    %v1385 = vshrl.u32 %v1384, 7
    %v1386 = vsub.s32 %v1383, %v1385
    %v1387 = vrot.slane %v456, %v1386
    %v1389 = vunpack.c.l.s4 269488144
    %v1390 = vunpack.c.0.s8 %v1389
    %v1391 = vlaneseq
    %v1392 = vshrl.u32 %v1391, 7
    %v1393 = vsub.s32 %v1390, %v1392
    %v1394 = vrot.slane %v458, %v1393
    %v1396 = vunpack.c.l.s4 842150450
    %v1397 = vunpack.c.0.s8 %v1396
    %v1398 = vlaneseq
    %v1399 = vshrl.u32 %v1398, 7
    %v1400 = vsub.s32 %v1397, %v1399
    %v1401 = vrot.slane %v458, %v1400
    %v1403 = vunpack.c.l.s4 1414812756
    %v1404 = vunpack.c.0.s8 %v1403
    %v1405 = vlaneseq
    %v1406 = vshrl.u32 %v1405, 7
    %v1407 = vsub.s32 %v1404, %v1406
    %v1408 = vrot.slane %v458, %v1407
    %v1410 = vunpack.c.l.s4 1987475062
    %v1411 = vunpack.c.0.s8 %v1410
    %v1412 = vlaneseq
    %v1413 = vshrl.u32 %v1412, 7
    %v1414 = vsub.s32 %v1411, %v1413
    %v1415 = vrot.slane %v458, %v1414
    %v1417 = vunpack.c.l.s4 269488144
    %v1418 = vunpack.c.0.s8 %v1417
    %v1419 = vlaneseq
    %v1420 = vshrl.u32 %v1419, 7
    %v1421 = vsub.s32 %v1418, %v1420
    %v1422 = vrot.slane %v460, %v1421
    %v1424 = vunpack.c.l.s4 842150450
    %v1425 = vunpack.c.0.s8 %v1424
    %v1426 = vlaneseq
    %v1427 = vshrl.u32 %v1426, 7
    %v1428 = vsub.s32 %v1425, %v1427
    %v1429 = vrot.slane %v460, %v1428
    %v1431 = vunpack.c.l.s4 1414812756
    %v1432 = vunpack.c.0.s8 %v1431
    %v1433 = vlaneseq
    %v1434 = vshrl.u32 %v1433, 7
    %v1435 = vsub.s32 %v1432, %v1434
    %v1436 = vrot.slane %v460, %v1435
    %v1438 = vunpack.c.l.s4 1987475062
    %v1439 = vunpack.c.0.s8 %v1438
    %v1440 = vlaneseq
    %v1441 = vshrl.u32 %v1440, 7
    %v1442 = vsub.s32 %v1439, %v1441
    %v1443 = vrot.slane %v460, %v1442
    %v1445 = vunpack.c.l.s4 269488144
    %v1446 = vunpack.c.0.s8 %v1445
    %v1447 = vlaneseq
    %v1448 = vshrl.u32 %v1447, 7
    %v1449 = vsub.s32 %v1446, %v1448
    %v1450 = vrot.slane %v462, %v1449
    %v1452 = vunpack.c.l.s4 842150450
    %v1453 = vunpack.c.0.s8 %v1452
    %v1454 = vlaneseq
    %v1455 = vshrl.u32 %v1454, 7
    %v1456 = vsub.s32 %v1453, %v1455
    %v1457 = vrot.slane %v462, %v1456
    %v1459 = vunpack.c.l.s4 1414812756
    %v1460 = vunpack.c.0.s8 %v1459
    %v1461 = vlaneseq
    %v1462 = vshrl.u32 %v1461, 7
    %v1463 = vsub.s32 %v1460, %v1462
    %v1464 = vrot.slane %v462, %v1463
    %v1466 = vunpack.c.l.s4 1987475062
    %v1467 = vunpack.c.0.s8 %v1466
    %v1468 = vlaneseq
    %v1469 = vshrl.u32 %v1468, 7
    %v1470 = vsub.s32 %v1467, %v1469
    %v1471 = vrot.slane %v462, %v1470
    %v1473 = vunpack.c.l.s4 269488144
    %v1474 = vunpack.c.0.s8 %v1473
    %v1475 = vlaneseq
    %v1476 = vshrl.u32 %v1475, 7
    %v1477 = vsub.s32 %v1474, %v1476
    %v1478 = vrot.slane %v464, %v1477
    %v1480 = vunpack.c.l.s4 842150450
    %v1481 = vunpack.c.0.s8 %v1480
    %v1482 = vlaneseq
    %v1483 = vshrl.u32 %v1482, 7
    %v1484 = vsub.s32 %v1481, %v1483
    %v1485 = vrot.slane %v464, %v1484
    %v1487 = vunpack.c.l.s4 1414812756
    %v1488 = vunpack.c.0.s8 %v1487
    %v1489 = vlaneseq
    %v1490 = vshrl.u32 %v1489, 7
    %v1491 = vsub.s32 %v1488, %v1490
    %v1492 = vrot.slane %v464, %v1491
    %v1494 = vunpack.c.l.s4 1987475062
    %v1495 = vunpack.c.0.s8 %v1494
    %v1496 = vlaneseq
    %v1497 = vshrl.u32 %v1496, 7
    %v1498 = vsub.s32 %v1495, %v1497
    %v1499 = vrot.slane %v464, %v1498
    %v1501 = vunpack.c.l.s4 269488144
    %v1502 = vunpack.c.0.s8 %v1501
    %v1503 = vlaneseq
    %v1504 = vshrl.u32 %v1503, 7
    %v1505 = vsub.s32 %v1502, %v1504
    %v1506 = vrot.slane %v466, %v1505
    %v1508 = vunpack.c.l.s4 842150450
    %v1509 = vunpack.c.0.s8 %v1508
    %v1510 = vlaneseq
    %v1511 = vshrl.u32 %v1510, 7
    %v1512 = vsub.s32 %v1509, %v1511
    %v1513 = vrot.slane %v466, %v1512
    %v1515 = vunpack.c.l.s4 1414812756
    %v1516 = vunpack.c.0.s8 %v1515
    %v1517 = vlaneseq
    %v1518 = vshrl.u32 %v1517, 7
    %v1519 = vsub.s32 %v1516, %v1518
    %v1520 = vrot.slane %v466, %v1519
    %v1522 = vunpack.c.l.s4 1987475062
    %v1523 = vunpack.c.0.s8 %v1522
    %v1524 = vlaneseq
    %v1525 = vshrl.u32 %v1524, 7
    %v1526 = vsub.s32 %v1523, %v1525
    %v1527 = vrot.slane %v466, %v1526
    %v1529 = vunpack.c.l.s4 269488144
    %v1530 = vunpack.c.0.s8 %v1529
    %v1531 = vlaneseq
    %v1532 = vshrl.u32 %v1531, 7
    %v1533 = vsub.s32 %v1530, %v1532
    %v1534 = vrot.slane %v468, %v1533
    %v1536 = vunpack.c.l.s4 842150450
    %v1537 = vunpack.c.0.s8 %v1536
    %v1538 = vlaneseq
    %v1539 = vshrl.u32 %v1538, 7
    %v1540 = vsub.s32 %v1537, %v1539
    %v1541 = vrot.slane %v468, %v1540
    %v1543 = vunpack.c.l.s4 1414812756
    %v1544 = vunpack.c.0.s8 %v1543
    %v1545 = vlaneseq
    %v1546 = vshrl.u32 %v1545, 7
    %v1547 = vsub.s32 %v1544, %v1546
    %v1548 = vrot.slane %v468, %v1547
    %v1550 = vunpack.c.l.s4 1987475062
    %v1551 = vunpack.c.0.s8 %v1550
    %v1552 = vlaneseq
    %v1553 = vshrl.u32 %v1552, 7
    %v1554 = vsub.s32 %v1551, %v1553
    %v1555 = vrot.slane %v468, %v1554
    %v1557 = vunpack.c.l.s4 269488144
    %v1558 = vunpack.c.0.s8 %v1557
    %v1559 = vlaneseq
    %v1560 = vshrl.u32 %v1559, 7
    %v1561 = vsub.s32 %v1558, %v1560
    %v1562 = vrot.slane %v470, %v1561
    %v1564 = vunpack.c.l.s4 842150450
    %v1565 = vunpack.c.0.s8 %v1564
    %v1566 = vlaneseq
    %v1567 = vshrl.u32 %v1566, 7
    %v1568 = vsub.s32 %v1565, %v1567
    %v1569 = vrot.slane %v470, %v1568
    %v1571 = vunpack.c.l.s4 1414812756
    %v1572 = vunpack.c.0.s8 %v1571
    %v1573 = vlaneseq
    %v1574 = vshrl.u32 %v1573, 7
    %v1575 = vsub.s32 %v1572, %v1574
    %v1576 = vrot.slane %v470, %v1575
    %v1578 = vunpack.c.l.s4 1987475062
    %v1579 = vunpack.c.0.s8 %v1578
    %v1580 = vlaneseq
    %v1581 = vshrl.u32 %v1580, 7
    %v1582 = vsub.s32 %v1579, %v1581
    %v1583 = vrot.slane %v470, %v1582
    %v1585 = vunpack.c.l.s4 269488144
    %v1586 = vunpack.c.0.s8 %v1585
    %v1587 = vlaneseq
    %v1588 = vshrl.u32 %v1587, 7
    %v1589 = vsub.s32 %v1586, %v1588
    %v1590 = vrot.slane %v472, %v1589
    %v1592 = vunpack.c.l.s4 842150450
    %v1593 = vunpack.c.0.s8 %v1592
    %v1594 = vlaneseq
    %v1595 = vshrl.u32 %v1594, 7
    %v1596 = vsub.s32 %v1593, %v1595
    %v1597 = vrot.slane %v472, %v1596
    %v1599 = vunpack.c.l.s4 1414812756
    %v1600 = vunpack.c.0.s8 %v1599
    %v1601 = vlaneseq
    %v1602 = vshrl.u32 %v1601, 7
    %v1603 = vsub.s32 %v1600, %v1602
    %v1604 = vrot.slane %v472, %v1603
    %v1606 = vunpack.c.l.s4 1987475062
    %v1607 = vunpack.c.0.s8 %v1606
    %v1608 = vlaneseq
    %v1609 = vshrl.u32 %v1608, 7
    %v1610 = vsub.s32 %v1607, %v1609
    %v1611 = vrot.slane %v472, %v1610
    %v1613 = vunpack.c.l.s4 269488144
    %v1614 = vunpack.c.0.s8 %v1613
    %v1615 = vlaneseq
    %v1616 = vshrl.u32 %v1615, 7
    %v1617 = vsub.s32 %v1614, %v1616
    %v1618 = vrot.slane %v474, %v1617
    %v1620 = vunpack.c.l.s4 842150450
    %v1621 = vunpack.c.0.s8 %v1620
    %v1622 = vlaneseq
    %v1623 = vshrl.u32 %v1622, 7
    %v1624 = vsub.s32 %v1621, %v1623
    %v1625 = vrot.slane %v474, %v1624
    %v1627 = vunpack.c.l.s4 1414812756
    %v1628 = vunpack.c.0.s8 %v1627
    %v1629 = vlaneseq
    %v1630 = vshrl.u32 %v1629, 7
    %v1631 = vsub.s32 %v1628, %v1630
    %v1632 = vrot.slane %v474, %v1631
    %v1634 = vunpack.c.l.s4 1987475062
    %v1635 = vunpack.c.0.s8 %v1634
    %v1636 = vlaneseq
    %v1637 = vshrl.u32 %v1636, 7
    %v1638 = vsub.s32 %v1635, %v1637
    %v1639 = vrot.slane %v474, %v1638
    %v1641 = vunpack.c.l.s4 269488144
    %v1642 = vunpack.c.0.s8 %v1641
    %v1643 = vlaneseq
    %v1644 = vshrl.u32 %v1643, 7
    %v1645 = vsub.s32 %v1642, %v1644
    %v1646 = vrot.slane %v476, %v1645
    %v1648 = vunpack.c.l.s4 842150450
    %v1649 = vunpack.c.0.s8 %v1648
    %v1650 = vlaneseq
    %v1651 = vshrl.u32 %v1650, 7
    %v1652 = vsub.s32 %v1649, %v1651
    %v1653 = vrot.slane %v476, %v1652
    %v1655 = vunpack.c.l.s4 1414812756
    %v1656 = vunpack.c.0.s8 %v1655
    %v1657 = vlaneseq
    %v1658 = vshrl.u32 %v1657, 7
    %v1659 = vsub.s32 %v1656, %v1658
    %v1660 = vrot.slane %v476, %v1659
    %v1662 = vunpack.c.l.s4 1987475062
    %v1663 = vunpack.c.0.s8 %v1662
    %v1664 = vlaneseq
    %v1665 = vshrl.u32 %v1664, 7
    %v1666 = vsub.s32 %v1663, %v1665
    %v1667 = vrot.slane %v476, %v1666
    %v1669 = vunpack.c.l.s4 269488144
    %v1670 = vunpack.c.0.s8 %v1669
    %v1671 = vlaneseq
    %v1672 = vshrl.u32 %v1671, 7
    %v1673 = vsub.s32 %v1670, %v1672
    %v1674 = vrot.slane %v478, %v1673
    %v1676 = vunpack.c.l.s4 842150450
    %v1677 = vunpack.c.0.s8 %v1676
    %v1678 = vlaneseq
    %v1679 = vshrl.u32 %v1678, 7
    %v1680 = vsub.s32 %v1677, %v1679
    %v1681 = vrot.slane %v478, %v1680
    %v1683 = vunpack.c.l.s4 1414812756
    %v1684 = vunpack.c.0.s8 %v1683
    %v1685 = vlaneseq
    %v1686 = vshrl.u32 %v1685, 7
    %v1687 = vsub.s32 %v1684, %v1686
    %v1688 = vrot.slane %v478, %v1687
    %v1690 = vunpack.c.l.s4 1987475062
    %v1691 = vunpack.c.0.s8 %v1690
    %v1692 = vlaneseq
    %v1693 = vshrl.u32 %v1692, 7
    %v1694 = vsub.s32 %v1691, %v1693
    %v1695 = vrot.slane %v478, %v1694
    %v1697 = vunpack.c.l.s4 269488144
    %v1698 = vunpack.c.0.s8 %v1697
    %v1699 = vlaneseq
    %v1700 = vshrl.u32 %v1699, 7
    %v1701 = vsub.s32 %v1698, %v1700
    %v1702 = vrot.slane %v480, %v1701
    %v1704 = vunpack.c.l.s4 842150450
    %v1705 = vunpack.c.0.s8 %v1704
    %v1706 = vlaneseq
    %v1707 = vshrl.u32 %v1706, 7
    %v1708 = vsub.s32 %v1705, %v1707
    %v1709 = vrot.slane %v480, %v1708
    %v1711 = vunpack.c.l.s4 1414812756
    %v1712 = vunpack.c.0.s8 %v1711
    %v1713 = vlaneseq
    %v1714 = vshrl.u32 %v1713, 7
    %v1715 = vsub.s32 %v1712, %v1714
    %v1716 = vrot.slane %v480, %v1715
    %v1718 = vunpack.c.l.s4 1987475062
    %v1719 = vunpack.c.0.s8 %v1718
    %v1720 = vlaneseq
    %v1721 = vshrl.u32 %v1720, 7
    %v1722 = vsub.s32 %v1719, %v1721
    %v1723 = vrot.slane %v480, %v1722
    %v1725 = vunpack.c.l.s4 269488144
    %v1726 = vunpack.c.0.s8 %v1725
    %v1727 = vlaneseq
    %v1728 = vshrl.u32 %v1727, 7
    %v1729 = vsub.s32 %v1726, %v1728
    %v1730 = vrot.slane %v482, %v1729
    %v1732 = vunpack.c.l.s4 842150450
    %v1733 = vunpack.c.0.s8 %v1732
    %v1734 = vlaneseq
    %v1735 = vshrl.u32 %v1734, 7
    %v1736 = vsub.s32 %v1733, %v1735
    %v1737 = vrot.slane %v482, %v1736
    %v1739 = vunpack.c.l.s4 1414812756
    %v1740 = vunpack.c.0.s8 %v1739
    %v1741 = vlaneseq
    %v1742 = vshrl.u32 %v1741, 7
    %v1743 = vsub.s32 %v1740, %v1742
    %v1744 = vrot.slane %v482, %v1743
    %v1746 = vunpack.c.l.s4 1987475062
    %v1747 = vunpack.c.0.s8 %v1746
    %v1748 = vlaneseq
    %v1749 = vshrl.u32 %v1748, 7
    %v1750 = vsub.s32 %v1747, %v1749
    %v1751 = vrot.slane %v482, %v1750
    %v1753 = vunpack.c.l.s4 269488144
    %v1754 = vunpack.c.0.s8 %v1753
    %v1755 = vlaneseq
    %v1756 = vshrl.u32 %v1755, 7
    %v1757 = vsub.s32 %v1754, %v1756
    %v1758 = vrot.slane %v484, %v1757
    %v1760 = vunpack.c.l.s4 842150450
    %v1761 = vunpack.c.0.s8 %v1760
    %v1762 = vlaneseq
    %v1763 = vshrl.u32 %v1762, 7
    %v1764 = vsub.s32 %v1761, %v1763
    %v1765 = vrot.slane %v484, %v1764
    %v1767 = vunpack.c.l.s4 1414812756
    %v1768 = vunpack.c.0.s8 %v1767
    %v1769 = vlaneseq
    %v1770 = vshrl.u32 %v1769, 7
    %v1771 = vsub.s32 %v1768, %v1770
    %v1772 = vrot.slane %v484, %v1771
    %v1774 = vunpack.c.l.s4 1987475062
    %v1775 = vunpack.c.0.s8 %v1774
    %v1776 = vlaneseq
    %v1777 = vshrl.u32 %v1776, 7
    %v1778 = vsub.s32 %v1775, %v1777
    %v1779 = vrot.slane %v484, %v1778
    %v1781 = vunpack.c.l.s4 269488144
    %v1782 = vunpack.c.0.s8 %v1781
    %v1783 = vlaneseq
    %v1784 = vshrl.u32 %v1783, 7
    %v1785 = vsub.s32 %v1782, %v1784
    %v1786 = vrot.slane %v486, %v1785
    %v1788 = vunpack.c.l.s4 842150450
    %v1789 = vunpack.c.0.s8 %v1788
    %v1790 = vlaneseq
    %v1791 = vshrl.u32 %v1790, 7
    %v1792 = vsub.s32 %v1789, %v1791
    %v1793 = vrot.slane %v486, %v1792
    %v1795 = vunpack.c.l.s4 1414812756
    %v1796 = vunpack.c.0.s8 %v1795
    %v1797 = vlaneseq
    %v1798 = vshrl.u32 %v1797, 7
    %v1799 = vsub.s32 %v1796, %v1798
    %v1800 = vrot.slane %v486, %v1799
    %v1802 = vunpack.c.l.s4 1987475062
    %v1803 = vunpack.c.0.s8 %v1802
    %v1804 = vlaneseq
    %v1805 = vshrl.u32 %v1804, 7
    %v1806 = vsub.s32 %v1803, %v1805
    %v1807 = vrot.slane %v486, %v1806
    %v1809 = vunpack.c.l.s4 269488144
    %v1810 = vunpack.c.0.s8 %v1809
    %v1811 = vlaneseq
    %v1812 = vshrl.u32 %v1811, 7
    %v1813 = vsub.s32 %v1810, %v1812
    %v1814 = vrot.slane %v488, %v1813
    %v1816 = vunpack.c.l.s4 842150450
    %v1817 = vunpack.c.0.s8 %v1816
    %v1818 = vlaneseq
    %v1819 = vshrl.u32 %v1818, 7
    %v1820 = vsub.s32 %v1817, %v1819
    %v1821 = vrot.slane %v488, %v1820
    %v1823 = vunpack.c.l.s4 1414812756
    %v1824 = vunpack.c.0.s8 %v1823
    %v1825 = vlaneseq
    %v1826 = vshrl.u32 %v1825, 7
    %v1827 = vsub.s32 %v1824, %v1826
    %v1828 = vrot.slane %v488, %v1827
    %v1830 = vunpack.c.l.s4 1987475062
    %v1831 = vunpack.c.0.s8 %v1830
    %v1832 = vlaneseq
    %v1833 = vshrl.u32 %v1832, 7
    %v1834 = vsub.s32 %v1831, %v1833
    %v1835 = vrot.slane %v488, %v1834
    %v1837 = vunpack.c.l.s4 269488144
    %v1838 = vunpack.c.0.s8 %v1837
    %v1839 = vlaneseq
    %v1840 = vshrl.u32 %v1839, 7
    %v1841 = vsub.s32 %v1838, %v1840
    %v1842 = vrot.slane %v490, %v1841
    %v1844 = vunpack.c.l.s4 842150450
    %v1845 = vunpack.c.0.s8 %v1844
    %v1846 = vlaneseq
    %v1847 = vshrl.u32 %v1846, 7
    %v1848 = vsub.s32 %v1845, %v1847
    %v1849 = vrot.slane %v490, %v1848
    %v1851 = vunpack.c.l.s4 1414812756
    %v1852 = vunpack.c.0.s8 %v1851
    %v1853 = vlaneseq
    %v1854 = vshrl.u32 %v1853, 7
    %v1855 = vsub.s32 %v1852, %v1854
    %v1856 = vrot.slane %v490, %v1855
    %v1858 = vunpack.c.l.s4 1987475062
    %v1859 = vunpack.c.0.s8 %v1858
    %v1860 = vlaneseq
    %v1861 = vshrl.u32 %v1860, 7
    %v1862 = vsub.s32 %v1859, %v1861
    %v1863 = vrot.slane %v490, %v1862
    %v1865 = vunpack.c.l.s4 269488144
    %v1866 = vunpack.c.0.s8 %v1865
    %v1867 = vlaneseq
    %v1868 = vshrl.u32 %v1867, 7
    %v1869 = vsub.s32 %v1866, %v1868
    %v1870 = vrot.slane %v492, %v1869
    %v1872 = vunpack.c.l.s4 842150450
    %v1873 = vunpack.c.0.s8 %v1872
    %v1874 = vlaneseq
    %v1875 = vshrl.u32 %v1874, 7
    %v1876 = vsub.s32 %v1873, %v1875
    %v1877 = vrot.slane %v492, %v1876
    %v1879 = vunpack.c.l.s4 1414812756
    %v1880 = vunpack.c.0.s8 %v1879
    %v1881 = vlaneseq
    %v1882 = vshrl.u32 %v1881, 7
    %v1883 = vsub.s32 %v1880, %v1882
    %v1884 = vrot.slane %v492, %v1883
    %v1886 = vunpack.c.l.s4 1987475062
    %v1887 = vunpack.c.0.s8 %v1886
    %v1888 = vlaneseq
    %v1889 = vshrl.u32 %v1888, 7
    %v1890 = vsub.s32 %v1887, %v1889
    %v1891 = vrot.slane %v492, %v1890
    %v1893 = vunpack.c.l.s4 269488144
    %v1894 = vunpack.c.0.s8 %v1893
    %v1895 = vlaneseq
    %v1896 = vshrl.u32 %v1895, 7
    %v1897 = vsub.s32 %v1894, %v1896
    %v1898 = vrot.slane %v494, %v1897
    %v1900 = vunpack.c.l.s4 842150450
    %v1901 = vunpack.c.0.s8 %v1900
    %v1902 = vlaneseq
    %v1903 = vshrl.u32 %v1902, 7
    %v1904 = vsub.s32 %v1901, %v1903
    %v1905 = vrot.slane %v494, %v1904
    %v1907 = vunpack.c.l.s4 1414812756
    %v1908 = vunpack.c.0.s8 %v1907
    %v1909 = vlaneseq
    %v1910 = vshrl.u32 %v1909, 7
    %v1911 = vsub.s32 %v1908, %v1910
    %v1912 = vrot.slane %v494, %v1911
    %v1914 = vunpack.c.l.s4 1987475062
    %v1915 = vunpack.c.0.s8 %v1914
    %v1916 = vlaneseq
    %v1917 = vshrl.u32 %v1916, 7
    %v1918 = vsub.s32 %v1915, %v1917
    %v1919 = vrot.slane %v494, %v1918
    %v1921 = vunpack.c.l.s4 269488144
    %v1922 = vunpack.c.0.s8 %v1921
    %v1923 = vlaneseq
    %v1924 = vshrl.u32 %v1923, 7
    %v1925 = vsub.s32 %v1922, %v1924
    %v1926 = vrot.slane %v496, %v1925
    %v1928 = vunpack.c.l.s4 842150450
    %v1929 = vunpack.c.0.s8 %v1928
    %v1930 = vlaneseq
    %v1931 = vshrl.u32 %v1930, 7
    %v1932 = vsub.s32 %v1929, %v1931
    %v1933 = vrot.slane %v496, %v1932
    %v1935 = vunpack.c.l.s4 1414812756
    %v1936 = vunpack.c.0.s8 %v1935
    %v1937 = vlaneseq
    %v1938 = vshrl.u32 %v1937, 7
    %v1939 = vsub.s32 %v1936, %v1938
    %v1940 = vrot.slane %v496, %v1939
    %v1942 = vunpack.c.l.s4 1987475062
    %v1943 = vunpack.c.0.s8 %v1942
    %v1944 = vlaneseq
    %v1945 = vshrl.u32 %v1944, 7
    %v1946 = vsub.s32 %v1943, %v1945
    %v1947 = vrot.slane %v496, %v1946
    %v1949 = vunpack.c.l.s4 269488144
    %v1950 = vunpack.c.0.s8 %v1949
    %v1951 = vlaneseq
    %v1952 = vshrl.u32 %v1951, 7
    %v1953 = vsub.s32 %v1950, %v1952
    %v1954 = vrot.slane %v498, %v1953
    %v1956 = vunpack.c.l.s4 842150450
    %v1957 = vunpack.c.0.s8 %v1956
    %v1958 = vlaneseq
    %v1959 = vshrl.u32 %v1958, 7
    %v1960 = vsub.s32 %v1957, %v1959
    %v1961 = vrot.slane %v498, %v1960
    %v1963 = vunpack.c.l.s4 1414812756
    %v1964 = vunpack.c.0.s8 %v1963
    %v1965 = vlaneseq
    %v1966 = vshrl.u32 %v1965, 7
    %v1967 = vsub.s32 %v1964, %v1966
    %v1968 = vrot.slane %v498, %v1967
    %v1970 = vunpack.c.l.s4 1987475062
    %v1971 = vunpack.c.0.s8 %v1970
    %v1972 = vlaneseq
    %v1973 = vshrl.u32 %v1972, 7
    %v1974 = vsub.s32 %v1971, %v1973
    %v1975 = vrot.slane %v498, %v1974
    %v1977 = vunpack.c.l.s4 269488144
    %v1978 = vunpack.c.0.s8 %v1977
    %v1979 = vlaneseq
    %v1980 = vshrl.u32 %v1979, 7
    %v1981 = vsub.s32 %v1978, %v1980
    %v1982 = vrot.slane %v500, %v1981
    %v1984 = vunpack.c.l.s4 842150450
    %v1985 = vunpack.c.0.s8 %v1984
    %v1986 = vlaneseq
    %v1987 = vshrl.u32 %v1986, 7
    %v1988 = vsub.s32 %v1985, %v1987
    %v1989 = vrot.slane %v500, %v1988
    %v1991 = vunpack.c.l.s4 1414812756
    %v1992 = vunpack.c.0.s8 %v1991
    %v1993 = vlaneseq
    %v1994 = vshrl.u32 %v1993, 7
    %v1995 = vsub.s32 %v1992, %v1994
    %v1996 = vrot.slane %v500, %v1995
    %v1998 = vunpack.c.l.s4 1987475062
    %v1999 = vunpack.c.0.s8 %v1998
    %v2000 = vlaneseq
    %v2001 = vshrl.u32 %v2000, 7
    %v2002 = vsub.s32 %v1999, %v2001
    %v2003 = vrot.slane %v500, %v2002
    %v2005 = vunpack.c.l.s4 269488144
    %v2006 = vunpack.c.0.s8 %v2005
    %v2007 = vlaneseq
    %v2008 = vshrl.u32 %v2007, 7
    %v2009 = vsub.s32 %v2006, %v2008
    %v2010 = vrot.slane %v502, %v2009
    %v2012 = vunpack.c.l.s4 842150450
    %v2013 = vunpack.c.0.s8 %v2012
    %v2014 = vlaneseq
    %v2015 = vshrl.u32 %v2014, 7
    %v2016 = vsub.s32 %v2013, %v2015
    %v2017 = vrot.slane %v502, %v2016
    %v2019 = vunpack.c.l.s4 1414812756
    %v2020 = vunpack.c.0.s8 %v2019
    %v2021 = vlaneseq
    %v2022 = vshrl.u32 %v2021, 7
    %v2023 = vsub.s32 %v2020, %v2022
    %v2024 = vrot.slane %v502, %v2023
    %v2026 = vunpack.c.l.s4 1987475062
    %v2027 = vunpack.c.0.s8 %v2026
    %v2028 = vlaneseq
    %v2029 = vshrl.u32 %v2028, 7
    %v2030 = vsub.s32 %v2027, %v2029
    %v2031 = vrot.slane %v502, %v2030
    %v2033 = vunpack.c.l.s4 269488144
    %v2034 = vunpack.c.0.s8 %v2033
    %v2035 = vlaneseq
    %v2036 = vshrl.u32 %v2035, 7
    %v2037 = vsub.s32 %v2034, %v2036
    %v2038 = vrot.slane %v504, %v2037
    %v2040 = vunpack.c.l.s4 842150450
    %v2041 = vunpack.c.0.s8 %v2040
    %v2042 = vlaneseq
    %v2043 = vshrl.u32 %v2042, 7
    %v2044 = vsub.s32 %v2041, %v2043
    %v2045 = vrot.slane %v504, %v2044
    %v2047 = vunpack.c.l.s4 1414812756
    %v2048 = vunpack.c.0.s8 %v2047
    %v2049 = vlaneseq
    %v2050 = vshrl.u32 %v2049, 7
    %v2051 = vsub.s32 %v2048, %v2050
    %v2052 = vrot.slane %v504, %v2051
    %v2054 = vunpack.c.l.s4 1987475062
    %v2055 = vunpack.c.0.s8 %v2054
    %v2056 = vlaneseq
    %v2057 = vshrl.u32 %v2056, 7
    %v2058 = vsub.s32 %v2055, %v2057
    %v2059 = vrot.slane %v504, %v2058
    %v2061 = vunpack.c.l.s4 269488144
    %v2062 = vunpack.c.0.s8 %v2061
    %v2063 = vlaneseq
    %v2064 = vshrl.u32 %v2063, 7
    %v2065 = vsub.s32 %v2062, %v2064
    %v2066 = vrot.slane %v506, %v2065
    %v2068 = vunpack.c.l.s4 842150450
    %v2069 = vunpack.c.0.s8 %v2068
    %v2070 = vlaneseq
    %v2071 = vshrl.u32 %v2070, 7
    %v2072 = vsub.s32 %v2069, %v2071
    %v2073 = vrot.slane %v506, %v2072
    %v2075 = vunpack.c.l.s4 1414812756
    %v2076 = vunpack.c.0.s8 %v2075
    %v2077 = vlaneseq
    %v2078 = vshrl.u32 %v2077, 7
    %v2079 = vsub.s32 %v2076, %v2078
    %v2080 = vrot.slane %v506, %v2079
    %v2082 = vunpack.c.l.s4 1987475062
    %v2083 = vunpack.c.0.s8 %v2082
    %v2084 = vlaneseq
    %v2085 = vshrl.u32 %v2084, 7
    %v2086 = vsub.s32 %v2083, %v2085
    %v2087 = vrot.slane %v506, %v2086
    %v2089 = vunpack.c.l.s4 269488144
    %v2090 = vunpack.c.0.s8 %v2089
    %v2091 = vlaneseq
    %v2092 = vshrl.u32 %v2091, 7
    %v2093 = vsub.s32 %v2090, %v2092
    %v2094 = vrot.slane %v508, %v2093
    %v2096 = vunpack.c.l.s4 842150450
    %v2097 = vunpack.c.0.s8 %v2096
    %v2098 = vlaneseq
    %v2099 = vshrl.u32 %v2098, 7
    %v2100 = vsub.s32 %v2097, %v2099
    %v2101 = vrot.slane %v508, %v2100
    %v2103 = vunpack.c.l.s4 1414812756
    %v2104 = vunpack.c.0.s8 %v2103
    %v2105 = vlaneseq
    %v2106 = vshrl.u32 %v2105, 7
    %v2107 = vsub.s32 %v2104, %v2106
    %v2108 = vrot.slane %v508, %v2107
    %v2110 = vunpack.c.l.s4 1987475062
    %v2111 = vunpack.c.0.s8 %v2110
    %v2112 = vlaneseq
    %v2113 = vshrl.u32 %v2112, 7
    %v2114 = vsub.s32 %v2111, %v2113
    %v2115 = vrot.slane %v508, %v2114
    %v2117 = vunpack.c.l.s4 269488144
    %v2118 = vunpack.c.0.s8 %v2117
    %v2119 = vlaneseq
    %v2120 = vshrl.u32 %v2119, 7
    %v2121 = vsub.s32 %v2118, %v2120
    %v2122 = vrot.slane %v510, %v2121
    %v2124 = vunpack.c.l.s4 842150450
    %v2125 = vunpack.c.0.s8 %v2124
    %v2126 = vlaneseq
    %v2127 = vshrl.u32 %v2126, 7
    %v2128 = vsub.s32 %v2125, %v2127
    %v2129 = vrot.slane %v510, %v2128
    %v2131 = vunpack.c.l.s4 1414812756
    %v2132 = vunpack.c.0.s8 %v2131
    %v2133 = vlaneseq
    %v2134 = vshrl.u32 %v2133, 7
    %v2135 = vsub.s32 %v2132, %v2134
    %v2136 = vrot.slane %v510, %v2135
    %v2138 = vunpack.c.l.s4 1987475062
    %v2139 = vunpack.c.0.s8 %v2138
    %v2140 = vlaneseq
    %v2141 = vshrl.u32 %v2140, 7
    %v2142 = vsub.s32 %v2139, %v2141
    %v2143 = vrot.slane %v510, %v2142
    %v2145 = vunpack.c.l.s4 269488144
    %v2146 = vunpack.c.0.s8 %v2145
    %v2147 = vlaneseq
    %v2148 = vshrl.u32 %v2147, 7
    %v2149 = vsub.s32 %v2146, %v2148
    %v2150 = vrot.slane %v512, %v2149
    %v2152 = vunpack.c.l.s4 842150450
    %v2153 = vunpack.c.0.s8 %v2152
    %v2154 = vlaneseq
    %v2155 = vshrl.u32 %v2154, 7
    %v2156 = vsub.s32 %v2153, %v2155
    %v2157 = vrot.slane %v512, %v2156
    %v2159 = vunpack.c.l.s4 1414812756
    %v2160 = vunpack.c.0.s8 %v2159
    %v2161 = vlaneseq
    %v2162 = vshrl.u32 %v2161, 7
    %v2163 = vsub.s32 %v2160, %v2162
    %v2164 = vrot.slane %v512, %v2163
    %v2166 = vunpack.c.l.s4 1987475062
    %v2167 = vunpack.c.0.s8 %v2166
    %v2168 = vlaneseq
    %v2169 = vshrl.u32 %v2168, 7
    %v2170 = vsub.s32 %v2167, %v2169
    %v2171 = vrot.slane %v512, %v2170
    %v2173 = vunpack.c.l.s4 269488144
    %v2174 = vunpack.c.0.s8 %v2173
    %v2175 = vlaneseq
    %v2176 = vshrl.u32 %v2175, 7
    %v2177 = vsub.s32 %v2174, %v2176
    %v2178 = vrot.slane %v514, %v2177
    %v2180 = vunpack.c.l.s4 842150450
    %v2181 = vunpack.c.0.s8 %v2180
    %v2182 = vlaneseq
    %v2183 = vshrl.u32 %v2182, 7
    %v2184 = vsub.s32 %v2181, %v2183
    %v2185 = vrot.slane %v514, %v2184
    %v2187 = vunpack.c.l.s4 1414812756
    %v2188 = vunpack.c.0.s8 %v2187
    %v2189 = vlaneseq
    %v2190 = vshrl.u32 %v2189, 7
    %v2191 = vsub.s32 %v2188, %v2190
    %v2192 = vrot.slane %v514, %v2191
    %v2194 = vunpack.c.l.s4 1987475062
    %v2195 = vunpack.c.0.s8 %v2194
    %v2196 = vlaneseq
    %v2197 = vshrl.u32 %v2196, 7
    %v2198 = vsub.s32 %v2195, %v2197
    %v2199 = vrot.slane %v514, %v2198
    %v2201 = vunpack.c.l.s4 269488144
    %v2202 = vunpack.c.0.s8 %v2201
    %v2203 = vlaneseq
    %v2204 = vshrl.u32 %v2203, 7
    %v2205 = vsub.s32 %v2202, %v2204
    %v2206 = vrot.slane %v516, %v2205
    %v2208 = vunpack.c.l.s4 842150450
    %v2209 = vunpack.c.0.s8 %v2208
    %v2210 = vlaneseq
    %v2211 = vshrl.u32 %v2210, 7
    %v2212 = vsub.s32 %v2209, %v2211
    %v2213 = vrot.slane %v516, %v2212
    %v2215 = vunpack.c.l.s4 1414812756
    %v2216 = vunpack.c.0.s8 %v2215
    %v2217 = vlaneseq
    %v2218 = vshrl.u32 %v2217, 7
    %v2219 = vsub.s32 %v2216, %v2218
    %v2220 = vrot.slane %v516, %v2219
    %v2222 = vunpack.c.l.s4 1987475062
    %v2223 = vunpack.c.0.s8 %v2222
    %v2224 = vlaneseq
    %v2225 = vshrl.u32 %v2224, 7
    %v2226 = vsub.s32 %v2223, %v2225
    %v2227 = vrot.slane %v516, %v2226
    %v2229 = vunpack.c.l.s4 269488144
    %v2230 = vunpack.c.0.s8 %v2229
    %v2231 = vlaneseq
    %v2232 = vshrl.u32 %v2231, 7
    %v2233 = vsub.s32 %v2230, %v2232
    %v2234 = vrot.slane %v518, %v2233
    %v2236 = vunpack.c.l.s4 842150450
    %v2237 = vunpack.c.0.s8 %v2236
    %v2238 = vlaneseq
    %v2239 = vshrl.u32 %v2238, 7
    %v2240 = vsub.s32 %v2237, %v2239
    %v2241 = vrot.slane %v518, %v2240
    %v2243 = vunpack.c.l.s4 1414812756
    %v2244 = vunpack.c.0.s8 %v2243
    %v2245 = vlaneseq
    %v2246 = vshrl.u32 %v2245, 7
    %v2247 = vsub.s32 %v2244, %v2246
    %v2248 = vrot.slane %v518, %v2247
    %v2250 = vunpack.c.l.s4 1987475062
    %v2251 = vunpack.c.0.s8 %v2250
    %v2252 = vlaneseq
    %v2253 = vshrl.u32 %v2252, 7
    %v2254 = vsub.s32 %v2251, %v2253
    %v2255 = vrot.slane %v518, %v2254
    %v2257 = vunpack.c.l.s4 269488144
    %v2258 = vunpack.c.0.s8 %v2257
    %v2259 = vlaneseq
    %v2260 = vshrl.u32 %v2259, 7
    %v2261 = vsub.s32 %v2258, %v2260
    %v2262 = vrot.slane %v520, %v2261
    %v2264 = vunpack.c.l.s4 842150450
    %v2265 = vunpack.c.0.s8 %v2264
    %v2266 = vlaneseq
    %v2267 = vshrl.u32 %v2266, 7
    %v2268 = vsub.s32 %v2265, %v2267
    %v2269 = vrot.slane %v520, %v2268
    %v2271 = vunpack.c.l.s4 1414812756
    %v2272 = vunpack.c.0.s8 %v2271
    %v2273 = vlaneseq
    %v2274 = vshrl.u32 %v2273, 7
    %v2275 = vsub.s32 %v2272, %v2274
    %v2276 = vrot.slane %v520, %v2275
    %v2278 = vunpack.c.l.s4 1987475062
    %v2279 = vunpack.c.0.s8 %v2278
    %v2280 = vlaneseq
    %v2281 = vshrl.u32 %v2280, 7
    %v2282 = vsub.s32 %v2279, %v2281
    %v2283 = vrot.slane %v520, %v2282
    %v2285 = vunpack.c.l.s4 269488144
    %v2286 = vunpack.c.0.s8 %v2285
    %v2287 = vlaneseq
    %v2288 = vshrl.u32 %v2287, 7
    %v2289 = vsub.s32 %v2286, %v2288
    %v2290 = vrot.slane %v522, %v2289
    %v2292 = vunpack.c.l.s4 842150450
    %v2293 = vunpack.c.0.s8 %v2292
    %v2294 = vlaneseq
    %v2295 = vshrl.u32 %v2294, 7
    %v2296 = vsub.s32 %v2293, %v2295
    %v2297 = vrot.slane %v522, %v2296
    %v2299 = vunpack.c.l.s4 1414812756
    %v2300 = vunpack.c.0.s8 %v2299
    %v2301 = vlaneseq
    %v2302 = vshrl.u32 %v2301, 7
    %v2303 = vsub.s32 %v2300, %v2302
    %v2304 = vrot.slane %v522, %v2303
    %v2306 = vunpack.c.l.s4 1987475062
    %v2307 = vunpack.c.0.s8 %v2306
    %v2308 = vlaneseq
    %v2309 = vshrl.u32 %v2308, 7
    %v2310 = vsub.s32 %v2307, %v2309
    %v2311 = vrot.slane %v522, %v2310
    %v2313 = vunpack.c.l.s4 269488144
    %v2314 = vunpack.c.0.s8 %v2313
    %v2315 = vlaneseq
    %v2316 = vshrl.u32 %v2315, 7
    %v2317 = vsub.s32 %v2314, %v2316
    %v2318 = vrot.slane %v524, %v2317
    %v2320 = vunpack.c.l.s4 842150450
    %v2321 = vunpack.c.0.s8 %v2320
    %v2322 = vlaneseq
    %v2323 = vshrl.u32 %v2322, 7
    %v2324 = vsub.s32 %v2321, %v2323
    %v2325 = vrot.slane %v524, %v2324
    %v2327 = vunpack.c.l.s4 1414812756
    %v2328 = vunpack.c.0.s8 %v2327
    %v2329 = vlaneseq
    %v2330 = vshrl.u32 %v2329, 7
    %v2331 = vsub.s32 %v2328, %v2330
    %v2332 = vrot.slane %v524, %v2331
    %v2334 = vunpack.c.l.s4 1987475062
    %v2335 = vunpack.c.0.s8 %v2334
    %v2336 = vlaneseq
    %v2337 = vshrl.u32 %v2336, 7
    %v2338 = vsub.s32 %v2335, %v2337
    %v2339 = vrot.slane %v524, %v2338
    %v2341 = vunpack.c.l.s4 269488144
    %v2342 = vunpack.c.0.s8 %v2341
    %v2343 = vlaneseq
    %v2344 = vshrl.u32 %v2343, 7
    %v2345 = vsub.s32 %v2342, %v2344
    %v2346 = vrot.slane %v526, %v2345
    %v2348 = vunpack.c.l.s4 842150450
    %v2349 = vunpack.c.0.s8 %v2348
    %v2350 = vlaneseq
    %v2351 = vshrl.u32 %v2350, 7
    %v2352 = vsub.s32 %v2349, %v2351
    %v2353 = vrot.slane %v526, %v2352
    %v2355 = vunpack.c.l.s4 1414812756
    %v2356 = vunpack.c.0.s8 %v2355
    %v2357 = vlaneseq
    %v2358 = vshrl.u32 %v2357, 7
    %v2359 = vsub.s32 %v2356, %v2358
    %v2360 = vrot.slane %v526, %v2359
    %v2362 = vunpack.c.l.s4 1987475062
    %v2363 = vunpack.c.0.s8 %v2362
    %v2364 = vlaneseq
    %v2365 = vshrl.u32 %v2364, 7
    %v2366 = vsub.s32 %v2363, %v2365
    %v2367 = vrot.slane %v526, %v2366
    %v2369 = vunpack.c.l.s4 269488144
    %v2370 = vunpack.c.0.s8 %v2369
    %v2371 = vlaneseq
    %v2372 = vshrl.u32 %v2371, 7
    %v2373 = vsub.s32 %v2370, %v2372
    %v2374 = vrot.slane %v528, %v2373
    %v2376 = vunpack.c.l.s4 842150450
    %v2377 = vunpack.c.0.s8 %v2376
    %v2378 = vlaneseq
    %v2379 = vshrl.u32 %v2378, 7
    %v2380 = vsub.s32 %v2377, %v2379
    %v2381 = vrot.slane %v528, %v2380
    %v2383 = vunpack.c.l.s4 1414812756
    %v2384 = vunpack.c.0.s8 %v2383
    %v2385 = vlaneseq
    %v2386 = vshrl.u32 %v2385, 7
    %v2387 = vsub.s32 %v2384, %v2386
    %v2388 = vrot.slane %v528, %v2387
    %v2390 = vunpack.c.l.s4 1987475062
    %v2391 = vunpack.c.0.s8 %v2390
    %v2392 = vlaneseq
    %v2393 = vshrl.u32 %v2392, 7
    %v2394 = vsub.s32 %v2391, %v2393
    %v2395 = vrot.slane %v528, %v2394
    %v2397 = vunpack.c.l.s4 269488144
    %v2398 = vunpack.c.0.s8 %v2397
    %v2399 = vlaneseq
    %v2400 = vshrl.u32 %v2399, 7
    %v2401 = vsub.s32 %v2398, %v2400
    %v2402 = vrot.slane %v530, %v2401
    %v2404 = vunpack.c.l.s4 842150450
    %v2405 = vunpack.c.0.s8 %v2404
    %v2406 = vlaneseq
    %v2407 = vshrl.u32 %v2406, 7
    %v2408 = vsub.s32 %v2405, %v2407
    %v2409 = vrot.slane %v530, %v2408
    %v2411 = vunpack.c.l.s4 1414812756
    %v2412 = vunpack.c.0.s8 %v2411
    %v2413 = vlaneseq
    %v2414 = vshrl.u32 %v2413, 7
    %v2415 = vsub.s32 %v2412, %v2414
    %v2416 = vrot.slane %v530, %v2415
    %v2418 = vunpack.c.l.s4 1987475062
    %v2419 = vunpack.c.0.s8 %v2418
    %v2420 = vlaneseq
    %v2421 = vshrl.u32 %v2420, 7
    %v2422 = vsub.s32 %v2419, %v2421
    %v2423 = vrot.slane %v530, %v2422
    %v2425 = vunpack.c.l.s4 269488144
    %v2426 = vunpack.c.0.s8 %v2425
    %v2427 = vlaneseq
    %v2428 = vshrl.u32 %v2427, 7
    %v2429 = vsub.s32 %v2426, %v2428
    %v2430 = vrot.slane %v532, %v2429
    %v2432 = vunpack.c.l.s4 842150450
    %v2433 = vunpack.c.0.s8 %v2432
    %v2434 = vlaneseq
    %v2435 = vshrl.u32 %v2434, 7
    %v2436 = vsub.s32 %v2433, %v2435
    %v2437 = vrot.slane %v532, %v2436
    %v2439 = vunpack.c.l.s4 1414812756
    %v2440 = vunpack.c.0.s8 %v2439
    %v2441 = vlaneseq
    %v2442 = vshrl.u32 %v2441, 7
    %v2443 = vsub.s32 %v2440, %v2442
    %v2444 = vrot.slane %v532, %v2443
    %v2446 = vunpack.c.l.s4 1987475062
    %v2447 = vunpack.c.0.s8 %v2446
    %v2448 = vlaneseq
    %v2449 = vshrl.u32 %v2448, 7
    %v2450 = vsub.s32 %v2447, %v2449
    %v2451 = vrot.slane %v532, %v2450
    %v2453 = vunpack.c.l.s4 269488144
    %v2454 = vunpack.c.0.s8 %v2453
    %v2455 = vlaneseq
    %v2456 = vshrl.u32 %v2455, 7
    %v2457 = vsub.s32 %v2454, %v2456
    %v2458 = vrot.slane %v534, %v2457
    %v2460 = vunpack.c.l.s4 842150450
    %v2461 = vunpack.c.0.s8 %v2460
    %v2462 = vlaneseq
    %v2463 = vshrl.u32 %v2462, 7
    %v2464 = vsub.s32 %v2461, %v2463
    %v2465 = vrot.slane %v534, %v2464
    %v2467 = vunpack.c.l.s4 1414812756
    %v2468 = vunpack.c.0.s8 %v2467
    %v2469 = vlaneseq
    %v2470 = vshrl.u32 %v2469, 7
    %v2471 = vsub.s32 %v2468, %v2470
    %v2472 = vrot.slane %v534, %v2471
    %v2474 = vunpack.c.l.s4 1987475062
    %v2475 = vunpack.c.0.s8 %v2474
    %v2476 = vlaneseq
    %v2477 = vshrl.u32 %v2476, 7
    %v2478 = vsub.s32 %v2475, %v2477
    %v2479 = vrot.slane %v534, %v2478
    %v2481 = vunpack.c.l.s4 269488144
    %v2482 = vunpack.c.0.s8 %v2481
    %v2483 = vlaneseq
    %v2484 = vshrl.u32 %v2483, 7
    %v2485 = vsub.s32 %v2482, %v2484
    %v2486 = vrot.slane %v536, %v2485
    %v2488 = vunpack.c.l.s4 842150450
    %v2489 = vunpack.c.0.s8 %v2488
    %v2490 = vlaneseq
    %v2491 = vshrl.u32 %v2490, 7
    %v2492 = vsub.s32 %v2489, %v2491
    %v2493 = vrot.slane %v536, %v2492
    %v2495 = vunpack.c.l.s4 1414812756
    %v2496 = vunpack.c.0.s8 %v2495
    %v2497 = vlaneseq
    %v2498 = vshrl.u32 %v2497, 7
    %v2499 = vsub.s32 %v2496, %v2498
    %v2500 = vrot.slane %v536, %v2499
    %v2502 = vunpack.c.l.s4 1987475062
    %v2503 = vunpack.c.0.s8 %v2502
    %v2504 = vlaneseq
    %v2505 = vshrl.u32 %v2504, 7
    %v2506 = vsub.s32 %v2503, %v2505
    %v2507 = vrot.slane %v536, %v2506
    %v2509 = vunpack.c.l.s4 269488144
    %v2510 = vunpack.c.0.s8 %v2509
    %v2511 = vlaneseq
    %v2512 = vshrl.u32 %v2511, 7
    %v2513 = vsub.s32 %v2510, %v2512
    %v2514 = vrot.slane %v538, %v2513
    %v2516 = vunpack.c.l.s4 842150450
    %v2517 = vunpack.c.0.s8 %v2516
    %v2518 = vlaneseq
    %v2519 = vshrl.u32 %v2518, 7
    %v2520 = vsub.s32 %v2517, %v2519
    %v2521 = vrot.slane %v538, %v2520
    %v2523 = vunpack.c.l.s4 1414812756
    %v2524 = vunpack.c.0.s8 %v2523
    %v2525 = vlaneseq
    %v2526 = vshrl.u32 %v2525, 7
    %v2527 = vsub.s32 %v2524, %v2526
    %v2528 = vrot.slane %v538, %v2527
    %v2530 = vunpack.c.l.s4 1987475062
    %v2531 = vunpack.c.0.s8 %v2530
    %v2532 = vlaneseq
    %v2533 = vshrl.u32 %v2532, 7
    %v2534 = vsub.s32 %v2531, %v2533
    %v2535 = vrot.slane %v538, %v2534
    %v2537 = vunpack.c.l.s4 269488144
    %v2538 = vunpack.c.0.s8 %v2537
    %v2539 = vlaneseq
    %v2540 = vshrl.u32 %v2539, 7
    %v2541 = vsub.s32 %v2538, %v2540
    %v2542 = vrot.slane %v540, %v2541
    %v2544 = vunpack.c.l.s4 842150450
    %v2545 = vunpack.c.0.s8 %v2544
    %v2546 = vlaneseq
    %v2547 = vshrl.u32 %v2546, 7
    %v2548 = vsub.s32 %v2545, %v2547
    %v2549 = vrot.slane %v540, %v2548
    %v2551 = vunpack.c.l.s4 1414812756
    %v2552 = vunpack.c.0.s8 %v2551
    %v2553 = vlaneseq
    %v2554 = vshrl.u32 %v2553, 7
    %v2555 = vsub.s32 %v2552, %v2554
    %v2556 = vrot.slane %v540, %v2555
    %v2558 = vunpack.c.l.s4 1987475062
    %v2559 = vunpack.c.0.s8 %v2558
    %v2560 = vlaneseq
    %v2561 = vshrl.u32 %v2560, 7
    %v2562 = vsub.s32 %v2559, %v2561
    %v2563 = vrot.slane %v540, %v2562
    %v2565 = vunpack.c.l.s4 269488144
    %v2566 = vunpack.c.0.s8 %v2565
    %v2567 = vlaneseq
    %v2568 = vshrl.u32 %v2567, 7
    %v2569 = vsub.s32 %v2566, %v2568
    %v2570 = vrot.slane %v542, %v2569
    %v2572 = vunpack.c.l.s4 842150450
    %v2573 = vunpack.c.0.s8 %v2572
    %v2574 = vlaneseq
    %v2575 = vshrl.u32 %v2574, 7
    %v2576 = vsub.s32 %v2573, %v2575
    %v2577 = vrot.slane %v542, %v2576
    %v2579 = vunpack.c.l.s4 1414812756
    %v2580 = vunpack.c.0.s8 %v2579
    %v2581 = vlaneseq
    %v2582 = vshrl.u32 %v2581, 7
    %v2583 = vsub.s32 %v2580, %v2582
    %v2584 = vrot.slane %v542, %v2583
    %v2586 = vunpack.c.l.s4 1987475062
    %v2587 = vunpack.c.0.s8 %v2586
    %v2588 = vlaneseq
    %v2589 = vshrl.u32 %v2588, 7
    %v2590 = vsub.s32 %v2587, %v2589
    %v2591 = vrot.slane %v542, %v2590
    %v2593 = vunpack.c.l.s4 269488144
    %v2594 = vunpack.c.0.s8 %v2593
    %v2595 = vlaneseq
    %v2596 = vshrl.u32 %v2595, 7
    %v2597 = vsub.s32 %v2594, %v2596
    %v2598 = vrot.slane %v544, %v2597
    %v2600 = vunpack.c.l.s4 842150450
    %v2601 = vunpack.c.0.s8 %v2600
    %v2602 = vlaneseq
    %v2603 = vshrl.u32 %v2602, 7
    %v2604 = vsub.s32 %v2601, %v2603
    %v2605 = vrot.slane %v544, %v2604
    %v2607 = vunpack.c.l.s4 1414812756
    %v2608 = vunpack.c.0.s8 %v2607
    %v2609 = vlaneseq
    %v2610 = vshrl.u32 %v2609, 7
    %v2611 = vsub.s32 %v2608, %v2610
    %v2612 = vrot.slane %v544, %v2611
    %v2614 = vunpack.c.l.s4 1987475062
    %v2615 = vunpack.c.0.s8 %v2614
    %v2616 = vlaneseq
    %v2617 = vshrl.u32 %v2616, 7
    %v2618 = vsub.s32 %v2615, %v2617
    %v2619 = vrot.slane %v544, %v2618
    %v2621 = vunpack.c.l.s4 269488144
    %v2622 = vunpack.c.0.s8 %v2621
    %v2623 = vlaneseq
    %v2624 = vshrl.u32 %v2623, 7
    %v2625 = vsub.s32 %v2622, %v2624
    %v2626 = vrot.slane %v546, %v2625
    %v2628 = vunpack.c.l.s4 842150450
    %v2629 = vunpack.c.0.s8 %v2628
    %v2630 = vlaneseq
    %v2631 = vshrl.u32 %v2630, 7
    %v2632 = vsub.s32 %v2629, %v2631
    %v2633 = vrot.slane %v546, %v2632
    %v2635 = vunpack.c.l.s4 1414812756
    %v2636 = vunpack.c.0.s8 %v2635
    %v2637 = vlaneseq
    %v2638 = vshrl.u32 %v2637, 7
    %v2639 = vsub.s32 %v2636, %v2638
    %v2640 = vrot.slane %v546, %v2639
    %v2642 = vunpack.c.l.s4 1987475062
    %v2643 = vunpack.c.0.s8 %v2642
    %v2644 = vlaneseq
    %v2645 = vshrl.u32 %v2644, 7
    %v2646 = vsub.s32 %v2643, %v2645
    %v2647 = vrot.slane %v546, %v2646
    %v2649 = vunpack.c.l.s4 269488144
    %v2650 = vunpack.c.0.s8 %v2649
    %v2651 = vlaneseq
    %v2652 = vshrl.u32 %v2651, 7
    %v2653 = vsub.s32 %v2650, %v2652
    %v2654 = vrot.slane %v548, %v2653
    %v2656 = vunpack.c.l.s4 842150450
    %v2657 = vunpack.c.0.s8 %v2656
    %v2658 = vlaneseq
    %v2659 = vshrl.u32 %v2658, 7
    %v2660 = vsub.s32 %v2657, %v2659
    %v2661 = vrot.slane %v548, %v2660
    %v2663 = vunpack.c.l.s4 1414812756
    %v2664 = vunpack.c.0.s8 %v2663
    %v2665 = vlaneseq
    %v2666 = vshrl.u32 %v2665, 7
    %v2667 = vsub.s32 %v2664, %v2666
    %v2668 = vrot.slane %v548, %v2667
    %v2670 = vunpack.c.l.s4 1987475062
    %v2671 = vunpack.c.0.s8 %v2670
    %v2672 = vlaneseq
    %v2673 = vshrl.u32 %v2672, 7
    %v2674 = vsub.s32 %v2671, %v2673
    %v2675 = vrot.slane %v548, %v2674
    %v2677 = vunpack.c.l.s4 269488144
    %v2678 = vunpack.c.0.s8 %v2677
    %v2679 = vlaneseq
    %v2680 = vshrl.u32 %v2679, 7
    %v2681 = vsub.s32 %v2678, %v2680
    %v2682 = vrot.slane %v550, %v2681
    %v2684 = vunpack.c.l.s4 842150450
    %v2685 = vunpack.c.0.s8 %v2684
    %v2686 = vlaneseq
    %v2687 = vshrl.u32 %v2686, 7
    %v2688 = vsub.s32 %v2685, %v2687
    %v2689 = vrot.slane %v550, %v2688
    %v2691 = vunpack.c.l.s4 1414812756
    %v2692 = vunpack.c.0.s8 %v2691
    %v2693 = vlaneseq
    %v2694 = vshrl.u32 %v2693, 7
    %v2695 = vsub.s32 %v2692, %v2694
    %v2696 = vrot.slane %v550, %v2695
    %v2698 = vunpack.c.l.s4 1987475062
    %v2699 = vunpack.c.0.s8 %v2698
    %v2700 = vlaneseq
    %v2701 = vshrl.u32 %v2700, 7
    %v2702 = vsub.s32 %v2699, %v2701
    %v2703 = vrot.slane %v550, %v2702
    %v2705 = vunpack.c.l.s4 269488144
    %v2706 = vunpack.c.0.s8 %v2705
    %v2707 = vlaneseq
    %v2708 = vshrl.u32 %v2707, 7
    %v2709 = vsub.s32 %v2706, %v2708
    %v2710 = vrot.slane %v552, %v2709
    %v2712 = vunpack.c.l.s4 842150450
    %v2713 = vunpack.c.0.s8 %v2712
    %v2714 = vlaneseq
    %v2715 = vshrl.u32 %v2714, 7
    %v2716 = vsub.s32 %v2713, %v2715
    %v2717 = vrot.slane %v552, %v2716
    %v2719 = vunpack.c.l.s4 1414812756
    %v2720 = vunpack.c.0.s8 %v2719
    %v2721 = vlaneseq
    %v2722 = vshrl.u32 %v2721, 7
    %v2723 = vsub.s32 %v2720, %v2722
    %v2724 = vrot.slane %v552, %v2723
    %v2726 = vunpack.c.l.s4 1987475062
    %v2727 = vunpack.c.0.s8 %v2726
    %v2728 = vlaneseq
    %v2729 = vshrl.u32 %v2728, 7
    %v2730 = vsub.s32 %v2727, %v2729
    %v2731 = vrot.slane %v552, %v2730
    %v2733 = vunpack.c.l.s4 269488144
    %v2734 = vunpack.c.0.s8 %v2733
    %v2735 = vlaneseq
    %v2736 = vshrl.u32 %v2735, 7
    %v2737 = vsub.s32 %v2734, %v2736
    %v2738 = vrot.slane %v554, %v2737
    %v2740 = vunpack.c.l.s4 842150450
    %v2741 = vunpack.c.0.s8 %v2740
    %v2742 = vlaneseq
    %v2743 = vshrl.u32 %v2742, 7
    %v2744 = vsub.s32 %v2741, %v2743
    %v2745 = vrot.slane %v554, %v2744
    %v2747 = vunpack.c.l.s4 1414812756
    %v2748 = vunpack.c.0.s8 %v2747
    %v2749 = vlaneseq
    %v2750 = vshrl.u32 %v2749, 7
    %v2751 = vsub.s32 %v2748, %v2750
    %v2752 = vrot.slane %v554, %v2751
    %v2754 = vunpack.c.l.s4 1987475062
    %v2755 = vunpack.c.0.s8 %v2754
    %v2756 = vlaneseq
    %v2757 = vshrl.u32 %v2756, 7
    %v2758 = vsub.s32 %v2755, %v2757
    %v2759 = vrot.slane %v554, %v2758
    %v2761 = vunpack.c.l.s4 269488144
    %v2762 = vunpack.c.0.s8 %v2761
    %v2763 = vlaneseq
    %v2764 = vshrl.u32 %v2763, 7
    %v2765 = vsub.s32 %v2762, %v2764
    %v2766 = vrot.slane %v556, %v2765
    %v2768 = vunpack.c.l.s4 842150450
    %v2769 = vunpack.c.0.s8 %v2768
    %v2770 = vlaneseq
    %v2771 = vshrl.u32 %v2770, 7
    %v2772 = vsub.s32 %v2769, %v2771
    %v2773 = vrot.slane %v556, %v2772
    %v2775 = vunpack.c.l.s4 1414812756
    %v2776 = vunpack.c.0.s8 %v2775
    %v2777 = vlaneseq
    %v2778 = vshrl.u32 %v2777, 7
    %v2779 = vsub.s32 %v2776, %v2778
    %v2780 = vrot.slane %v556, %v2779
    %v2782 = vunpack.c.l.s4 1987475062
    %v2783 = vunpack.c.0.s8 %v2782
    %v2784 = vlaneseq
    %v2785 = vshrl.u32 %v2784, 7
    %v2786 = vsub.s32 %v2783, %v2785
    %v2787 = vrot.slane %v556, %v2786
    %v2789 = vunpack.c.l.s4 269488144
    %v2790 = vunpack.c.0.s8 %v2789
    %v2791 = vlaneseq
    %v2792 = vshrl.u32 %v2791, 7
    %v2793 = vsub.s32 %v2790, %v2792
    %v2794 = vrot.slane %v558, %v2793
    %v2796 = vunpack.c.l.s4 842150450
    %v2797 = vunpack.c.0.s8 %v2796
    %v2798 = vlaneseq
    %v2799 = vshrl.u32 %v2798, 7
    %v2800 = vsub.s32 %v2797, %v2799
    %v2801 = vrot.slane %v558, %v2800
    %v2803 = vunpack.c.l.s4 1414812756
    %v2804 = vunpack.c.0.s8 %v2803
    %v2805 = vlaneseq
    %v2806 = vshrl.u32 %v2805, 7
    %v2807 = vsub.s32 %v2804, %v2806
    %v2808 = vrot.slane %v558, %v2807
    %v2810 = vunpack.c.l.s4 1987475062
    %v2811 = vunpack.c.0.s8 %v2810
    %v2812 = vlaneseq
    %v2813 = vshrl.u32 %v2812, 7
    %v2814 = vsub.s32 %v2811, %v2813
    %v2815 = vrot.slane %v558, %v2814
    %v2817 = vunpack.c.l.s4 269488144
    %v2818 = vunpack.c.0.s8 %v2817
    %v2819 = vlaneseq
    %v2820 = vshrl.u32 %v2819, 7
    %v2821 = vsub.s32 %v2818, %v2820
    %v2822 = vrot.slane %v560, %v2821
    %v2824 = vunpack.c.l.s4 842150450
    %v2825 = vunpack.c.0.s8 %v2824
    %v2826 = vlaneseq
    %v2827 = vshrl.u32 %v2826, 7
    %v2828 = vsub.s32 %v2825, %v2827
    %v2829 = vrot.slane %v560, %v2828
    %v2831 = vunpack.c.l.s4 1414812756
    %v2832 = vunpack.c.0.s8 %v2831
    %v2833 = vlaneseq
    %v2834 = vshrl.u32 %v2833, 7
    %v2835 = vsub.s32 %v2832, %v2834
    %v2836 = vrot.slane %v560, %v2835
    %v2838 = vunpack.c.l.s4 1987475062
    %v2839 = vunpack.c.0.s8 %v2838
    %v2840 = vlaneseq
    %v2841 = vshrl.u32 %v2840, 7
    %v2842 = vsub.s32 %v2839, %v2841
    %v2843 = vrot.slane %v560, %v2842
    %v2845 = vunpack.c.l.s4 269488144
    %v2846 = vunpack.c.0.s8 %v2845
    %v2847 = vlaneseq
    %v2848 = vshrl.u32 %v2847, 7
    %v2849 = vsub.s32 %v2846, %v2848
    %v2850 = vrot.slane %v562, %v2849
    %v2852 = vunpack.c.l.s4 842150450
    %v2853 = vunpack.c.0.s8 %v2852
    %v2854 = vlaneseq
    %v2855 = vshrl.u32 %v2854, 7
    %v2856 = vsub.s32 %v2853, %v2855
    %v2857 = vrot.slane %v562, %v2856
    %v2859 = vunpack.c.l.s4 1414812756
    %v2860 = vunpack.c.0.s8 %v2859
    %v2861 = vlaneseq
    %v2862 = vshrl.u32 %v2861, 7
    %v2863 = vsub.s32 %v2860, %v2862
    %v2864 = vrot.slane %v562, %v2863
    %v2866 = vunpack.c.l.s4 1987475062
    %v2867 = vunpack.c.0.s8 %v2866
    %v2868 = vlaneseq
    %v2869 = vshrl.u32 %v2868, 7
    %v2870 = vsub.s32 %v2867, %v2869
    %v2871 = vrot.slane %v562, %v2870
    %v2873 = vunpack.c.l.s4 269488144
    %v2874 = vunpack.c.0.s8 %v2873
    %v2875 = vlaneseq
    %v2876 = vshrl.u32 %v2875, 7
    %v2877 = vsub.s32 %v2874, %v2876
    %v2878 = vrot.slane %v564, %v2877
    %v2880 = vunpack.c.l.s4 842150450
    %v2881 = vunpack.c.0.s8 %v2880
    %v2882 = vlaneseq
    %v2883 = vshrl.u32 %v2882, 7
    %v2884 = vsub.s32 %v2881, %v2883
    %v2885 = vrot.slane %v564, %v2884
    %v2887 = vunpack.c.l.s4 1414812756
    %v2888 = vunpack.c.0.s8 %v2887
    %v2889 = vlaneseq
    %v2890 = vshrl.u32 %v2889, 7
    %v2891 = vsub.s32 %v2888, %v2890
    %v2892 = vrot.slane %v564, %v2891
    %v2894 = vunpack.c.l.s4 1987475062
    %v2895 = vunpack.c.0.s8 %v2894
    %v2896 = vlaneseq
    %v2897 = vshrl.u32 %v2896, 7
    %v2898 = vsub.s32 %v2895, %v2897
    %v2899 = vrot.slane %v564, %v2898
    %v2901 = vunpack.c.l.s4 269488144
    %v2902 = vunpack.c.0.s8 %v2901
    %v2903 = vlaneseq
    %v2904 = vshrl.u32 %v2903, 7
    %v2905 = vsub.s32 %v2902, %v2904
    %v2906 = vrot.slane %v566, %v2905
    %v2908 = vunpack.c.l.s4 842150450
    %v2909 = vunpack.c.0.s8 %v2908
    %v2910 = vlaneseq
    %v2911 = vshrl.u32 %v2910, 7
    %v2912 = vsub.s32 %v2909, %v2911
    %v2913 = vrot.slane %v566, %v2912
    %v2915 = vunpack.c.l.s4 1414812756
    %v2916 = vunpack.c.0.s8 %v2915
    %v2917 = vlaneseq
    %v2918 = vshrl.u32 %v2917, 7
    %v2919 = vsub.s32 %v2916, %v2918
    %v2920 = vrot.slane %v566, %v2919
    %v2922 = vunpack.c.l.s4 1987475062
    %v2923 = vunpack.c.0.s8 %v2922
    %v2924 = vlaneseq
    %v2925 = vshrl.u32 %v2924, 7
    %v2926 = vsub.s32 %v2923, %v2925
    %v2927 = vrot.slane %v566, %v2926
    %v2929 = vunpack.c.l.s4 269488144
    %v2930 = vunpack.c.0.s8 %v2929
    %v2931 = vlaneseq
    %v2932 = vshrl.u32 %v2931, 7
    %v2933 = vsub.s32 %v2930, %v2932
    %v2934 = vrot.slane %v568, %v2933
    %v2936 = vunpack.c.l.s4 842150450
    %v2937 = vunpack.c.0.s8 %v2936
    %v2938 = vlaneseq
    %v2939 = vshrl.u32 %v2938, 7
    %v2940 = vsub.s32 %v2937, %v2939
    %v2941 = vrot.slane %v568, %v2940
    %v2943 = vunpack.c.l.s4 1414812756
    %v2944 = vunpack.c.0.s8 %v2943
    %v2945 = vlaneseq
    %v2946 = vshrl.u32 %v2945, 7
    %v2947 = vsub.s32 %v2944, %v2946
    %v2948 = vrot.slane %v568, %v2947
    %v2950 = vunpack.c.l.s4 1987475062
    %v2951 = vunpack.c.0.s8 %v2950
    %v2952 = vlaneseq
    %v2953 = vshrl.u32 %v2952, 7
    %v2954 = vsub.s32 %v2951, %v2953
    %v2955 = vrot.slane %v568, %v2954
    %v2957 = vunpack.c.l.s4 269488144
    %v2958 = vunpack.c.0.s8 %v2957
    %v2959 = vlaneseq
    %v2960 = vshrl.u32 %v2959, 7
    %v2961 = vsub.s32 %v2958, %v2960
    %v2962 = vrot.slane %v570, %v2961
    %v2964 = vunpack.c.l.s4 842150450
    %v2965 = vunpack.c.0.s8 %v2964
    %v2966 = vlaneseq
    %v2967 = vshrl.u32 %v2966, 7
    %v2968 = vsub.s32 %v2965, %v2967
    %v2969 = vrot.slane %v570, %v2968
    %v2971 = vunpack.c.l.s4 1414812756
    %v2972 = vunpack.c.0.s8 %v2971
    %v2973 = vlaneseq
    %v2974 = vshrl.u32 %v2973, 7
    %v2975 = vsub.s32 %v2972, %v2974
    %v2976 = vrot.slane %v570, %v2975
    %v2978 = vunpack.c.l.s4 1987475062
    %v2979 = vunpack.c.0.s8 %v2978
    %v2980 = vlaneseq
    %v2981 = vshrl.u32 %v2980, 7
    %v2982 = vsub.s32 %v2979, %v2981
    %v2983 = vrot.slane %v570, %v2982
    %v2985 = vunpack.c.l.s4 269488144
    %v2986 = vunpack.c.0.s8 %v2985
    %v2987 = vlaneseq
    %v2988 = vshrl.u32 %v2987, 7
    %v2989 = vsub.s32 %v2986, %v2988
    %v2990 = vrot.slane %v572, %v2989
    %v2992 = vunpack.c.l.s4 842150450
    %v2993 = vunpack.c.0.s8 %v2992
    %v2994 = vlaneseq
    %v2995 = vshrl.u32 %v2994, 7
    %v2996 = vsub.s32 %v2993, %v2995
    %v2997 = vrot.slane %v572, %v2996
    %v2999 = vunpack.c.l.s4 1414812756
    %v3000 = vunpack.c.0.s8 %v2999
    %v3001 = vlaneseq
    %v3002 = vshrl.u32 %v3001, 7
    %v3003 = vsub.s32 %v3000, %v3002
    %v3004 = vrot.slane %v572, %v3003
    %v3006 = vunpack.c.l.s4 1987475062
    %v3007 = vunpack.c.0.s8 %v3006
    %v3008 = vlaneseq
    %v3009 = vshrl.u32 %v3008, 7
    %v3010 = vsub.s32 %v3007, %v3009
    %v3011 = vrot.slane %v572, %v3010
    %v3013 = vunpack.c.l.s4 269488144
    %v3014 = vunpack.c.0.s8 %v3013
    %v3015 = vlaneseq
    %v3016 = vshrl.u32 %v3015, 7
    %v3017 = vsub.s32 %v3014, %v3016
    %v3018 = vrot.slane %v574, %v3017
    %v3020 = vunpack.c.l.s4 842150450
    %v3021 = vunpack.c.0.s8 %v3020
    %v3022 = vlaneseq
    %v3023 = vshrl.u32 %v3022, 7
    %v3024 = vsub.s32 %v3021, %v3023
    %v3025 = vrot.slane %v574, %v3024
    %v3027 = vunpack.c.l.s4 1414812756
    %v3028 = vunpack.c.0.s8 %v3027
    %v3029 = vlaneseq
    %v3030 = vshrl.u32 %v3029, 7
    %v3031 = vsub.s32 %v3028, %v3030
    %v3032 = vrot.slane %v574, %v3031
    %v3034 = vunpack.c.l.s4 1987475062
    %v3035 = vunpack.c.0.s8 %v3034
    %v3036 = vlaneseq
    %v3037 = vshrl.u32 %v3036, 7
    %v3038 = vsub.s32 %v3035, %v3037
    %v3039 = vrot.slane %v574, %v3038
    %v3041 = vunpack.c.l.s4 269488144
    %v3042 = vunpack.c.0.s8 %v3041
    %v3043 = vlaneseq
    %v3044 = vshrl.u32 %v3043, 7
    %v3045 = vsub.s32 %v3042, %v3044
    %v3046 = vrot.slane %v576, %v3045
    %v3048 = vunpack.c.l.s4 842150450
    %v3049 = vunpack.c.0.s8 %v3048
    %v3050 = vlaneseq
    %v3051 = vshrl.u32 %v3050, 7
    %v3052 = vsub.s32 %v3049, %v3051
    %v3053 = vrot.slane %v576, %v3052
    %v3055 = vunpack.c.l.s4 1414812756
    %v3056 = vunpack.c.0.s8 %v3055
    %v3057 = vlaneseq
    %v3058 = vshrl.u32 %v3057, 7
    %v3059 = vsub.s32 %v3056, %v3058
    %v3060 = vrot.slane %v576, %v3059
    %v3062 = vunpack.c.l.s4 1987475062
    %v3063 = vunpack.c.0.s8 %v3062
    %v3064 = vlaneseq
    %v3065 = vshrl.u32 %v3064, 7
    %v3066 = vsub.s32 %v3063, %v3065
    %v3067 = vrot.slane %v576, %v3066
    %v3069 = vunpack.c.l.s4 269488144
    %v3070 = vunpack.c.0.s8 %v3069
    %v3071 = vlaneseq
    %v3072 = vshrl.u32 %v3071, 7
    %v3073 = vsub.s32 %v3070, %v3072
    %v3074 = vrot.slane %v578, %v3073
    %v3076 = vunpack.c.l.s4 842150450
    %v3077 = vunpack.c.0.s8 %v3076
    %v3078 = vlaneseq
    %v3079 = vshrl.u32 %v3078, 7
    %v3080 = vsub.s32 %v3077, %v3079
    %v3081 = vrot.slane %v578, %v3080
    %v3083 = vunpack.c.l.s4 1414812756
    %v3084 = vunpack.c.0.s8 %v3083
    %v3085 = vlaneseq
    %v3086 = vshrl.u32 %v3085, 7
    %v3087 = vsub.s32 %v3084, %v3086
    %v3088 = vrot.slane %v578, %v3087
    %v3090 = vunpack.c.l.s4 1987475062
    %v3091 = vunpack.c.0.s8 %v3090
    %v3092 = vlaneseq
    %v3093 = vshrl.u32 %v3092, 7
    %v3094 = vsub.s32 %v3091, %v3093
    %v3095 = vrot.slane %v578, %v3094
    %v3097 = vunpack.c.l.s4 269488144
    %v3098 = vunpack.c.0.s8 %v3097
    %v3099 = vlaneseq
    %v3100 = vshrl.u32 %v3099, 7
    %v3101 = vsub.s32 %v3098, %v3100
    %v3102 = vrot.slane %v580, %v3101
    %v3104 = vunpack.c.l.s4 842150450
    %v3105 = vunpack.c.0.s8 %v3104
    %v3106 = vlaneseq
    %v3107 = vshrl.u32 %v3106, 7
    %v3108 = vsub.s32 %v3105, %v3107
    %v3109 = vrot.slane %v580, %v3108
    %v3111 = vunpack.c.l.s4 1414812756
    %v3112 = vunpack.c.0.s8 %v3111
    %v3113 = vlaneseq
    %v3114 = vshrl.u32 %v3113, 7
    %v3115 = vsub.s32 %v3112, %v3114
    %v3116 = vrot.slane %v580, %v3115
    %v3118 = vunpack.c.l.s4 1987475062
    %v3119 = vunpack.c.0.s8 %v3118
    %v3120 = vlaneseq
    %v3121 = vshrl.u32 %v3120, 7
    %v3122 = vsub.s32 %v3119, %v3121
    %v3123 = vrot.slane %v580, %v3122
    %v3125 = vunpack.c.l.s4 269488144
    %v3126 = vunpack.c.0.s8 %v3125
    %v3127 = vlaneseq
    %v3128 = vshrl.u32 %v3127, 7
    %v3129 = vsub.s32 %v3126, %v3128
    %v3130 = vrot.slane %v582, %v3129
    %v3132 = vunpack.c.l.s4 842150450
    %v3133 = vunpack.c.0.s8 %v3132
    %v3134 = vlaneseq
    %v3135 = vshrl.u32 %v3134, 7
    %v3136 = vsub.s32 %v3133, %v3135
    %v3137 = vrot.slane %v582, %v3136
    %v3139 = vunpack.c.l.s4 1414812756
    %v3140 = vunpack.c.0.s8 %v3139
    %v3141 = vlaneseq
    %v3142 = vshrl.u32 %v3141, 7
    %v3143 = vsub.s32 %v3140, %v3142
    %v3144 = vrot.slane %v582, %v3143
    %v3146 = vunpack.c.l.s4 1987475062
    %v3147 = vunpack.c.0.s8 %v3146
    %v3148 = vlaneseq
    %v3149 = vshrl.u32 %v3148, 7
    %v3150 = vsub.s32 %v3147, %v3149
    %v3151 = vrot.slane %v582, %v3150
    %v3153 = vunpack.c.l.s4 269488144
    %v3154 = vunpack.c.0.s8 %v3153
    %v3155 = vlaneseq
    %v3156 = vshrl.u32 %v3155, 7
    %v3157 = vsub.s32 %v3154, %v3156
    %v3158 = vrot.slane %v584, %v3157
    %v3160 = vunpack.c.l.s4 842150450
    %v3161 = vunpack.c.0.s8 %v3160
    %v3162 = vlaneseq
    %v3163 = vshrl.u32 %v3162, 7
    %v3164 = vsub.s32 %v3161, %v3163
    %v3165 = vrot.slane %v584, %v3164
    %v3167 = vunpack.c.l.s4 1414812756
    %v3168 = vunpack.c.0.s8 %v3167
    %v3169 = vlaneseq
    %v3170 = vshrl.u32 %v3169, 7
    %v3171 = vsub.s32 %v3168, %v3170
    %v3172 = vrot.slane %v584, %v3171
    %v3174 = vunpack.c.l.s4 1987475062
    %v3175 = vunpack.c.0.s8 %v3174
    %v3176 = vlaneseq
    %v3177 = vshrl.u32 %v3176, 7
    %v3178 = vsub.s32 %v3175, %v3177
    %v3179 = vrot.slane %v584, %v3178
    %v3181 = vunpack.c.l.s4 269488144
    %v3182 = vunpack.c.0.s8 %v3181
    %v3183 = vlaneseq
    %v3184 = vshrl.u32 %v3183, 7
    %v3185 = vsub.s32 %v3182, %v3184
    %v3186 = vrot.slane %v586, %v3185
    %v3188 = vunpack.c.l.s4 842150450
    %v3189 = vunpack.c.0.s8 %v3188
    %v3190 = vlaneseq
    %v3191 = vshrl.u32 %v3190, 7
    %v3192 = vsub.s32 %v3189, %v3191
    %v3193 = vrot.slane %v586, %v3192
    %v3195 = vunpack.c.l.s4 1414812756
    %v3196 = vunpack.c.0.s8 %v3195
    %v3197 = vlaneseq
    %v3198 = vshrl.u32 %v3197, 7
    %v3199 = vsub.s32 %v3196, %v3198
    %v3200 = vrot.slane %v586, %v3199
    %v3202 = vunpack.c.l.s4 1987475062
    %v3203 = vunpack.c.0.s8 %v3202
    %v3204 = vlaneseq
    %v3205 = vshrl.u32 %v3204, 7
    %v3206 = vsub.s32 %v3203, %v3205
    %v3207 = vrot.slane %v586, %v3206
    %v3209 = vunpack.c.l.s4 269488144
    %v3210 = vunpack.c.0.s8 %v3209
    %v3211 = vlaneseq
    %v3212 = vshrl.u32 %v3211, 7
    %v3213 = vsub.s32 %v3210, %v3212
    %v3214 = vrot.slane %v588, %v3213
    %v3216 = vunpack.c.l.s4 842150450
    %v3217 = vunpack.c.0.s8 %v3216
    %v3218 = vlaneseq
    %v3219 = vshrl.u32 %v3218, 7
    %v3220 = vsub.s32 %v3217, %v3219
    %v3221 = vrot.slane %v588, %v3220
    %v3223 = vunpack.c.l.s4 1414812756
    %v3224 = vunpack.c.0.s8 %v3223
    %v3225 = vlaneseq
    %v3226 = vshrl.u32 %v3225, 7
    %v3227 = vsub.s32 %v3224, %v3226
    %v3228 = vrot.slane %v588, %v3227
    %v3230 = vunpack.c.l.s4 1987475062
    %v3231 = vunpack.c.0.s8 %v3230
    %v3232 = vlaneseq
    %v3233 = vshrl.u32 %v3232, 7
    %v3234 = vsub.s32 %v3231, %v3233
    %v3235 = vrot.slane %v588, %v3234
    %v3237 = vunpack.c.l.s4 269488144
    %v3238 = vunpack.c.0.s8 %v3237
    %v3239 = vlaneseq
    %v3240 = vshrl.u32 %v3239, 7
    %v3241 = vsub.s32 %v3238, %v3240
    %v3242 = vrot.slane %v590, %v3241
    %v3244 = vunpack.c.l.s4 842150450
    %v3245 = vunpack.c.0.s8 %v3244
    %v3246 = vlaneseq
    %v3247 = vshrl.u32 %v3246, 7
    %v3248 = vsub.s32 %v3245, %v3247
    %v3249 = vrot.slane %v590, %v3248
    %v3251 = vunpack.c.l.s4 1414812756
    %v3252 = vunpack.c.0.s8 %v3251
    %v3253 = vlaneseq
    %v3254 = vshrl.u32 %v3253, 7
    %v3255 = vsub.s32 %v3252, %v3254
    %v3256 = vrot.slane %v590, %v3255
    %v3258 = vunpack.c.l.s4 1987475062
    %v3259 = vunpack.c.0.s8 %v3258
    %v3260 = vlaneseq
    %v3261 = vshrl.u32 %v3260, 7
    %v3262 = vsub.s32 %v3259, %v3261
    %v3263 = vrot.slane %v590, %v3262
    %v3265 = vunpack.c.l.s4 269488144
    %v3266 = vunpack.c.0.s8 %v3265
    %v3267 = vlaneseq
    %v3268 = vshrl.u32 %v3267, 7
    %v3269 = vsub.s32 %v3266, %v3268
    %v3270 = vrot.slane %v592, %v3269
    %v3272 = vunpack.c.l.s4 842150450
    %v3273 = vunpack.c.0.s8 %v3272
    %v3274 = vlaneseq
    %v3275 = vshrl.u32 %v3274, 7
    %v3276 = vsub.s32 %v3273, %v3275
    %v3277 = vrot.slane %v592, %v3276
    %v3279 = vunpack.c.l.s4 1414812756
    %v3280 = vunpack.c.0.s8 %v3279
    %v3281 = vlaneseq
    %v3282 = vshrl.u32 %v3281, 7
    %v3283 = vsub.s32 %v3280, %v3282
    %v3284 = vrot.slane %v592, %v3283
    %v3286 = vunpack.c.l.s4 1987475062
    %v3287 = vunpack.c.0.s8 %v3286
    %v3288 = vlaneseq
    %v3289 = vshrl.u32 %v3288, 7
    %v3290 = vsub.s32 %v3287, %v3289
    %v3291 = vrot.slane %v592, %v3290
    %v3293 = vunpack.c.l.s4 269488144
    %v3294 = vunpack.c.0.s8 %v3293
    %v3295 = vlaneseq
    %v3296 = vshrl.u32 %v3295, 7
    %v3297 = vsub.s32 %v3294, %v3296
    %v3298 = vrot.slane %v594, %v3297
    %v3300 = vunpack.c.l.s4 842150450
    %v3301 = vunpack.c.0.s8 %v3300
    %v3302 = vlaneseq
    %v3303 = vshrl.u32 %v3302, 7
    %v3304 = vsub.s32 %v3301, %v3303
    %v3305 = vrot.slane %v594, %v3304
    %v3307 = vunpack.c.l.s4 1414812756
    %v3308 = vunpack.c.0.s8 %v3307
    %v3309 = vlaneseq
    %v3310 = vshrl.u32 %v3309, 7
    %v3311 = vsub.s32 %v3308, %v3310
    %v3312 = vrot.slane %v594, %v3311
    %v3314 = vunpack.c.l.s4 1987475062
    %v3315 = vunpack.c.0.s8 %v3314
    %v3316 = vlaneseq
    %v3317 = vshrl.u32 %v3316, 7
    %v3318 = vsub.s32 %v3315, %v3317
    %v3319 = vrot.slane %v594, %v3318
    %v3321 = vunpack.c.l.s4 269488144
    %v3322 = vunpack.c.0.s8 %v3321
    %v3323 = vlaneseq
    %v3324 = vshrl.u32 %v3323, 7
    %v3325 = vsub.s32 %v3322, %v3324
    %v3326 = vrot.slane %v596, %v3325
    %v3328 = vunpack.c.l.s4 842150450
    %v3329 = vunpack.c.0.s8 %v3328
    %v3330 = vlaneseq
    %v3331 = vshrl.u32 %v3330, 7
    %v3332 = vsub.s32 %v3329, %v3331
    %v3333 = vrot.slane %v596, %v3332
    %v3335 = vunpack.c.l.s4 1414812756
    %v3336 = vunpack.c.0.s8 %v3335
    %v3337 = vlaneseq
    %v3338 = vshrl.u32 %v3337, 7
    %v3339 = vsub.s32 %v3336, %v3338
    %v3340 = vrot.slane %v596, %v3339
    %v3342 = vunpack.c.l.s4 1987475062
    %v3343 = vunpack.c.0.s8 %v3342
    %v3344 = vlaneseq
    %v3345 = vshrl.u32 %v3344, 7
    %v3346 = vsub.s32 %v3343, %v3345
    %v3347 = vrot.slane %v596, %v3346
    %v3349 = vunpack.c.l.s4 269488144
    %v3350 = vunpack.c.0.s8 %v3349
    %v3351 = vlaneseq
    %v3352 = vshrl.u32 %v3351, 7
    %v3353 = vsub.s32 %v3350, %v3352
    %v3354 = vrot.slane %v598, %v3353
    %v3356 = vunpack.c.l.s4 842150450
    %v3357 = vunpack.c.0.s8 %v3356
    %v3358 = vlaneseq
    %v3359 = vshrl.u32 %v3358, 7
    %v3360 = vsub.s32 %v3357, %v3359
    %v3361 = vrot.slane %v598, %v3360
    %v3363 = vunpack.c.l.s4 1414812756
    %v3364 = vunpack.c.0.s8 %v3363
    %v3365 = vlaneseq
    %v3366 = vshrl.u32 %v3365, 7
    %v3367 = vsub.s32 %v3364, %v3366
    %v3368 = vrot.slane %v598, %v3367
    %v3370 = vunpack.c.l.s4 1987475062
    %v3371 = vunpack.c.0.s8 %v3370
    %v3372 = vlaneseq
    %v3373 = vshrl.u32 %v3372, 7
    %v3374 = vsub.s32 %v3371, %v3373
    %v3375 = vrot.slane %v598, %v3374
    %v3377 = vunpack.c.l.s4 269488144
    %v3378 = vunpack.c.0.s8 %v3377
    %v3379 = vlaneseq
    %v3380 = vshrl.u32 %v3379, 7
    %v3381 = vsub.s32 %v3378, %v3380
    %v3382 = vrot.slane %v600, %v3381
    %v3384 = vunpack.c.l.s4 842150450
    %v3385 = vunpack.c.0.s8 %v3384
    %v3386 = vlaneseq
    %v3387 = vshrl.u32 %v3386, 7
    %v3388 = vsub.s32 %v3385, %v3387
    %v3389 = vrot.slane %v600, %v3388
    %v3391 = vunpack.c.l.s4 1414812756
    %v3392 = vunpack.c.0.s8 %v3391
    %v3393 = vlaneseq
    %v3394 = vshrl.u32 %v3393, 7
    %v3395 = vsub.s32 %v3392, %v3394
    %v3396 = vrot.slane %v600, %v3395
    %v3398 = vunpack.c.l.s4 1987475062
    %v3399 = vunpack.c.0.s8 %v3398
    %v3400 = vlaneseq
    %v3401 = vshrl.u32 %v3400, 7
    %v3402 = vsub.s32 %v3399, %v3401
    %v3403 = vrot.slane %v600, %v3402
    %v3405 = vunpack.c.l.s4 269488144
    %v3406 = vunpack.c.0.s8 %v3405
    %v3407 = vlaneseq
    %v3408 = vshrl.u32 %v3407, 7
    %v3409 = vsub.s32 %v3406, %v3408
    %v3410 = vrot.slane %v602, %v3409
    %v3412 = vunpack.c.l.s4 842150450
    %v3413 = vunpack.c.0.s8 %v3412
    %v3414 = vlaneseq
    %v3415 = vshrl.u32 %v3414, 7
    %v3416 = vsub.s32 %v3413, %v3415
    %v3417 = vrot.slane %v602, %v3416
    %v3419 = vunpack.c.l.s4 1414812756
    %v3420 = vunpack.c.0.s8 %v3419
    %v3421 = vlaneseq
    %v3422 = vshrl.u32 %v3421, 7
    %v3423 = vsub.s32 %v3420, %v3422
    %v3424 = vrot.slane %v602, %v3423
    %v3426 = vunpack.c.l.s4 1987475062
    %v3427 = vunpack.c.0.s8 %v3426
    %v3428 = vlaneseq
    %v3429 = vshrl.u32 %v3428, 7
    %v3430 = vsub.s32 %v3427, %v3429
    %v3431 = vrot.slane %v602, %v3430
    %v3433 = vunpack.c.l.s4 269488144
    %v3434 = vunpack.c.0.s8 %v3433
    %v3435 = vlaneseq
    %v3436 = vshrl.u32 %v3435, 7
    %v3437 = vsub.s32 %v3434, %v3436
    %v3438 = vrot.slane %v604, %v3437
    %v3440 = vunpack.c.l.s4 842150450
    %v3441 = vunpack.c.0.s8 %v3440
    %v3442 = vlaneseq
    %v3443 = vshrl.u32 %v3442, 7
    %v3444 = vsub.s32 %v3441, %v3443
    %v3445 = vrot.slane %v604, %v3444
    %v3447 = vunpack.c.l.s4 1414812756
    %v3448 = vunpack.c.0.s8 %v3447
    %v3449 = vlaneseq
    %v3450 = vshrl.u32 %v3449, 7
    %v3451 = vsub.s32 %v3448, %v3450
    %v3452 = vrot.slane %v604, %v3451
    %v3454 = vunpack.c.l.s4 1987475062
    %v3455 = vunpack.c.0.s8 %v3454
    %v3456 = vlaneseq
    %v3457 = vshrl.u32 %v3456, 7
    %v3458 = vsub.s32 %v3455, %v3457
    %v3459 = vrot.slane %v604, %v3458
    %v3461 = vunpack.c.l.s4 269488144
    %v3462 = vunpack.c.0.s8 %v3461
    %v3463 = vlaneseq
    %v3464 = vshrl.u32 %v3463, 7
    %v3465 = vsub.s32 %v3462, %v3464
    %v3466 = vrot.slane %v606, %v3465
    %v3468 = vunpack.c.l.s4 842150450
    %v3469 = vunpack.c.0.s8 %v3468
    %v3470 = vlaneseq
    %v3471 = vshrl.u32 %v3470, 7
    %v3472 = vsub.s32 %v3469, %v3471
    %v3473 = vrot.slane %v606, %v3472
    %v3475 = vunpack.c.l.s4 1414812756
    %v3476 = vunpack.c.0.s8 %v3475
    %v3477 = vlaneseq
    %v3478 = vshrl.u32 %v3477, 7
    %v3479 = vsub.s32 %v3476, %v3478
    %v3480 = vrot.slane %v606, %v3479
    %v3482 = vunpack.c.l.s4 1987475062
    %v3483 = vunpack.c.0.s8 %v3482
    %v3484 = vlaneseq
    %v3485 = vshrl.u32 %v3484, 7
    %v3486 = vsub.s32 %v3483, %v3485
    %v3487 = vrot.slane %v606, %v3486
    %v3489 = vunpack.c.l.s4 269488144
    %v3490 = vunpack.c.0.s8 %v3489
    %v3491 = vlaneseq
    %v3492 = vshrl.u32 %v3491, 7
    %v3493 = vsub.s32 %v3490, %v3492
    %v3494 = vrot.slane %v608, %v3493
    %v3496 = vunpack.c.l.s4 842150450
    %v3497 = vunpack.c.0.s8 %v3496
    %v3498 = vlaneseq
    %v3499 = vshrl.u32 %v3498, 7
    %v3500 = vsub.s32 %v3497, %v3499
    %v3501 = vrot.slane %v608, %v3500
    %v3503 = vunpack.c.l.s4 1414812756
    %v3504 = vunpack.c.0.s8 %v3503
    %v3505 = vlaneseq
    %v3506 = vshrl.u32 %v3505, 7
    %v3507 = vsub.s32 %v3504, %v3506
    %v3508 = vrot.slane %v608, %v3507
    %v3510 = vunpack.c.l.s4 1987475062
    %v3511 = vunpack.c.0.s8 %v3510
    %v3512 = vlaneseq
    %v3513 = vshrl.u32 %v3512, 7
    %v3514 = vsub.s32 %v3511, %v3513
    %v3515 = vrot.slane %v608, %v3514
    %v3517 = vunpack.c.l.s4 269488144
    %v3518 = vunpack.c.0.s8 %v3517
    %v3519 = vlaneseq
    %v3520 = vshrl.u32 %v3519, 7
    %v3521 = vsub.s32 %v3518, %v3520
    %v3522 = vrot.slane %v610, %v3521
    %v3524 = vunpack.c.l.s4 842150450
    %v3525 = vunpack.c.0.s8 %v3524
    %v3526 = vlaneseq
    %v3527 = vshrl.u32 %v3526, 7
    %v3528 = vsub.s32 %v3525, %v3527
    %v3529 = vrot.slane %v610, %v3528
    %v3531 = vunpack.c.l.s4 1414812756
    %v3532 = vunpack.c.0.s8 %v3531
    %v3533 = vlaneseq
    %v3534 = vshrl.u32 %v3533, 7
    %v3535 = vsub.s32 %v3532, %v3534
    %v3536 = vrot.slane %v610, %v3535
    %v3538 = vunpack.c.l.s4 1987475062
    %v3539 = vunpack.c.0.s8 %v3538
    %v3540 = vlaneseq
    %v3541 = vshrl.u32 %v3540, 7
    %v3542 = vsub.s32 %v3539, %v3541
    %v3543 = vrot.slane %v610, %v3542
    %v3545 = vunpack.c.l.s4 269488144
    %v3546 = vunpack.c.0.s8 %v3545
    %v3547 = vlaneseq
    %v3548 = vshrl.u32 %v3547, 7
    %v3549 = vsub.s32 %v3546, %v3548
    %v3550 = vrot.slane %v612, %v3549
    %v3552 = vunpack.c.l.s4 842150450
    %v3553 = vunpack.c.0.s8 %v3552
    %v3554 = vlaneseq
    %v3555 = vshrl.u32 %v3554, 7
    %v3556 = vsub.s32 %v3553, %v3555
    %v3557 = vrot.slane %v612, %v3556
    %v3559 = vunpack.c.l.s4 1414812756
    %v3560 = vunpack.c.0.s8 %v3559
    %v3561 = vlaneseq
    %v3562 = vshrl.u32 %v3561, 7
    %v3563 = vsub.s32 %v3560, %v3562
    %v3564 = vrot.slane %v612, %v3563
    %v3566 = vunpack.c.l.s4 1987475062
    %v3567 = vunpack.c.0.s8 %v3566
    %v3568 = vlaneseq
    %v3569 = vshrl.u32 %v3568, 7
    %v3570 = vsub.s32 %v3567, %v3569
    %v3571 = vrot.slane %v612, %v3570
    %v3573 = vunpack.c.l.s4 269488144
    %v3574 = vunpack.c.0.s8 %v3573
    %v3575 = vlaneseq
    %v3576 = vshrl.u32 %v3575, 7
    %v3577 = vsub.s32 %v3574, %v3576
    %v3578 = vrot.slane %v614, %v3577
    %v3580 = vunpack.c.l.s4 842150450
    %v3581 = vunpack.c.0.s8 %v3580
    %v3582 = vlaneseq
    %v3583 = vshrl.u32 %v3582, 7
    %v3584 = vsub.s32 %v3581, %v3583
    %v3585 = vrot.slane %v614, %v3584
    %v3587 = vunpack.c.l.s4 1414812756
    %v3588 = vunpack.c.0.s8 %v3587
    %v3589 = vlaneseq
    %v3590 = vshrl.u32 %v3589, 7
    %v3591 = vsub.s32 %v3588, %v3590
    %v3592 = vrot.slane %v614, %v3591
    %v3594 = vunpack.c.l.s4 1987475062
    %v3595 = vunpack.c.0.s8 %v3594
    %v3596 = vlaneseq
    %v3597 = vshrl.u32 %v3596, 7
    %v3598 = vsub.s32 %v3595, %v3597
    %v3599 = vrot.slane %v614, %v3598
    %v3601 = vunpack.c.l.s4 269488144
    %v3602 = vunpack.c.0.s8 %v3601
    %v3603 = vlaneseq
    %v3604 = vshrl.u32 %v3603, 7
    %v3605 = vsub.s32 %v3602, %v3604
    %v3606 = vrot.slane %v616, %v3605
    %v3608 = vunpack.c.l.s4 842150450
    %v3609 = vunpack.c.0.s8 %v3608
    %v3610 = vlaneseq
    %v3611 = vshrl.u32 %v3610, 7
    %v3612 = vsub.s32 %v3609, %v3611
    %v3613 = vrot.slane %v616, %v3612
    %v3615 = vunpack.c.l.s4 1414812756
    %v3616 = vunpack.c.0.s8 %v3615
    %v3617 = vlaneseq
    %v3618 = vshrl.u32 %v3617, 7
    %v3619 = vsub.s32 %v3616, %v3618
    %v3620 = vrot.slane %v616, %v3619
    %v3622 = vunpack.c.l.s4 1987475062
    %v3623 = vunpack.c.0.s8 %v3622
    %v3624 = vlaneseq
    %v3625 = vshrl.u32 %v3624, 7
    %v3626 = vsub.s32 %v3623, %v3625
    %v3627 = vrot.slane %v616, %v3626
    %v3629 = vunpack.c.l.s4 269488144
    %v3630 = vunpack.c.0.s8 %v3629
    %v3631 = vlaneseq
    %v3632 = vshrl.u32 %v3631, 7
    %v3633 = vsub.s32 %v3630, %v3632
    %v3634 = vrot.slane %v618, %v3633
    %v3636 = vunpack.c.l.s4 842150450
    %v3637 = vunpack.c.0.s8 %v3636
    %v3638 = vlaneseq
    %v3639 = vshrl.u32 %v3638, 7
    %v3640 = vsub.s32 %v3637, %v3639
    %v3641 = vrot.slane %v618, %v3640
    %v3643 = vunpack.c.l.s4 1414812756
    %v3644 = vunpack.c.0.s8 %v3643
    %v3645 = vlaneseq
    %v3646 = vshrl.u32 %v3645, 7
    %v3647 = vsub.s32 %v3644, %v3646
    %v3648 = vrot.slane %v618, %v3647
    %v3650 = vunpack.c.l.s4 1987475062
    %v3651 = vunpack.c.0.s8 %v3650
    %v3652 = vlaneseq
    %v3653 = vshrl.u32 %v3652, 7
    %v3654 = vsub.s32 %v3651, %v3653
    %v3655 = vrot.slane %v618, %v3654
    %v3657 = vunpack.c.l.s4 269488144
    %v3658 = vunpack.c.0.s8 %v3657
    %v3659 = vlaneseq
    %v3660 = vshrl.u32 %v3659, 7
    %v3661 = vsub.s32 %v3658, %v3660
    %v3662 = vrot.slane %v620, %v3661
    %v3664 = vunpack.c.l.s4 842150450
    %v3665 = vunpack.c.0.s8 %v3664
    %v3666 = vlaneseq
    %v3667 = vshrl.u32 %v3666, 7
    %v3668 = vsub.s32 %v3665, %v3667
    %v3669 = vrot.slane %v620, %v3668
    %v3671 = vunpack.c.l.s4 1414812756
    %v3672 = vunpack.c.0.s8 %v3671
    %v3673 = vlaneseq
    %v3674 = vshrl.u32 %v3673, 7
    %v3675 = vsub.s32 %v3672, %v3674
    %v3676 = vrot.slane %v620, %v3675
    %v3678 = vunpack.c.l.s4 1987475062
    %v3679 = vunpack.c.0.s8 %v3678
    %v3680 = vlaneseq
    %v3681 = vshrl.u32 %v3680, 7
    %v3682 = vsub.s32 %v3679, %v3681
    %v3683 = vrot.slane %v620, %v3682
    %v3685 = vunpack.c.l.s4 269488144
    %v3686 = vunpack.c.0.s8 %v3685
    %v3687 = vlaneseq
    %v3688 = vshrl.u32 %v3687, 7
    %v3689 = vsub.s32 %v3686, %v3688
    %v3690 = vrot.slane %v622, %v3689
    %v3692 = vunpack.c.l.s4 842150450
    %v3693 = vunpack.c.0.s8 %v3692
    %v3694 = vlaneseq
    %v3695 = vshrl.u32 %v3694, 7
    %v3696 = vsub.s32 %v3693, %v3695
    %v3697 = vrot.slane %v622, %v3696
    %v3699 = vunpack.c.l.s4 1414812756
    %v3700 = vunpack.c.0.s8 %v3699
    %v3701 = vlaneseq
    %v3702 = vshrl.u32 %v3701, 7
    %v3703 = vsub.s32 %v3700, %v3702
    %v3704 = vrot.slane %v622, %v3703
    %v3706 = vunpack.c.l.s4 1987475062
    %v3707 = vunpack.c.0.s8 %v3706
    %v3708 = vlaneseq
    %v3709 = vshrl.u32 %v3708, 7
    %v3710 = vsub.s32 %v3707, %v3709
    %v3711 = vrot.slane %v622, %v3710
    %v3713 = vunpack.c.l.s4 269488144
    %v3714 = vunpack.c.0.s8 %v3713
    %v3715 = vlaneseq
    %v3716 = vshrl.u32 %v3715, 7
    %v3717 = vsub.s32 %v3714, %v3716
    %v3718 = vrot.slane %v624, %v3717
    %v3720 = vunpack.c.l.s4 842150450
    %v3721 = vunpack.c.0.s8 %v3720
    %v3722 = vlaneseq
    %v3723 = vshrl.u32 %v3722, 7
    %v3724 = vsub.s32 %v3721, %v3723
    %v3725 = vrot.slane %v624, %v3724
    %v3727 = vunpack.c.l.s4 1414812756
    %v3728 = vunpack.c.0.s8 %v3727
    %v3729 = vlaneseq
    %v3730 = vshrl.u32 %v3729, 7
    %v3731 = vsub.s32 %v3728, %v3730
    %v3732 = vrot.slane %v624, %v3731
    %v3734 = vunpack.c.l.s4 1987475062
    %v3735 = vunpack.c.0.s8 %v3734
    %v3736 = vlaneseq
    %v3737 = vshrl.u32 %v3736, 7
    %v3738 = vsub.s32 %v3735, %v3737
    %v3739 = vrot.slane %v624, %v3738
    %v3741 = vunpack.c.l.s4 269488144
    %v3742 = vunpack.c.0.s8 %v3741
    %v3743 = vlaneseq
    %v3744 = vshrl.u32 %v3743, 7
    %v3745 = vsub.s32 %v3742, %v3744
    %v3746 = vrot.slane %v626, %v3745
    %v3748 = vunpack.c.l.s4 842150450
    %v3749 = vunpack.c.0.s8 %v3748
    %v3750 = vlaneseq
    %v3751 = vshrl.u32 %v3750, 7
    %v3752 = vsub.s32 %v3749, %v3751
    %v3753 = vrot.slane %v626, %v3752
    %v3755 = vunpack.c.l.s4 1414812756
    %v3756 = vunpack.c.0.s8 %v3755
    %v3757 = vlaneseq
    %v3758 = vshrl.u32 %v3757, 7
    %v3759 = vsub.s32 %v3756, %v3758
    %v3760 = vrot.slane %v626, %v3759
    %v3762 = vunpack.c.l.s4 1987475062
    %v3763 = vunpack.c.0.s8 %v3762
    %v3764 = vlaneseq
    %v3765 = vshrl.u32 %v3764, 7
    %v3766 = vsub.s32 %v3763, %v3765
    %v3767 = vrot.slane %v626, %v3766
    %v3769 = vunpack.c.l.s4 269488144
    %v3770 = vunpack.c.0.s8 %v3769
    %v3771 = vlaneseq
    %v3772 = vshrl.u32 %v3771, 7
    %v3773 = vsub.s32 %v3770, %v3772
    %v3774 = vrot.slane %v628, %v3773
    %v3776 = vunpack.c.l.s4 842150450
    %v3777 = vunpack.c.0.s8 %v3776
    %v3778 = vlaneseq
    %v3779 = vshrl.u32 %v3778, 7
    %v3780 = vsub.s32 %v3777, %v3779
    %v3781 = vrot.slane %v628, %v3780
    %v3783 = vunpack.c.l.s4 1414812756
    %v3784 = vunpack.c.0.s8 %v3783
    %v3785 = vlaneseq
    %v3786 = vshrl.u32 %v3785, 7
    %v3787 = vsub.s32 %v3784, %v3786
    %v3788 = vrot.slane %v628, %v3787
    %v3790 = vunpack.c.l.s4 1987475062
    %v3791 = vunpack.c.0.s8 %v3790
    %v3792 = vlaneseq
    %v3793 = vshrl.u32 %v3792, 7
    %v3794 = vsub.s32 %v3791, %v3793
    %v3795 = vrot.slane %v628, %v3794
    %v3797 = vunpack.c.l.s4 269488144
    %v3798 = vunpack.c.0.s8 %v3797
    %v3799 = vlaneseq
    %v3800 = vshrl.u32 %v3799, 7
    %v3801 = vsub.s32 %v3798, %v3800
    %v3802 = vrot.slane %v630, %v3801
    %v3804 = vunpack.c.l.s4 842150450
    %v3805 = vunpack.c.0.s8 %v3804
    %v3806 = vlaneseq
    %v3807 = vshrl.u32 %v3806, 7
    %v3808 = vsub.s32 %v3805, %v3807
    %v3809 = vrot.slane %v630, %v3808
    %v3811 = vunpack.c.l.s4 1414812756
    %v3812 = vunpack.c.0.s8 %v3811
    %v3813 = vlaneseq
    %v3814 = vshrl.u32 %v3813, 7
    %v3815 = vsub.s32 %v3812, %v3814
    %v3816 = vrot.slane %v630, %v3815
    %v3818 = vunpack.c.l.s4 1987475062
    %v3819 = vunpack.c.0.s8 %v3818
    %v3820 = vlaneseq
    %v3821 = vshrl.u32 %v3820, 7
    %v3822 = vsub.s32 %v3819, %v3821
    %v3823 = vrot.slane %v630, %v3822
    %v3825 = vunpack.c.l.s4 269488144
    %v3826 = vunpack.c.0.s8 %v3825
    %v3827 = vlaneseq
    %v3828 = vshrl.u32 %v3827, 7
    %v3829 = vsub.s32 %v3826, %v3828
    %v3830 = vrot.slane %v632, %v3829
    %v3832 = vunpack.c.l.s4 842150450
    %v3833 = vunpack.c.0.s8 %v3832
    %v3834 = vlaneseq
    %v3835 = vshrl.u32 %v3834, 7
    %v3836 = vsub.s32 %v3833, %v3835
    %v3837 = vrot.slane %v632, %v3836
    %v3839 = vunpack.c.l.s4 1414812756
    %v3840 = vunpack.c.0.s8 %v3839
    %v3841 = vlaneseq
    %v3842 = vshrl.u32 %v3841, 7
    %v3843 = vsub.s32 %v3840, %v3842
    %v3844 = vrot.slane %v632, %v3843
    %v3846 = vunpack.c.l.s4 1987475062
    %v3847 = vunpack.c.0.s8 %v3846
    %v3848 = vlaneseq
    %v3849 = vshrl.u32 %v3848, 7
    %v3850 = vsub.s32 %v3847, %v3849
    %v3851 = vrot.slane %v632, %v3850
    %v3853 = vunpack.c.l.s4 269488144
    %v3854 = vunpack.c.0.s8 %v3853
    %v3855 = vlaneseq
    %v3856 = vshrl.u32 %v3855, 7
    %v3857 = vsub.s32 %v3854, %v3856
    %v3858 = vrot.slane %v634, %v3857
    %v3860 = vunpack.c.l.s4 842150450
    %v3861 = vunpack.c.0.s8 %v3860
    %v3862 = vlaneseq
    %v3863 = vshrl.u32 %v3862, 7
    %v3864 = vsub.s32 %v3861, %v3863
    %v3865 = vrot.slane %v634, %v3864
    %v3867 = vunpack.c.l.s4 1414812756
    %v3868 = vunpack.c.0.s8 %v3867
    %v3869 = vlaneseq
    %v3870 = vshrl.u32 %v3869, 7
    %v3871 = vsub.s32 %v3868, %v3870
    %v3872 = vrot.slane %v634, %v3871
    %v3874 = vunpack.c.l.s4 1987475062
    %v3875 = vunpack.c.0.s8 %v3874
    %v3876 = vlaneseq
    %v3877 = vshrl.u32 %v3876, 7
    %v3878 = vsub.s32 %v3875, %v3877
    %v3879 = vrot.slane %v634, %v3878
    %v3881 = vunpack.c.l.s4 269488144
    %v3882 = vunpack.c.0.s8 %v3881
    %v3883 = vlaneseq
    %v3884 = vshrl.u32 %v3883, 7
    %v3885 = vsub.s32 %v3882, %v3884
    %v3886 = vrot.slane %v636, %v3885
    %v3888 = vunpack.c.l.s4 842150450
    %v3889 = vunpack.c.0.s8 %v3888
    %v3890 = vlaneseq
    %v3891 = vshrl.u32 %v3890, 7
    %v3892 = vsub.s32 %v3889, %v3891
    %v3893 = vrot.slane %v636, %v3892
    %v3895 = vunpack.c.l.s4 1414812756
    %v3896 = vunpack.c.0.s8 %v3895
    %v3897 = vlaneseq
    %v3898 = vshrl.u32 %v3897, 7
    %v3899 = vsub.s32 %v3896, %v3898
    %v3900 = vrot.slane %v636, %v3899
    %v3902 = vunpack.c.l.s4 1987475062
    %v3903 = vunpack.c.0.s8 %v3902
    %v3904 = vlaneseq
    %v3905 = vshrl.u32 %v3904, 7
    %v3906 = vsub.s32 %v3903, %v3905
    %v3907 = vrot.slane %v636, %v3906
    %v3909 = vunpack.c.l.s4 269488144
    %v3910 = vunpack.c.0.s8 %v3909
    %v3911 = vlaneseq
    %v3912 = vshrl.u32 %v3911, 7
    %v3913 = vsub.s32 %v3910, %v3912
    %v3914 = vrot.slane %v638, %v3913
    %v3916 = vunpack.c.l.s4 842150450
    %v3917 = vunpack.c.0.s8 %v3916
    %v3918 = vlaneseq
    %v3919 = vshrl.u32 %v3918, 7
    %v3920 = vsub.s32 %v3917, %v3919
    %v3921 = vrot.slane %v638, %v3920
    %v3923 = vunpack.c.l.s4 1414812756
    %v3924 = vunpack.c.0.s8 %v3923
    %v3925 = vlaneseq
    %v3926 = vshrl.u32 %v3925, 7
    %v3927 = vsub.s32 %v3924, %v3926
    %v3928 = vrot.slane %v638, %v3927
    %v3930 = vunpack.c.l.s4 1987475062
    %v3931 = vunpack.c.0.s8 %v3930
    %v3932 = vlaneseq
    %v3933 = vshrl.u32 %v3932, 7
    %v3934 = vsub.s32 %v3931, %v3933
    %v3935 = vrot.slane %v638, %v3934
    %v3937 = vunpack.c.l.s4 269488144
    %v3938 = vunpack.c.0.s8 %v3937
    %v3939 = vlaneseq
    %v3940 = vshrl.u32 %v3939, 7
    %v3941 = vsub.s32 %v3938, %v3940
    %v3942 = vrot.slane %v640, %v3941
    %v3944 = vunpack.c.l.s4 842150450
    %v3945 = vunpack.c.0.s8 %v3944
    %v3946 = vlaneseq
    %v3947 = vshrl.u32 %v3946, 7
    %v3948 = vsub.s32 %v3945, %v3947
    %v3949 = vrot.slane %v640, %v3948
    %v3951 = vunpack.c.l.s4 1414812756
    %v3952 = vunpack.c.0.s8 %v3951
    %v3953 = vlaneseq
    %v3954 = vshrl.u32 %v3953, 7
    %v3955 = vsub.s32 %v3952, %v3954
    %v3956 = vrot.slane %v640, %v3955
    %v3958 = vunpack.c.l.s4 1987475062
    %v3959 = vunpack.c.0.s8 %v3958
    %v3960 = vlaneseq
    %v3961 = vshrl.u32 %v3960, 7
    %v3962 = vsub.s32 %v3959, %v3961
    %v3963 = vrot.slane %v640, %v3962
    %v3965 = vunpack.c.l.s4 269488144
    %v3966 = vunpack.c.0.s8 %v3965
    %v3967 = vlaneseq
    %v3968 = vshrl.u32 %v3967, 7
    %v3969 = vsub.s32 %v3966, %v3968
    %v3970 = vrot.slane %v642, %v3969
    %v3972 = vunpack.c.l.s4 842150450
    %v3973 = vunpack.c.0.s8 %v3972
    %v3974 = vlaneseq
    %v3975 = vshrl.u32 %v3974, 7
    %v3976 = vsub.s32 %v3973, %v3975
    %v3977 = vrot.slane %v642, %v3976
    %v3979 = vunpack.c.l.s4 1414812756
    %v3980 = vunpack.c.0.s8 %v3979
    %v3981 = vlaneseq
    %v3982 = vshrl.u32 %v3981, 7
    %v3983 = vsub.s32 %v3980, %v3982
    %v3984 = vrot.slane %v642, %v3983
    %v3986 = vunpack.c.l.s4 1987475062
    %v3987 = vunpack.c.0.s8 %v3986
    %v3988 = vlaneseq
    %v3989 = vshrl.u32 %v3988, 7
    %v3990 = vsub.s32 %v3987, %v3989
    %v3991 = vrot.slane %v642, %v3990
    %v3993 = vunpack.c.l.s4 269488144
    %v3994 = vunpack.c.0.s8 %v3993
    %v3995 = vlaneseq
    %v3996 = vshrl.u32 %v3995, 7
    %v3997 = vsub.s32 %v3994, %v3996
    %v3998 = vrot.slane %v644, %v3997
    %v4000 = vunpack.c.l.s4 842150450
    %v4001 = vunpack.c.0.s8 %v4000
    %v4002 = vlaneseq
    %v4003 = vshrl.u32 %v4002, 7
    %v4004 = vsub.s32 %v4001, %v4003
    %v4005 = vrot.slane %v644, %v4004
    %v4007 = vunpack.c.l.s4 1414812756
    %v4008 = vunpack.c.0.s8 %v4007
    %v4009 = vlaneseq
    %v4010 = vshrl.u32 %v4009, 7
    %v4011 = vsub.s32 %v4008, %v4010
    %v4012 = vrot.slane %v644, %v4011
    %v4014 = vunpack.c.l.s4 1987475062
    %v4015 = vunpack.c.0.s8 %v4014
    %v4016 = vlaneseq
    %v4017 = vshrl.u32 %v4016, 7
    %v4018 = vsub.s32 %v4015, %v4017
    %v4019 = vrot.slane %v644, %v4018
    %v4021 = vunpack.c.l.s4 269488144
    %v4022 = vunpack.c.0.s8 %v4021
    %v4023 = vlaneseq
    %v4024 = vshrl.u32 %v4023, 7
    %v4025 = vsub.s32 %v4022, %v4024
    %v4026 = vrot.slane %v646, %v4025
    %v4028 = vunpack.c.l.s4 842150450
    %v4029 = vunpack.c.0.s8 %v4028
    %v4030 = vlaneseq
    %v4031 = vshrl.u32 %v4030, 7
    %v4032 = vsub.s32 %v4029, %v4031
    %v4033 = vrot.slane %v646, %v4032
    %v4035 = vunpack.c.l.s4 1414812756
    %v4036 = vunpack.c.0.s8 %v4035
    %v4037 = vlaneseq
    %v4038 = vshrl.u32 %v4037, 7
    %v4039 = vsub.s32 %v4036, %v4038
    %v4040 = vrot.slane %v646, %v4039
    %v4042 = vunpack.c.l.s4 1987475062
    %v4043 = vunpack.c.0.s8 %v4042
    %v4044 = vlaneseq
    %v4045 = vshrl.u32 %v4044, 7
    %v4046 = vsub.s32 %v4043, %v4045
    %v4047 = vrot.slane %v646, %v4046
    %v4049 = vunpack.c.l.s4 269488144
    %v4050 = vunpack.c.0.s8 %v4049
    %v4051 = vlaneseq
    %v4052 = vshrl.u32 %v4051, 7
    %v4053 = vsub.s32 %v4050, %v4052
    %v4054 = vrot.slane %v648, %v4053
    %v4056 = vunpack.c.l.s4 842150450
    %v4057 = vunpack.c.0.s8 %v4056
    %v4058 = vlaneseq
    %v4059 = vshrl.u32 %v4058, 7
    %v4060 = vsub.s32 %v4057, %v4059
    %v4061 = vrot.slane %v648, %v4060
    %v4063 = vunpack.c.l.s4 1414812756
    %v4064 = vunpack.c.0.s8 %v4063
    %v4065 = vlaneseq
    %v4066 = vshrl.u32 %v4065, 7
    %v4067 = vsub.s32 %v4064, %v4066
    %v4068 = vrot.slane %v648, %v4067
    %v4070 = vunpack.c.l.s4 1987475062
    %v4071 = vunpack.c.0.s8 %v4070
    %v4072 = vlaneseq
    %v4073 = vshrl.u32 %v4072, 7
    %v4074 = vsub.s32 %v4071, %v4073
    %v4075 = vrot.slane %v648, %v4074
    %v4077 = vunpack.c.l.s4 269488144
    %v4078 = vunpack.c.0.s8 %v4077
    %v4079 = vlaneseq
    %v4080 = vshrl.u32 %v4079, 7
    %v4081 = vsub.s32 %v4078, %v4080
    %v4082 = vrot.slane %v650, %v4081
    %v4084 = vunpack.c.l.s4 842150450
    %v4085 = vunpack.c.0.s8 %v4084
    %v4086 = vlaneseq
    %v4087 = vshrl.u32 %v4086, 7
    %v4088 = vsub.s32 %v4085, %v4087
    %v4089 = vrot.slane %v650, %v4088
    %v4091 = vunpack.c.l.s4 1414812756
    %v4092 = vunpack.c.0.s8 %v4091
    %v4093 = vlaneseq
    %v4094 = vshrl.u32 %v4093, 7
    %v4095 = vsub.s32 %v4092, %v4094
    %v4096 = vrot.slane %v650, %v4095
    %v4098 = vunpack.c.l.s4 1987475062
    %v4099 = vunpack.c.0.s8 %v4098
    %v4100 = vlaneseq
    %v4101 = vshrl.u32 %v4100, 7
    %v4102 = vsub.s32 %v4099, %v4101
    %v4103 = vrot.slane %v650, %v4102
    %v4105 = vunpack.c.l.s4 269488144
    %v4106 = vunpack.c.0.s8 %v4105
    %v4107 = vlaneseq
    %v4108 = vshrl.u32 %v4107, 7
    %v4109 = vsub.s32 %v4106, %v4108
    %v4110 = vrot.slane %v652, %v4109
    %v4112 = vunpack.c.l.s4 842150450
    %v4113 = vunpack.c.0.s8 %v4112
    %v4114 = vlaneseq
    %v4115 = vshrl.u32 %v4114, 7
    %v4116 = vsub.s32 %v4113, %v4115
    %v4117 = vrot.slane %v652, %v4116
    %v4119 = vunpack.c.l.s4 1414812756
    %v4120 = vunpack.c.0.s8 %v4119
    %v4121 = vlaneseq
    %v4122 = vshrl.u32 %v4121, 7
    %v4123 = vsub.s32 %v4120, %v4122
    %v4124 = vrot.slane %v652, %v4123
    %v4126 = vunpack.c.l.s4 1987475062
    %v4127 = vunpack.c.0.s8 %v4126
    %v4128 = vlaneseq
    %v4129 = vshrl.u32 %v4128, 7
    %v4130 = vsub.s32 %v4127, %v4129
    %v4131 = vrot.slane %v652, %v4130
    %v4133 = vunpack.c.l.s4 269488144
    %v4134 = vunpack.c.0.s8 %v4133
    %v4135 = vlaneseq
    %v4136 = vshrl.u32 %v4135, 7
    %v4137 = vsub.s32 %v4134, %v4136
    %v4138 = vrot.slane %v654, %v4137
    %v4140 = vunpack.c.l.s4 842150450
    %v4141 = vunpack.c.0.s8 %v4140
    %v4142 = vlaneseq
    %v4143 = vshrl.u32 %v4142, 7
    %v4144 = vsub.s32 %v4141, %v4143
    %v4145 = vrot.slane %v654, %v4144
    %v4147 = vunpack.c.l.s4 1414812756
    %v4148 = vunpack.c.0.s8 %v4147
    %v4149 = vlaneseq
    %v4150 = vshrl.u32 %v4149, 7
    %v4151 = vsub.s32 %v4148, %v4150
    %v4152 = vrot.slane %v654, %v4151
    %v4154 = vunpack.c.l.s4 1987475062
    %v4155 = vunpack.c.0.s8 %v4154
    %v4156 = vlaneseq
    %v4157 = vshrl.u32 %v4156, 7
    %v4158 = vsub.s32 %v4155, %v4157
    %v4159 = vrot.slane %v654, %v4158
    %v4161 = vunpack.c.l.s4 269488144
    %v4162 = vunpack.c.0.s8 %v4161
    %v4163 = vlaneseq
    %v4164 = vshrl.u32 %v4163, 7
    %v4165 = vsub.s32 %v4162, %v4164
    %v4166 = vrot.slane %v656, %v4165
    %v4168 = vunpack.c.l.s4 842150450
    %v4169 = vunpack.c.0.s8 %v4168
    %v4170 = vlaneseq
    %v4171 = vshrl.u32 %v4170, 7
    %v4172 = vsub.s32 %v4169, %v4171
    %v4173 = vrot.slane %v656, %v4172
    %v4175 = vunpack.c.l.s4 1414812756
    %v4176 = vunpack.c.0.s8 %v4175
    %v4177 = vlaneseq
    %v4178 = vshrl.u32 %v4177, 7
    %v4179 = vsub.s32 %v4176, %v4178
    %v4180 = vrot.slane %v656, %v4179
    %v4182 = vunpack.c.l.s4 1987475062
    %v4183 = vunpack.c.0.s8 %v4182
    %v4184 = vlaneseq
    %v4185 = vshrl.u32 %v4184, 7
    %v4186 = vsub.s32 %v4183, %v4185
    %v4187 = vrot.slane %v656, %v4186
    %v4189 = vunpack.c.l.s4 269488144
    %v4190 = vunpack.c.0.s8 %v4189
    %v4191 = vlaneseq
    %v4192 = vshrl.u32 %v4191, 7
    %v4193 = vsub.s32 %v4190, %v4192
    %v4194 = vrot.slane %v658, %v4193
    %v4196 = vunpack.c.l.s4 842150450
    %v4197 = vunpack.c.0.s8 %v4196
    %v4198 = vlaneseq
    %v4199 = vshrl.u32 %v4198, 7
    %v4200 = vsub.s32 %v4197, %v4199
    %v4201 = vrot.slane %v658, %v4200
    %v4203 = vunpack.c.l.s4 1414812756
    %v4204 = vunpack.c.0.s8 %v4203
    %v4205 = vlaneseq
    %v4206 = vshrl.u32 %v4205, 7
    %v4207 = vsub.s32 %v4204, %v4206
    %v4208 = vrot.slane %v658, %v4207
    %v4210 = vunpack.c.l.s4 1987475062
    %v4211 = vunpack.c.0.s8 %v4210
    %v4212 = vlaneseq
    %v4213 = vshrl.u32 %v4212, 7
    %v4214 = vsub.s32 %v4211, %v4213
    %v4215 = vrot.slane %v658, %v4214
    %v4217 = vunpack.c.l.s4 269488144
    %v4218 = vunpack.c.0.s8 %v4217
    %v4219 = vlaneseq
    %v4220 = vshrl.u32 %v4219, 7
    %v4221 = vsub.s32 %v4218, %v4220
    %v4222 = vrot.slane %v660, %v4221
    %v4224 = vunpack.c.l.s4 842150450
    %v4225 = vunpack.c.0.s8 %v4224
    %v4226 = vlaneseq
    %v4227 = vshrl.u32 %v4226, 7
    %v4228 = vsub.s32 %v4225, %v4227
    %v4229 = vrot.slane %v660, %v4228
    %v4231 = vunpack.c.l.s4 1414812756
    %v4232 = vunpack.c.0.s8 %v4231
    %v4233 = vlaneseq
    %v4234 = vshrl.u32 %v4233, 7
    %v4235 = vsub.s32 %v4232, %v4234
    %v4236 = vrot.slane %v660, %v4235
    %v4238 = vunpack.c.l.s4 1987475062
    %v4239 = vunpack.c.0.s8 %v4238
    %v4240 = vlaneseq
    %v4241 = vshrl.u32 %v4240, 7
    %v4242 = vsub.s32 %v4239, %v4241
    %v4243 = vrot.slane %v660, %v4242
    %v4245 = vunpack.c.l.s4 269488144
    %v4246 = vunpack.c.0.s8 %v4245
    %v4247 = vlaneseq
    %v4248 = vshrl.u32 %v4247, 7
    %v4249 = vsub.s32 %v4246, %v4248
    %v4250 = vrot.slane %v662, %v4249
    %v4252 = vunpack.c.l.s4 842150450
    %v4253 = vunpack.c.0.s8 %v4252
    %v4254 = vlaneseq
    %v4255 = vshrl.u32 %v4254, 7
    %v4256 = vsub.s32 %v4253, %v4255
    %v4257 = vrot.slane %v662, %v4256
    %v4259 = vunpack.c.l.s4 1414812756
    %v4260 = vunpack.c.0.s8 %v4259
    %v4261 = vlaneseq
    %v4262 = vshrl.u32 %v4261, 7
    %v4263 = vsub.s32 %v4260, %v4262
    %v4264 = vrot.slane %v662, %v4263
    %v4266 = vunpack.c.l.s4 1987475062
    %v4267 = vunpack.c.0.s8 %v4266
    %v4268 = vlaneseq
    %v4269 = vshrl.u32 %v4268, 7
    %v4270 = vsub.s32 %v4267, %v4269
    %v4271 = vrot.slane %v662, %v4270
    %v4273 = vunpack.c.l.s4 269488144
    %v4274 = vunpack.c.0.s8 %v4273
    %v4275 = vlaneseq
    %v4276 = vshrl.u32 %v4275, 7
    %v4277 = vsub.s32 %v4274, %v4276
    %v4278 = vrot.slane %v664, %v4277
    %v4280 = vunpack.c.l.s4 842150450
    %v4281 = vunpack.c.0.s8 %v4280
    %v4282 = vlaneseq
    %v4283 = vshrl.u32 %v4282, 7
    %v4284 = vsub.s32 %v4281, %v4283
    %v4285 = vrot.slane %v664, %v4284
    %v4287 = vunpack.c.l.s4 1414812756
    %v4288 = vunpack.c.0.s8 %v4287
    %v4289 = vlaneseq
    %v4290 = vshrl.u32 %v4289, 7
    %v4291 = vsub.s32 %v4288, %v4290
    %v4292 = vrot.slane %v664, %v4291
    %v4294 = vunpack.c.l.s4 1987475062
    %v4295 = vunpack.c.0.s8 %v4294
    %v4296 = vlaneseq
    %v4297 = vshrl.u32 %v4296, 7
    %v4298 = vsub.s32 %v4295, %v4297
    %v4299 = vrot.slane %v664, %v4298
    %v4301 = vunpack.c.l.s4 269488144
    %v4302 = vunpack.c.0.s8 %v4301
    %v4303 = vlaneseq
    %v4304 = vshrl.u32 %v4303, 7
    %v4305 = vsub.s32 %v4302, %v4304
    %v4306 = vrot.slane %v666, %v4305
    %v4308 = vunpack.c.l.s4 842150450
    %v4309 = vunpack.c.0.s8 %v4308
    %v4310 = vlaneseq
    %v4311 = vshrl.u32 %v4310, 7
    %v4312 = vsub.s32 %v4309, %v4311
    %v4313 = vrot.slane %v666, %v4312
    %v4315 = vunpack.c.l.s4 1414812756
    %v4316 = vunpack.c.0.s8 %v4315
    %v4317 = vlaneseq
    %v4318 = vshrl.u32 %v4317, 7
    %v4319 = vsub.s32 %v4316, %v4318
    %v4320 = vrot.slane %v666, %v4319
    %v4322 = vunpack.c.l.s4 1987475062
    %v4323 = vunpack.c.0.s8 %v4322
    %v4324 = vlaneseq
    %v4325 = vshrl.u32 %v4324, 7
    %v4326 = vsub.s32 %v4323, %v4325
    %v4327 = vrot.slane %v666, %v4326
    %v4329 = vunpack.c.l.s4 269488144
    %v4330 = vunpack.c.0.s8 %v4329
    %v4331 = vlaneseq
    %v4332 = vshrl.u32 %v4331, 7
    %v4333 = vsub.s32 %v4330, %v4332
    %v4334 = vrot.slane %v668, %v4333
    %v4336 = vunpack.c.l.s4 842150450
    %v4337 = vunpack.c.0.s8 %v4336
    %v4338 = vlaneseq
    %v4339 = vshrl.u32 %v4338, 7
    %v4340 = vsub.s32 %v4337, %v4339
    %v4341 = vrot.slane %v668, %v4340
    %v4343 = vunpack.c.l.s4 1414812756
    %v4344 = vunpack.c.0.s8 %v4343
    %v4345 = vlaneseq
    %v4346 = vshrl.u32 %v4345, 7
    %v4347 = vsub.s32 %v4344, %v4346
    %v4348 = vrot.slane %v668, %v4347
    %v4350 = vunpack.c.l.s4 1987475062
    %v4351 = vunpack.c.0.s8 %v4350
    %v4352 = vlaneseq
    %v4353 = vshrl.u32 %v4352, 7
    %v4354 = vsub.s32 %v4351, %v4353
    %v4355 = vrot.slane %v668, %v4354
    %v4357 = vunpack.c.l.s4 269488144
    %v4358 = vunpack.c.0.s8 %v4357
    %v4359 = vlaneseq
    %v4360 = vshrl.u32 %v4359, 7
    %v4361 = vsub.s32 %v4358, %v4360
    %v4362 = vrot.slane %v670, %v4361
    %v4364 = vunpack.c.l.s4 842150450
    %v4365 = vunpack.c.0.s8 %v4364
    %v4366 = vlaneseq
    %v4367 = vshrl.u32 %v4366, 7
    %v4368 = vsub.s32 %v4365, %v4367
    %v4369 = vrot.slane %v670, %v4368
    %v4371 = vunpack.c.l.s4 1414812756
    %v4372 = vunpack.c.0.s8 %v4371
    %v4373 = vlaneseq
    %v4374 = vshrl.u32 %v4373, 7
    %v4375 = vsub.s32 %v4372, %v4374
    %v4376 = vrot.slane %v670, %v4375
    %v4378 = vunpack.c.l.s4 1987475062
    %v4379 = vunpack.c.0.s8 %v4378
    %v4380 = vlaneseq
    %v4381 = vshrl.u32 %v4380, 7
    %v4382 = vsub.s32 %v4379, %v4381
    %v4383 = vrot.slane %v670, %v4382
    %v4384 = vcombine.low %v806, %v813
    %v4385 = vcombine.low %v820, %v827
    %v4387 = vunpack.c.l.s4 1983009808
    %v4388 = vunpack.c.0.s8 %v4387
    %v4389 = vlaneseq
    %v4390 = vshrl.u32 %v4389, 7
    %v4391 = vsub.s32 %v4388, %v4390
    %v4392 = vrot.slane %v4384, %v4391
    %v4394 = vunpack.c.l.s4 1983009808
    %v4395 = vunpack.c.0.s8 %v4394
    %v4396 = vlaneseq
    %v4397 = vshrl.u32 %v4396, 7
    %v4398 = vsub.s32 %v4395, %v4397
    %v4399 = vrot.slane %v4385, %v4398
    %v4400 = vcombine.low %v4392, %v4399
    %v4401 = vcombine.low %v834, %v841
    %v4402 = vcombine.low %v848, %v855
    %v4404 = vunpack.c.l.s4 1983009808
    %v4405 = vunpack.c.0.s8 %v4404
    %v4406 = vlaneseq
    %v4407 = vshrl.u32 %v4406, 7
    %v4408 = vsub.s32 %v4405, %v4407
    %v4409 = vrot.slane %v4401, %v4408
    %v4411 = vunpack.c.l.s4 1983009808
    %v4412 = vunpack.c.0.s8 %v4411
    %v4413 = vlaneseq
    %v4414 = vshrl.u32 %v4413, 7
    %v4415 = vsub.s32 %v4412, %v4414
    %v4416 = vrot.slane %v4402, %v4415
    %v4417 = vcombine.low %v4409, %v4416
    %v4418 = vcombine.low %v862, %v869
    %v4419 = vcombine.low %v876, %v883
    %v4421 = vunpack.c.l.s4 1983009808
    %v4422 = vunpack.c.0.s8 %v4421
    %v4423 = vlaneseq
    %v4424 = vshrl.u32 %v4423, 7
    %v4425 = vsub.s32 %v4422, %v4424
    %v4426 = vrot.slane %v4418, %v4425
    %v4428 = vunpack.c.l.s4 1983009808
    %v4429 = vunpack.c.0.s8 %v4428
    %v4430 = vlaneseq
    %v4431 = vshrl.u32 %v4430, 7
    %v4432 = vsub.s32 %v4429, %v4431
    %v4433 = vrot.slane %v4419, %v4432
    %v4434 = vcombine.low %v4426, %v4433
    %v4435 = vcombine.low %v890, %v897
    %v4436 = vcombine.low %v904, %v911
    %v4438 = vunpack.c.l.s4 1983009808
    %v4439 = vunpack.c.0.s8 %v4438
    %v4440 = vlaneseq
    %v4441 = vshrl.u32 %v4440, 7
    %v4442 = vsub.s32 %v4439, %v4441
    %v4443 = vrot.slane %v4435, %v4442
    %v4445 = vunpack.c.l.s4 1983009808
    %v4446 = vunpack.c.0.s8 %v4445
    %v4447 = vlaneseq
    %v4448 = vshrl.u32 %v4447, 7
    %v4449 = vsub.s32 %v4446, %v4448
    %v4450 = vrot.slane %v4436, %v4449
    %v4451 = vcombine.low %v4443, %v4450
    %v4452 = vcombine.low %v918, %v925
    %v4453 = vcombine.low %v932, %v939
    %v4455 = vunpack.c.l.s4 1983009808
    %v4456 = vunpack.c.0.s8 %v4455
    %v4457 = vlaneseq
    %v4458 = vshrl.u32 %v4457, 7
    %v4459 = vsub.s32 %v4456, %v4458
    %v4460 = vrot.slane %v4452, %v4459
    %v4462 = vunpack.c.l.s4 1983009808
    %v4463 = vunpack.c.0.s8 %v4462
    %v4464 = vlaneseq
    %v4465 = vshrl.u32 %v4464, 7
    %v4466 = vsub.s32 %v4463, %v4465
    %v4467 = vrot.slane %v4453, %v4466
    %v4468 = vcombine.low %v4460, %v4467
    %v4469 = vcombine.low %v946, %v953
    %v4470 = vcombine.low %v960, %v967
    %v4472 = vunpack.c.l.s4 1983009808
    %v4473 = vunpack.c.0.s8 %v4472
    %v4474 = vlaneseq
    %v4475 = vshrl.u32 %v4474, 7
    %v4476 = vsub.s32 %v4473, %v4475
    %v4477 = vrot.slane %v4469, %v4476
    %v4479 = vunpack.c.l.s4 1983009808
    %v4480 = vunpack.c.0.s8 %v4479
    %v4481 = vlaneseq
    %v4482 = vshrl.u32 %v4481, 7
    %v4483 = vsub.s32 %v4480, %v4482
    %v4484 = vrot.slane %v4470, %v4483
    %v4485 = vcombine.low %v4477, %v4484
    %v4486 = vcombine.low %v974, %v981
    %v4487 = vcombine.low %v988, %v995
    %v4489 = vunpack.c.l.s4 1983009808
    %v4490 = vunpack.c.0.s8 %v4489
    %v4491 = vlaneseq
    %v4492 = vshrl.u32 %v4491, 7
    %v4493 = vsub.s32 %v4490, %v4492
    %v4494 = vrot.slane %v4486, %v4493
    %v4496 = vunpack.c.l.s4 1983009808
    %v4497 = vunpack.c.0.s8 %v4496
    %v4498 = vlaneseq
    %v4499 = vshrl.u32 %v4498, 7
    %v4500 = vsub.s32 %v4497, %v4499
    %v4501 = vrot.slane %v4487, %v4500
    %v4502 = vcombine.low %v4494, %v4501
    %v4503 = vcombine.low %v1002, %v1009
    %v4504 = vcombine.low %v1016, %v1023
    %v4506 = vunpack.c.l.s4 1983009808
    %v4507 = vunpack.c.0.s8 %v4506
    %v4508 = vlaneseq
    %v4509 = vshrl.u32 %v4508, 7
    %v4510 = vsub.s32 %v4507, %v4509
    %v4511 = vrot.slane %v4503, %v4510
    %v4513 = vunpack.c.l.s4 1983009808
    %v4514 = vunpack.c.0.s8 %v4513
    %v4515 = vlaneseq
    %v4516 = vshrl.u32 %v4515, 7
    %v4517 = vsub.s32 %v4514, %v4516
    %v4518 = vrot.slane %v4504, %v4517
    %v4519 = vcombine.low %v4511, %v4518
    %v4520 = vcombine.low %v1030, %v1037
    %v4521 = vcombine.low %v1044, %v1051
    %v4523 = vunpack.c.l.s4 1983009808
    %v4524 = vunpack.c.0.s8 %v4523
    %v4525 = vlaneseq
    %v4526 = vshrl.u32 %v4525, 7
    %v4527 = vsub.s32 %v4524, %v4526
    %v4528 = vrot.slane %v4520, %v4527
    %v4530 = vunpack.c.l.s4 1983009808
    %v4531 = vunpack.c.0.s8 %v4530
    %v4532 = vlaneseq
    %v4533 = vshrl.u32 %v4532, 7
    %v4534 = vsub.s32 %v4531, %v4533
    %v4535 = vrot.slane %v4521, %v4534
    %v4536 = vcombine.low %v4528, %v4535
    %v4537 = vcombine.low %v1058, %v1065
    %v4538 = vcombine.low %v1072, %v1079
    %v4540 = vunpack.c.l.s4 1983009808
    %v4541 = vunpack.c.0.s8 %v4540
    %v4542 = vlaneseq
    %v4543 = vshrl.u32 %v4542, 7
    %v4544 = vsub.s32 %v4541, %v4543
    %v4545 = vrot.slane %v4537, %v4544
    %v4547 = vunpack.c.l.s4 1983009808
    %v4548 = vunpack.c.0.s8 %v4547
    %v4549 = vlaneseq
    %v4550 = vshrl.u32 %v4549, 7
    %v4551 = vsub.s32 %v4548, %v4550
    %v4552 = vrot.slane %v4538, %v4551
    %v4553 = vcombine.low %v4545, %v4552
    %v4554 = vcombine.low %v1086, %v1093
    %v4555 = vcombine.low %v1100, %v1107
    %v4557 = vunpack.c.l.s4 1983009808
    %v4558 = vunpack.c.0.s8 %v4557
    %v4559 = vlaneseq
    %v4560 = vshrl.u32 %v4559, 7
    %v4561 = vsub.s32 %v4558, %v4560
    %v4562 = vrot.slane %v4554, %v4561
    %v4564 = vunpack.c.l.s4 1983009808
    %v4565 = vunpack.c.0.s8 %v4564
    %v4566 = vlaneseq
    %v4567 = vshrl.u32 %v4566, 7
    %v4568 = vsub.s32 %v4565, %v4567
    %v4569 = vrot.slane %v4555, %v4568
    %v4570 = vcombine.low %v4562, %v4569
    %v4571 = vcombine.low %v1114, %v1121
    %v4572 = vcombine.low %v1128, %v1135
    %v4574 = vunpack.c.l.s4 1983009808
    %v4575 = vunpack.c.0.s8 %v4574
    %v4576 = vlaneseq
    %v4577 = vshrl.u32 %v4576, 7
    %v4578 = vsub.s32 %v4575, %v4577
    %v4579 = vrot.slane %v4571, %v4578
    %v4581 = vunpack.c.l.s4 1983009808
    %v4582 = vunpack.c.0.s8 %v4581
    %v4583 = vlaneseq
    %v4584 = vshrl.u32 %v4583, 7
    %v4585 = vsub.s32 %v4582, %v4584
    %v4586 = vrot.slane %v4572, %v4585
    %v4587 = vcombine.low %v4579, %v4586
    %v4588 = vcombine.low %v1142, %v1149
    %v4589 = vcombine.low %v1156, %v1163
    %v4591 = vunpack.c.l.s4 1983009808
    %v4592 = vunpack.c.0.s8 %v4591
    %v4593 = vlaneseq
    %v4594 = vshrl.u32 %v4593, 7
    %v4595 = vsub.s32 %v4592, %v4594
    %v4596 = vrot.slane %v4588, %v4595
    %v4598 = vunpack.c.l.s4 1983009808
    %v4599 = vunpack.c.0.s8 %v4598
    %v4600 = vlaneseq
    %v4601 = vshrl.u32 %v4600, 7
    %v4602 = vsub.s32 %v4599, %v4601
    %v4603 = vrot.slane %v4589, %v4602
    %v4604 = vcombine.low %v4596, %v4603
    %v4605 = vcombine.low %v1170, %v1177
    %v4606 = vcombine.low %v1184, %v1191
    %v4608 = vunpack.c.l.s4 1983009808
    %v4609 = vunpack.c.0.s8 %v4608
    %v4610 = vlaneseq
    %v4611 = vshrl.u32 %v4610, 7
    %v4612 = vsub.s32 %v4609, %v4611
    %v4613 = vrot.slane %v4605, %v4612
    %v4615 = vunpack.c.l.s4 1983009808
    %v4616 = vunpack.c.0.s8 %v4615
    %v4617 = vlaneseq
    %v4618 = vshrl.u32 %v4617, 7
    %v4619 = vsub.s32 %v4616, %v4618
    %v4620 = vrot.slane %v4606, %v4619
    %v4621 = vcombine.low %v4613, %v4620
    %v4622 = vcombine.low %v1198, %v1205
    %v4623 = vcombine.low %v1212, %v1219
    %v4625 = vunpack.c.l.s4 1983009808
    %v4626 = vunpack.c.0.s8 %v4625
    %v4627 = vlaneseq
    %v4628 = vshrl.u32 %v4627, 7
    %v4629 = vsub.s32 %v4626, %v4628
    %v4630 = vrot.slane %v4622, %v4629
    %v4632 = vunpack.c.l.s4 1983009808
    %v4633 = vunpack.c.0.s8 %v4632
    %v4634 = vlaneseq
    %v4635 = vshrl.u32 %v4634, 7
    %v4636 = vsub.s32 %v4633, %v4635
    %v4637 = vrot.slane %v4623, %v4636
    %v4638 = vcombine.low %v4630, %v4637
    %v4639 = vcombine.low %v1226, %v1233
    %v4640 = vcombine.low %v1240, %v1247
    %v4642 = vunpack.c.l.s4 1983009808
    %v4643 = vunpack.c.0.s8 %v4642
    %v4644 = vlaneseq
    %v4645 = vshrl.u32 %v4644, 7
    %v4646 = vsub.s32 %v4643, %v4645
    %v4647 = vrot.slane %v4639, %v4646
    %v4649 = vunpack.c.l.s4 1983009808
    %v4650 = vunpack.c.0.s8 %v4649
    %v4651 = vlaneseq
    %v4652 = vshrl.u32 %v4651, 7
    %v4653 = vsub.s32 %v4650, %v4652
    %v4654 = vrot.slane %v4640, %v4653
    %v4655 = vcombine.low %v4647, %v4654
    %v4656 = vcombine.low %v1254, %v1261
    %v4657 = vcombine.low %v1268, %v1275
    %v4659 = vunpack.c.l.s4 1983009808
    %v4660 = vunpack.c.0.s8 %v4659
    %v4661 = vlaneseq
    %v4662 = vshrl.u32 %v4661, 7
    %v4663 = vsub.s32 %v4660, %v4662
    %v4664 = vrot.slane %v4656, %v4663
    %v4666 = vunpack.c.l.s4 1983009808
    %v4667 = vunpack.c.0.s8 %v4666
    %v4668 = vlaneseq
    %v4669 = vshrl.u32 %v4668, 7
    %v4670 = vsub.s32 %v4667, %v4669
    %v4671 = vrot.slane %v4657, %v4670
    %v4672 = vcombine.low %v4664, %v4671
    %v4673 = vcombine.low %v1282, %v1289
    %v4674 = vcombine.low %v1296, %v1303
    %v4676 = vunpack.c.l.s4 1983009808
    %v4677 = vunpack.c.0.s8 %v4676
    %v4678 = vlaneseq
    %v4679 = vshrl.u32 %v4678, 7
    %v4680 = vsub.s32 %v4677, %v4679
    %v4681 = vrot.slane %v4673, %v4680
    %v4683 = vunpack.c.l.s4 1983009808
    %v4684 = vunpack.c.0.s8 %v4683
    %v4685 = vlaneseq
    %v4686 = vshrl.u32 %v4685, 7
    %v4687 = vsub.s32 %v4684, %v4686
    %v4688 = vrot.slane %v4674, %v4687
    %v4689 = vcombine.low %v4681, %v4688
    %v4690 = vcombine.low %v1310, %v1317
    %v4691 = vcombine.low %v1324, %v1331
    %v4693 = vunpack.c.l.s4 1983009808
    %v4694 = vunpack.c.0.s8 %v4693
    %v4695 = vlaneseq
    %v4696 = vshrl.u32 %v4695, 7
    %v4697 = vsub.s32 %v4694, %v4696
    %v4698 = vrot.slane %v4690, %v4697
    %v4700 = vunpack.c.l.s4 1983009808
    %v4701 = vunpack.c.0.s8 %v4700
    %v4702 = vlaneseq
    %v4703 = vshrl.u32 %v4702, 7
    %v4704 = vsub.s32 %v4701, %v4703
    %v4705 = vrot.slane %v4691, %v4704
    %v4706 = vcombine.low %v4698, %v4705
    %v4707 = vcombine.low %v1338, %v1345
    %v4708 = vcombine.low %v1352, %v1359
    %v4710 = vunpack.c.l.s4 1983009808
    %v4711 = vunpack.c.0.s8 %v4710
    %v4712 = vlaneseq
    %v4713 = vshrl.u32 %v4712, 7
    %v4714 = vsub.s32 %v4711, %v4713
    %v4715 = vrot.slane %v4707, %v4714
    %v4717 = vunpack.c.l.s4 1983009808
    %v4718 = vunpack.c.0.s8 %v4717
    %v4719 = vlaneseq
    %v4720 = vshrl.u32 %v4719, 7
    %v4721 = vsub.s32 %v4718, %v4720
    %v4722 = vrot.slane %v4708, %v4721
    %v4723 = vcombine.low %v4715, %v4722
    %v4724 = vcombine.low %v1366, %v1373
    %v4725 = vcombine.low %v1380, %v1387
    %v4727 = vunpack.c.l.s4 1983009808
    %v4728 = vunpack.c.0.s8 %v4727
    %v4729 = vlaneseq
    %v4730 = vshrl.u32 %v4729, 7
    %v4731 = vsub.s32 %v4728, %v4730
    %v4732 = vrot.slane %v4724, %v4731
    %v4734 = vunpack.c.l.s4 1983009808
    %v4735 = vunpack.c.0.s8 %v4734
    %v4736 = vlaneseq
    %v4737 = vshrl.u32 %v4736, 7
    %v4738 = vsub.s32 %v4735, %v4737
    %v4739 = vrot.slane %v4725, %v4738
    %v4740 = vcombine.low %v4732, %v4739
    %v4741 = vcombine.low %v1394, %v1401
    %v4742 = vcombine.low %v1408, %v1415
    %v4744 = vunpack.c.l.s4 1983009808
    %v4745 = vunpack.c.0.s8 %v4744
    %v4746 = vlaneseq
    %v4747 = vshrl.u32 %v4746, 7
    %v4748 = vsub.s32 %v4745, %v4747
    %v4749 = vrot.slane %v4741, %v4748
    %v4751 = vunpack.c.l.s4 1983009808
    %v4752 = vunpack.c.0.s8 %v4751
    %v4753 = vlaneseq
    %v4754 = vshrl.u32 %v4753, 7
    %v4755 = vsub.s32 %v4752, %v4754
    %v4756 = vrot.slane %v4742, %v4755
    %v4757 = vcombine.low %v4749, %v4756
    %v4758 = vcombine.low %v1422, %v1429
    %v4759 = vcombine.low %v1436, %v1443
    %v4761 = vunpack.c.l.s4 1983009808
    %v4762 = vunpack.c.0.s8 %v4761
    %v4763 = vlaneseq
    %v4764 = vshrl.u32 %v4763, 7
    %v4765 = vsub.s32 %v4762, %v4764
    %v4766 = vrot.slane %v4758, %v4765
    %v4768 = vunpack.c.l.s4 1983009808
    %v4769 = vunpack.c.0.s8 %v4768
    %v4770 = vlaneseq
    %v4771 = vshrl.u32 %v4770, 7
    %v4772 = vsub.s32 %v4769, %v4771
    %v4773 = vrot.slane %v4759, %v4772
    %v4774 = vcombine.low %v4766, %v4773
    %v4775 = vcombine.low %v1450, %v1457
    %v4776 = vcombine.low %v1464, %v1471
    %v4778 = vunpack.c.l.s4 1983009808
    %v4779 = vunpack.c.0.s8 %v4778
    %v4780 = vlaneseq
    %v4781 = vshrl.u32 %v4780, 7
    %v4782 = vsub.s32 %v4779, %v4781
    %v4783 = vrot.slane %v4775, %v4782
    %v4785 = vunpack.c.l.s4 1983009808
    %v4786 = vunpack.c.0.s8 %v4785
    %v4787 = vlaneseq
    %v4788 = vshrl.u32 %v4787, 7
    %v4789 = vsub.s32 %v4786, %v4788
    %v4790 = vrot.slane %v4776, %v4789
    %v4791 = vcombine.low %v4783, %v4790
    %v4792 = vcombine.low %v1478, %v1485
    %v4793 = vcombine.low %v1492, %v1499
    %v4795 = vunpack.c.l.s4 1983009808
    %v4796 = vunpack.c.0.s8 %v4795
    %v4797 = vlaneseq
    %v4798 = vshrl.u32 %v4797, 7
    %v4799 = vsub.s32 %v4796, %v4798
    %v4800 = vrot.slane %v4792, %v4799
    %v4802 = vunpack.c.l.s4 1983009808
    %v4803 = vunpack.c.0.s8 %v4802
    %v4804 = vlaneseq
    %v4805 = vshrl.u32 %v4804, 7
    %v4806 = vsub.s32 %v4803, %v4805
    %v4807 = vrot.slane %v4793, %v4806
    %v4808 = vcombine.low %v4800, %v4807
    %v4809 = vcombine.low %v1506, %v1513
    %v4810 = vcombine.low %v1520, %v1527
    %v4812 = vunpack.c.l.s4 1983009808
    %v4813 = vunpack.c.0.s8 %v4812
    %v4814 = vlaneseq
    %v4815 = vshrl.u32 %v4814, 7
    %v4816 = vsub.s32 %v4813, %v4815
    %v4817 = vrot.slane %v4809, %v4816
    %v4819 = vunpack.c.l.s4 1983009808
    %v4820 = vunpack.c.0.s8 %v4819
    %v4821 = vlaneseq
    %v4822 = vshrl.u32 %v4821, 7
    %v4823 = vsub.s32 %v4820, %v4822
    %v4824 = vrot.slane %v4810, %v4823
    %v4825 = vcombine.low %v4817, %v4824
    %v4826 = vcombine.low %v1534, %v1541
    %v4827 = vcombine.low %v1548, %v1555
    %v4829 = vunpack.c.l.s4 1983009808
    %v4830 = vunpack.c.0.s8 %v4829
    %v4831 = vlaneseq
    %v4832 = vshrl.u32 %v4831, 7
    %v4833 = vsub.s32 %v4830, %v4832
    %v4834 = vrot.slane %v4826, %v4833
    %v4836 = vunpack.c.l.s4 1983009808
    %v4837 = vunpack.c.0.s8 %v4836
    %v4838 = vlaneseq
    %v4839 = vshrl.u32 %v4838, 7
    %v4840 = vsub.s32 %v4837, %v4839
    %v4841 = vrot.slane %v4827, %v4840
    %v4842 = vcombine.low %v4834, %v4841
    %v4843 = vcombine.low %v1562, %v1569
    %v4844 = vcombine.low %v1576, %v1583
    %v4846 = vunpack.c.l.s4 1983009808
    %v4847 = vunpack.c.0.s8 %v4846
    %v4848 = vlaneseq
    %v4849 = vshrl.u32 %v4848, 7
    %v4850 = vsub.s32 %v4847, %v4849
    %v4851 = vrot.slane %v4843, %v4850
    %v4853 = vunpack.c.l.s4 1983009808
    %v4854 = vunpack.c.0.s8 %v4853
    %v4855 = vlaneseq
    %v4856 = vshrl.u32 %v4855, 7
    %v4857 = vsub.s32 %v4854, %v4856
    %v4858 = vrot.slane %v4844, %v4857
    %v4859 = vcombine.low %v4851, %v4858
    %v4860 = vcombine.low %v1590, %v1597
    %v4861 = vcombine.low %v1604, %v1611
    %v4863 = vunpack.c.l.s4 1983009808
    %v4864 = vunpack.c.0.s8 %v4863
    %v4865 = vlaneseq
    %v4866 = vshrl.u32 %v4865, 7
    %v4867 = vsub.s32 %v4864, %v4866
    %v4868 = vrot.slane %v4860, %v4867
    %v4870 = vunpack.c.l.s4 1983009808
    %v4871 = vunpack.c.0.s8 %v4870
    %v4872 = vlaneseq
    %v4873 = vshrl.u32 %v4872, 7
    %v4874 = vsub.s32 %v4871, %v4873
    %v4875 = vrot.slane %v4861, %v4874
    %v4876 = vcombine.low %v4868, %v4875
    %v4877 = vcombine.low %v1618, %v1625
    %v4878 = vcombine.low %v1632, %v1639
    %v4880 = vunpack.c.l.s4 1983009808
    %v4881 = vunpack.c.0.s8 %v4880
    %v4882 = vlaneseq
    %v4883 = vshrl.u32 %v4882, 7
    %v4884 = vsub.s32 %v4881, %v4883
    %v4885 = vrot.slane %v4877, %v4884
    %v4887 = vunpack.c.l.s4 1983009808
    %v4888 = vunpack.c.0.s8 %v4887
    %v4889 = vlaneseq
    %v4890 = vshrl.u32 %v4889, 7
    %v4891 = vsub.s32 %v4888, %v4890
    %v4892 = vrot.slane %v4878, %v4891
    %v4893 = vcombine.low %v4885, %v4892
    %v4894 = vcombine.low %v1646, %v1653
    %v4895 = vcombine.low %v1660, %v1667
    %v4897 = vunpack.c.l.s4 1983009808
    %v4898 = vunpack.c.0.s8 %v4897
    %v4899 = vlaneseq
    %v4900 = vshrl.u32 %v4899, 7
    %v4901 = vsub.s32 %v4898, %v4900
    %v4902 = vrot.slane %v4894, %v4901
    %v4904 = vunpack.c.l.s4 1983009808
    %v4905 = vunpack.c.0.s8 %v4904
    %v4906 = vlaneseq
    %v4907 = vshrl.u32 %v4906, 7
    %v4908 = vsub.s32 %v4905, %v4907
    %v4909 = vrot.slane %v4895, %v4908
    %v4910 = vcombine.low %v4902, %v4909
    %v4911 = vcombine.low %v1674, %v1681
    %v4912 = vcombine.low %v1688, %v1695
    %v4914 = vunpack.c.l.s4 1983009808
    %v4915 = vunpack.c.0.s8 %v4914
    %v4916 = vlaneseq
    %v4917 = vshrl.u32 %v4916, 7
    %v4918 = vsub.s32 %v4915, %v4917
    %v4919 = vrot.slane %v4911, %v4918
    %v4921 = vunpack.c.l.s4 1983009808
    %v4922 = vunpack.c.0.s8 %v4921
    %v4923 = vlaneseq
    %v4924 = vshrl.u32 %v4923, 7
    %v4925 = vsub.s32 %v4922, %v4924
    %v4926 = vrot.slane %v4912, %v4925
    %v4927 = vcombine.low %v4919, %v4926
    %v4928 = vcombine.low %v1702, %v1709
    %v4929 = vcombine.low %v1716, %v1723
    %v4931 = vunpack.c.l.s4 1983009808
    %v4932 = vunpack.c.0.s8 %v4931
    %v4933 = vlaneseq
    %v4934 = vshrl.u32 %v4933, 7
    %v4935 = vsub.s32 %v4932, %v4934
    %v4936 = vrot.slane %v4928, %v4935
    %v4938 = vunpack.c.l.s4 1983009808
    %v4939 = vunpack.c.0.s8 %v4938
    %v4940 = vlaneseq
    %v4941 = vshrl.u32 %v4940, 7
    %v4942 = vsub.s32 %v4939, %v4941
    %v4943 = vrot.slane %v4929, %v4942
    %v4944 = vcombine.low %v4936, %v4943
    %v4945 = vcombine.low %v1730, %v1737
    %v4946 = vcombine.low %v1744, %v1751
    %v4948 = vunpack.c.l.s4 1983009808
    %v4949 = vunpack.c.0.s8 %v4948
    %v4950 = vlaneseq
    %v4951 = vshrl.u32 %v4950, 7
    %v4952 = vsub.s32 %v4949, %v4951
    %v4953 = vrot.slane %v4945, %v4952
    %v4955 = vunpack.c.l.s4 1983009808
    %v4956 = vunpack.c.0.s8 %v4955
    %v4957 = vlaneseq
    %v4958 = vshrl.u32 %v4957, 7
    %v4959 = vsub.s32 %v4956, %v4958
    %v4960 = vrot.slane %v4946, %v4959
    %v4961 = vcombine.low %v4953, %v4960
    %v4962 = vcombine.low %v1758, %v1765
    %v4963 = vcombine.low %v1772, %v1779
    %v4965 = vunpack.c.l.s4 1983009808
    %v4966 = vunpack.c.0.s8 %v4965
    %v4967 = vlaneseq
    %v4968 = vshrl.u32 %v4967, 7
    %v4969 = vsub.s32 %v4966, %v4968
    %v4970 = vrot.slane %v4962, %v4969
    %v4972 = vunpack.c.l.s4 1983009808
    %v4973 = vunpack.c.0.s8 %v4972
    %v4974 = vlaneseq
    %v4975 = vshrl.u32 %v4974, 7
    %v4976 = vsub.s32 %v4973, %v4975
    %v4977 = vrot.slane %v4963, %v4976
    %v4978 = vcombine.low %v4970, %v4977
    %v4979 = vcombine.low %v1786, %v1793
    %v4980 = vcombine.low %v1800, %v1807
    %v4982 = vunpack.c.l.s4 1983009808
    %v4983 = vunpack.c.0.s8 %v4982
    %v4984 = vlaneseq
    %v4985 = vshrl.u32 %v4984, 7
    %v4986 = vsub.s32 %v4983, %v4985
    %v4987 = vrot.slane %v4979, %v4986
    %v4989 = vunpack.c.l.s4 1983009808
    %v4990 = vunpack.c.0.s8 %v4989
    %v4991 = vlaneseq
    %v4992 = vshrl.u32 %v4991, 7
    %v4993 = vsub.s32 %v4990, %v4992
    %v4994 = vrot.slane %v4980, %v4993
    %v4995 = vcombine.low %v4987, %v4994
    %v4996 = vcombine.low %v1814, %v1821
    %v4997 = vcombine.low %v1828, %v1835
    %v4999 = vunpack.c.l.s4 1983009808
    %v5000 = vunpack.c.0.s8 %v4999
    %v5001 = vlaneseq
    %v5002 = vshrl.u32 %v5001, 7
    %v5003 = vsub.s32 %v5000, %v5002
    %v5004 = vrot.slane %v4996, %v5003
    %v5006 = vunpack.c.l.s4 1983009808
    %v5007 = vunpack.c.0.s8 %v5006
    %v5008 = vlaneseq
    %v5009 = vshrl.u32 %v5008, 7
    %v5010 = vsub.s32 %v5007, %v5009
    %v5011 = vrot.slane %v4997, %v5010
    %v5012 = vcombine.low %v5004, %v5011
    %v5013 = vcombine.low %v1842, %v1849
    %v5014 = vcombine.low %v1856, %v1863
    %v5016 = vunpack.c.l.s4 1983009808
    %v5017 = vunpack.c.0.s8 %v5016
    %v5018 = vlaneseq
    %v5019 = vshrl.u32 %v5018, 7
    %v5020 = vsub.s32 %v5017, %v5019
    %v5021 = vrot.slane %v5013, %v5020
    %v5023 = vunpack.c.l.s4 1983009808
    %v5024 = vunpack.c.0.s8 %v5023
    %v5025 = vlaneseq
    %v5026 = vshrl.u32 %v5025, 7
    %v5027 = vsub.s32 %v5024, %v5026
    %v5028 = vrot.slane %v5014, %v5027
    %v5029 = vcombine.low %v5021, %v5028
    %v5030 = vcombine.low %v1870, %v1877
    %v5031 = vcombine.low %v1884, %v1891
    %v5033 = vunpack.c.l.s4 1983009808
    %v5034 = vunpack.c.0.s8 %v5033
    %v5035 = vlaneseq
    %v5036 = vshrl.u32 %v5035, 7
    %v5037 = vsub.s32 %v5034, %v5036
    %v5038 = vrot.slane %v5030, %v5037
    %v5040 = vunpack.c.l.s4 1983009808
    %v5041 = vunpack.c.0.s8 %v5040
    %v5042 = vlaneseq
    %v5043 = vshrl.u32 %v5042, 7
    %v5044 = vsub.s32 %v5041, %v5043
    %v5045 = vrot.slane %v5031, %v5044
    %v5046 = vcombine.low %v5038, %v5045
    %v5047 = vcombine.low %v1898, %v1905
    %v5048 = vcombine.low %v1912, %v1919
    %v5050 = vunpack.c.l.s4 1983009808
    %v5051 = vunpack.c.0.s8 %v5050
    %v5052 = vlaneseq
    %v5053 = vshrl.u32 %v5052, 7
    %v5054 = vsub.s32 %v5051, %v5053
    %v5055 = vrot.slane %v5047, %v5054
    %v5057 = vunpack.c.l.s4 1983009808
    %v5058 = vunpack.c.0.s8 %v5057
    %v5059 = vlaneseq
    %v5060 = vshrl.u32 %v5059, 7
    %v5061 = vsub.s32 %v5058, %v5060
    %v5062 = vrot.slane %v5048, %v5061
    %v5063 = vcombine.low %v5055, %v5062
    %v5064 = vcombine.low %v1926, %v1933
    %v5065 = vcombine.low %v1940, %v1947
    %v5067 = vunpack.c.l.s4 1983009808
    %v5068 = vunpack.c.0.s8 %v5067
    %v5069 = vlaneseq
    %v5070 = vshrl.u32 %v5069, 7
    %v5071 = vsub.s32 %v5068, %v5070
    %v5072 = vrot.slane %v5064, %v5071
    %v5074 = vunpack.c.l.s4 1983009808
    %v5075 = vunpack.c.0.s8 %v5074
    %v5076 = vlaneseq
    %v5077 = vshrl.u32 %v5076, 7
    %v5078 = vsub.s32 %v5075, %v5077
    %v5079 = vrot.slane %v5065, %v5078
    %v5080 = vcombine.low %v5072, %v5079
    %v5081 = vcombine.low %v1954, %v1961
    %v5082 = vcombine.low %v1968, %v1975
    %v5084 = vunpack.c.l.s4 1983009808
    %v5085 = vunpack.c.0.s8 %v5084
    %v5086 = vlaneseq
    %v5087 = vshrl.u32 %v5086, 7
    %v5088 = vsub.s32 %v5085, %v5087
    %v5089 = vrot.slane %v5081, %v5088
    %v5091 = vunpack.c.l.s4 1983009808
    %v5092 = vunpack.c.0.s8 %v5091
    %v5093 = vlaneseq
    %v5094 = vshrl.u32 %v5093, 7
    %v5095 = vsub.s32 %v5092, %v5094
    %v5096 = vrot.slane %v5082, %v5095
    %v5097 = vcombine.low %v5089, %v5096
    %v5098 = vcombine.low %v1982, %v1989
    %v5099 = vcombine.low %v1996, %v2003
    %v5101 = vunpack.c.l.s4 1983009808
    %v5102 = vunpack.c.0.s8 %v5101
    %v5103 = vlaneseq
    %v5104 = vshrl.u32 %v5103, 7
    %v5105 = vsub.s32 %v5102, %v5104
    %v5106 = vrot.slane %v5098, %v5105
    %v5108 = vunpack.c.l.s4 1983009808
    %v5109 = vunpack.c.0.s8 %v5108
    %v5110 = vlaneseq
    %v5111 = vshrl.u32 %v5110, 7
    %v5112 = vsub.s32 %v5109, %v5111
    %v5113 = vrot.slane %v5099, %v5112
    %v5114 = vcombine.low %v5106, %v5113
    %v5115 = vcombine.low %v2010, %v2017
    %v5116 = vcombine.low %v2024, %v2031
    %v5118 = vunpack.c.l.s4 1983009808
    %v5119 = vunpack.c.0.s8 %v5118
    %v5120 = vlaneseq
    %v5121 = vshrl.u32 %v5120, 7
    %v5122 = vsub.s32 %v5119, %v5121
    %v5123 = vrot.slane %v5115, %v5122
    %v5125 = vunpack.c.l.s4 1983009808
    %v5126 = vunpack.c.0.s8 %v5125
    %v5127 = vlaneseq
    %v5128 = vshrl.u32 %v5127, 7
    %v5129 = vsub.s32 %v5126, %v5128
    %v5130 = vrot.slane %v5116, %v5129
    %v5131 = vcombine.low %v5123, %v5130
    %v5132 = vcombine.low %v2038, %v2045
    %v5133 = vcombine.low %v2052, %v2059
    %v5135 = vunpack.c.l.s4 1983009808
    %v5136 = vunpack.c.0.s8 %v5135
    %v5137 = vlaneseq
    %v5138 = vshrl.u32 %v5137, 7
    %v5139 = vsub.s32 %v5136, %v5138
    %v5140 = vrot.slane %v5132, %v5139
    %v5142 = vunpack.c.l.s4 1983009808
    %v5143 = vunpack.c.0.s8 %v5142
    %v5144 = vlaneseq
    %v5145 = vshrl.u32 %v5144, 7
    %v5146 = vsub.s32 %v5143, %v5145
    %v5147 = vrot.slane %v5133, %v5146
    %v5148 = vcombine.low %v5140, %v5147
    %v5149 = vcombine.low %v2066, %v2073
    %v5150 = vcombine.low %v2080, %v2087
    %v5152 = vunpack.c.l.s4 1983009808
    %v5153 = vunpack.c.0.s8 %v5152
    %v5154 = vlaneseq
    %v5155 = vshrl.u32 %v5154, 7
    %v5156 = vsub.s32 %v5153, %v5155
    %v5157 = vrot.slane %v5149, %v5156
    %v5159 = vunpack.c.l.s4 1983009808
    %v5160 = vunpack.c.0.s8 %v5159
    %v5161 = vlaneseq
    %v5162 = vshrl.u32 %v5161, 7
    %v5163 = vsub.s32 %v5160, %v5162
    %v5164 = vrot.slane %v5150, %v5163
    %v5165 = vcombine.low %v5157, %v5164
    %v5166 = vcombine.low %v2094, %v2101
    %v5167 = vcombine.low %v2108, %v2115
    %v5169 = vunpack.c.l.s4 1983009808
    %v5170 = vunpack.c.0.s8 %v5169
    %v5171 = vlaneseq
    %v5172 = vshrl.u32 %v5171, 7
    %v5173 = vsub.s32 %v5170, %v5172
    %v5174 = vrot.slane %v5166, %v5173
    %v5176 = vunpack.c.l.s4 1983009808
    %v5177 = vunpack.c.0.s8 %v5176
    %v5178 = vlaneseq
    %v5179 = vshrl.u32 %v5178, 7
    %v5180 = vsub.s32 %v5177, %v5179
    %v5181 = vrot.slane %v5167, %v5180
    %v5182 = vcombine.low %v5174, %v5181
    %v5183 = vcombine.low %v2122, %v2129
    %v5184 = vcombine.low %v2136, %v2143
    %v5186 = vunpack.c.l.s4 1983009808
    %v5187 = vunpack.c.0.s8 %v5186
    %v5188 = vlaneseq
    %v5189 = vshrl.u32 %v5188, 7
    %v5190 = vsub.s32 %v5187, %v5189
    %v5191 = vrot.slane %v5183, %v5190
    %v5193 = vunpack.c.l.s4 1983009808
    %v5194 = vunpack.c.0.s8 %v5193
    %v5195 = vlaneseq
    %v5196 = vshrl.u32 %v5195, 7
    %v5197 = vsub.s32 %v5194, %v5196
    %v5198 = vrot.slane %v5184, %v5197
    %v5199 = vcombine.low %v5191, %v5198
    %v5200 = vcombine.low %v2150, %v2157
    %v5201 = vcombine.low %v2164, %v2171
    %v5203 = vunpack.c.l.s4 1983009808
    %v5204 = vunpack.c.0.s8 %v5203
    %v5205 = vlaneseq
    %v5206 = vshrl.u32 %v5205, 7
    %v5207 = vsub.s32 %v5204, %v5206
    %v5208 = vrot.slane %v5200, %v5207
    %v5210 = vunpack.c.l.s4 1983009808
    %v5211 = vunpack.c.0.s8 %v5210
    %v5212 = vlaneseq
    %v5213 = vshrl.u32 %v5212, 7
    %v5214 = vsub.s32 %v5211, %v5213
    %v5215 = vrot.slane %v5201, %v5214
    %v5216 = vcombine.low %v5208, %v5215
    %v5217 = vcombine.low %v2178, %v2185
    %v5218 = vcombine.low %v2192, %v2199
    %v5220 = vunpack.c.l.s4 1983009808
    %v5221 = vunpack.c.0.s8 %v5220
    %v5222 = vlaneseq
    %v5223 = vshrl.u32 %v5222, 7
    %v5224 = vsub.s32 %v5221, %v5223
    %v5225 = vrot.slane %v5217, %v5224
    %v5227 = vunpack.c.l.s4 1983009808
    %v5228 = vunpack.c.0.s8 %v5227
    %v5229 = vlaneseq
    %v5230 = vshrl.u32 %v5229, 7
    %v5231 = vsub.s32 %v5228, %v5230
    %v5232 = vrot.slane %v5218, %v5231
    %v5233 = vcombine.low %v5225, %v5232
    %v5234 = vcombine.low %v2206, %v2213
    %v5235 = vcombine.low %v2220, %v2227
    %v5237 = vunpack.c.l.s4 1983009808
    %v5238 = vunpack.c.0.s8 %v5237
    %v5239 = vlaneseq
    %v5240 = vshrl.u32 %v5239, 7
    %v5241 = vsub.s32 %v5238, %v5240
    %v5242 = vrot.slane %v5234, %v5241
    %v5244 = vunpack.c.l.s4 1983009808
    %v5245 = vunpack.c.0.s8 %v5244
    %v5246 = vlaneseq
    %v5247 = vshrl.u32 %v5246, 7
    %v5248 = vsub.s32 %v5245, %v5247
    %v5249 = vrot.slane %v5235, %v5248
    %v5250 = vcombine.low %v5242, %v5249
    %v5251 = vcombine.low %v2234, %v2241
    %v5252 = vcombine.low %v2248, %v2255
    %v5254 = vunpack.c.l.s4 1983009808
    %v5255 = vunpack.c.0.s8 %v5254
    %v5256 = vlaneseq
    %v5257 = vshrl.u32 %v5256, 7
    %v5258 = vsub.s32 %v5255, %v5257
    %v5259 = vrot.slane %v5251, %v5258
    %v5261 = vunpack.c.l.s4 1983009808
    %v5262 = vunpack.c.0.s8 %v5261
    %v5263 = vlaneseq
    %v5264 = vshrl.u32 %v5263, 7
    %v5265 = vsub.s32 %v5262, %v5264
    %v5266 = vrot.slane %v5252, %v5265
    %v5267 = vcombine.low %v5259, %v5266
    %v5268 = vcombine.low %v2262, %v2269
    %v5269 = vcombine.low %v2276, %v2283
    %v5271 = vunpack.c.l.s4 1983009808
    %v5272 = vunpack.c.0.s8 %v5271
    %v5273 = vlaneseq
    %v5274 = vshrl.u32 %v5273, 7
    %v5275 = vsub.s32 %v5272, %v5274
    %v5276 = vrot.slane %v5268, %v5275
    %v5278 = vunpack.c.l.s4 1983009808
    %v5279 = vunpack.c.0.s8 %v5278
    %v5280 = vlaneseq
    %v5281 = vshrl.u32 %v5280, 7
    %v5282 = vsub.s32 %v5279, %v5281
    %v5283 = vrot.slane %v5269, %v5282
    %v5284 = vcombine.low %v5276, %v5283
    %v5285 = vcombine.low %v2290, %v2297
    %v5286 = vcombine.low %v2304, %v2311
    %v5288 = vunpack.c.l.s4 1983009808
    %v5289 = vunpack.c.0.s8 %v5288
    %v5290 = vlaneseq
    %v5291 = vshrl.u32 %v5290, 7
    %v5292 = vsub.s32 %v5289, %v5291
    %v5293 = vrot.slane %v5285, %v5292
    %v5295 = vunpack.c.l.s4 1983009808
    %v5296 = vunpack.c.0.s8 %v5295
    %v5297 = vlaneseq
    %v5298 = vshrl.u32 %v5297, 7
    %v5299 = vsub.s32 %v5296, %v5298
    %v5300 = vrot.slane %v5286, %v5299
    %v5301 = vcombine.low %v5293, %v5300
    %v5302 = vcombine.low %v2318, %v2325
    %v5303 = vcombine.low %v2332, %v2339
    %v5305 = vunpack.c.l.s4 1983009808
    %v5306 = vunpack.c.0.s8 %v5305
    %v5307 = vlaneseq
    %v5308 = vshrl.u32 %v5307, 7
    %v5309 = vsub.s32 %v5306, %v5308
    %v5310 = vrot.slane %v5302, %v5309
    %v5312 = vunpack.c.l.s4 1983009808
    %v5313 = vunpack.c.0.s8 %v5312
    %v5314 = vlaneseq
    %v5315 = vshrl.u32 %v5314, 7
    %v5316 = vsub.s32 %v5313, %v5315
    %v5317 = vrot.slane %v5303, %v5316
    %v5318 = vcombine.low %v5310, %v5317
    %v5319 = vcombine.low %v2346, %v2353
    %v5320 = vcombine.low %v2360, %v2367
    %v5322 = vunpack.c.l.s4 1983009808
    %v5323 = vunpack.c.0.s8 %v5322
    %v5324 = vlaneseq
    %v5325 = vshrl.u32 %v5324, 7
    %v5326 = vsub.s32 %v5323, %v5325
    %v5327 = vrot.slane %v5319, %v5326
    %v5329 = vunpack.c.l.s4 1983009808
    %v5330 = vunpack.c.0.s8 %v5329
    %v5331 = vlaneseq
    %v5332 = vshrl.u32 %v5331, 7
    %v5333 = vsub.s32 %v5330, %v5332
    %v5334 = vrot.slane %v5320, %v5333
    %v5335 = vcombine.low %v5327, %v5334
    %v5336 = vcombine.low %v2374, %v2381
    %v5337 = vcombine.low %v2388, %v2395
    %v5339 = vunpack.c.l.s4 1983009808
    %v5340 = vunpack.c.0.s8 %v5339
    %v5341 = vlaneseq
    %v5342 = vshrl.u32 %v5341, 7
    %v5343 = vsub.s32 %v5340, %v5342
    %v5344 = vrot.slane %v5336, %v5343
    %v5346 = vunpack.c.l.s4 1983009808
    %v5347 = vunpack.c.0.s8 %v5346
    %v5348 = vlaneseq
    %v5349 = vshrl.u32 %v5348, 7
    %v5350 = vsub.s32 %v5347, %v5349
    %v5351 = vrot.slane %v5337, %v5350
    %v5352 = vcombine.low %v5344, %v5351
    %v5353 = vcombine.low %v2402, %v2409
    %v5354 = vcombine.low %v2416, %v2423
    %v5356 = vunpack.c.l.s4 1983009808
    %v5357 = vunpack.c.0.s8 %v5356
    %v5358 = vlaneseq
    %v5359 = vshrl.u32 %v5358, 7
    %v5360 = vsub.s32 %v5357, %v5359
    %v5361 = vrot.slane %v5353, %v5360
    %v5363 = vunpack.c.l.s4 1983009808
    %v5364 = vunpack.c.0.s8 %v5363
    %v5365 = vlaneseq
    %v5366 = vshrl.u32 %v5365, 7
    %v5367 = vsub.s32 %v5364, %v5366
    %v5368 = vrot.slane %v5354, %v5367
    %v5369 = vcombine.low %v5361, %v5368
    %v5370 = vcombine.low %v2430, %v2437
    %v5371 = vcombine.low %v2444, %v2451
    %v5373 = vunpack.c.l.s4 1983009808
    %v5374 = vunpack.c.0.s8 %v5373
    %v5375 = vlaneseq
    %v5376 = vshrl.u32 %v5375, 7
    %v5377 = vsub.s32 %v5374, %v5376
    %v5378 = vrot.slane %v5370, %v5377
    %v5380 = vunpack.c.l.s4 1983009808
    %v5381 = vunpack.c.0.s8 %v5380
    %v5382 = vlaneseq
    %v5383 = vshrl.u32 %v5382, 7
    %v5384 = vsub.s32 %v5381, %v5383
    %v5385 = vrot.slane %v5371, %v5384
    %v5386 = vcombine.low %v5378, %v5385
    %v5387 = vcombine.low %v2458, %v2465
    %v5388 = vcombine.low %v2472, %v2479
    %v5390 = vunpack.c.l.s4 1983009808
    %v5391 = vunpack.c.0.s8 %v5390
    %v5392 = vlaneseq
    %v5393 = vshrl.u32 %v5392, 7
    %v5394 = vsub.s32 %v5391, %v5393
    %v5395 = vrot.slane %v5387, %v5394
    %v5397 = vunpack.c.l.s4 1983009808
    %v5398 = vunpack.c.0.s8 %v5397
    %v5399 = vlaneseq
    %v5400 = vshrl.u32 %v5399, 7
    %v5401 = vsub.s32 %v5398, %v5400
    %v5402 = vrot.slane %v5388, %v5401
    %v5403 = vcombine.low %v5395, %v5402
    %v5404 = vcombine.low %v2486, %v2493
    %v5405 = vcombine.low %v2500, %v2507
    %v5407 = vunpack.c.l.s4 1983009808
    %v5408 = vunpack.c.0.s8 %v5407
    %v5409 = vlaneseq
    %v5410 = vshrl.u32 %v5409, 7
    %v5411 = vsub.s32 %v5408, %v5410
    %v5412 = vrot.slane %v5404, %v5411
    %v5414 = vunpack.c.l.s4 1983009808
    %v5415 = vunpack.c.0.s8 %v5414
    %v5416 = vlaneseq
    %v5417 = vshrl.u32 %v5416, 7
    %v5418 = vsub.s32 %v5415, %v5417
    %v5419 = vrot.slane %v5405, %v5418
    %v5420 = vcombine.low %v5412, %v5419
    %v5421 = vcombine.low %v2514, %v2521
    %v5422 = vcombine.low %v2528, %v2535
    %v5424 = vunpack.c.l.s4 1983009808
    %v5425 = vunpack.c.0.s8 %v5424
    %v5426 = vlaneseq
    %v5427 = vshrl.u32 %v5426, 7
    %v5428 = vsub.s32 %v5425, %v5427
    %v5429 = vrot.slane %v5421, %v5428
    %v5431 = vunpack.c.l.s4 1983009808
    %v5432 = vunpack.c.0.s8 %v5431
    %v5433 = vlaneseq
    %v5434 = vshrl.u32 %v5433, 7
    %v5435 = vsub.s32 %v5432, %v5434
    %v5436 = vrot.slane %v5422, %v5435
    %v5437 = vcombine.low %v5429, %v5436
    %v5438 = vcombine.low %v2542, %v2549
    %v5439 = vcombine.low %v2556, %v2563
    %v5441 = vunpack.c.l.s4 1983009808
    %v5442 = vunpack.c.0.s8 %v5441
    %v5443 = vlaneseq
    %v5444 = vshrl.u32 %v5443, 7
    %v5445 = vsub.s32 %v5442, %v5444
    %v5446 = vrot.slane %v5438, %v5445
    %v5448 = vunpack.c.l.s4 1983009808
    %v5449 = vunpack.c.0.s8 %v5448
    %v5450 = vlaneseq
    %v5451 = vshrl.u32 %v5450, 7
    %v5452 = vsub.s32 %v5449, %v5451
    %v5453 = vrot.slane %v5439, %v5452
    %v5454 = vcombine.low %v5446, %v5453
    %v5455 = vcombine.low %v2570, %v2577
    %v5456 = vcombine.low %v2584, %v2591
    %v5458 = vunpack.c.l.s4 1983009808
    %v5459 = vunpack.c.0.s8 %v5458
    %v5460 = vlaneseq
    %v5461 = vshrl.u32 %v5460, 7
    %v5462 = vsub.s32 %v5459, %v5461
    %v5463 = vrot.slane %v5455, %v5462
    %v5465 = vunpack.c.l.s4 1983009808
    %v5466 = vunpack.c.0.s8 %v5465
    %v5467 = vlaneseq
    %v5468 = vshrl.u32 %v5467, 7
    %v5469 = vsub.s32 %v5466, %v5468
    %v5470 = vrot.slane %v5456, %v5469
    %v5471 = vcombine.low %v5463, %v5470
    %v5472 = vcombine.low %v2598, %v2605
    %v5473 = vcombine.low %v2612, %v2619
    %v5475 = vunpack.c.l.s4 1983009808
    %v5476 = vunpack.c.0.s8 %v5475
    %v5477 = vlaneseq
    %v5478 = vshrl.u32 %v5477, 7
    %v5479 = vsub.s32 %v5476, %v5478
    %v5480 = vrot.slane %v5472, %v5479
    %v5482 = vunpack.c.l.s4 1983009808
    %v5483 = vunpack.c.0.s8 %v5482
    %v5484 = vlaneseq
    %v5485 = vshrl.u32 %v5484, 7
    %v5486 = vsub.s32 %v5483, %v5485
    %v5487 = vrot.slane %v5473, %v5486
    %v5488 = vcombine.low %v5480, %v5487
    %v5489 = vcombine.low %v2626, %v2633
    %v5490 = vcombine.low %v2640, %v2647
    %v5492 = vunpack.c.l.s4 1983009808
    %v5493 = vunpack.c.0.s8 %v5492
    %v5494 = vlaneseq
    %v5495 = vshrl.u32 %v5494, 7
    %v5496 = vsub.s32 %v5493, %v5495
    %v5497 = vrot.slane %v5489, %v5496
    %v5499 = vunpack.c.l.s4 1983009808
    %v5500 = vunpack.c.0.s8 %v5499
    %v5501 = vlaneseq
    %v5502 = vshrl.u32 %v5501, 7
    %v5503 = vsub.s32 %v5500, %v5502
    %v5504 = vrot.slane %v5490, %v5503
    %v5505 = vcombine.low %v5497, %v5504
    %v5506 = vcombine.low %v2654, %v2661
    %v5507 = vcombine.low %v2668, %v2675
    %v5509 = vunpack.c.l.s4 1983009808
    %v5510 = vunpack.c.0.s8 %v5509
    %v5511 = vlaneseq
    %v5512 = vshrl.u32 %v5511, 7
    %v5513 = vsub.s32 %v5510, %v5512
    %v5514 = vrot.slane %v5506, %v5513
    %v5516 = vunpack.c.l.s4 1983009808
    %v5517 = vunpack.c.0.s8 %v5516
    %v5518 = vlaneseq
    %v5519 = vshrl.u32 %v5518, 7
    %v5520 = vsub.s32 %v5517, %v5519
    %v5521 = vrot.slane %v5507, %v5520
    %v5522 = vcombine.low %v5514, %v5521
    %v5523 = vcombine.low %v2682, %v2689
    %v5524 = vcombine.low %v2696, %v2703
    %v5526 = vunpack.c.l.s4 1983009808
    %v5527 = vunpack.c.0.s8 %v5526
    %v5528 = vlaneseq
    %v5529 = vshrl.u32 %v5528, 7
    %v5530 = vsub.s32 %v5527, %v5529
    %v5531 = vrot.slane %v5523, %v5530
    %v5533 = vunpack.c.l.s4 1983009808
    %v5534 = vunpack.c.0.s8 %v5533
    %v5535 = vlaneseq
    %v5536 = vshrl.u32 %v5535, 7
    %v5537 = vsub.s32 %v5534, %v5536
    %v5538 = vrot.slane %v5524, %v5537
    %v5539 = vcombine.low %v5531, %v5538
    %v5540 = vcombine.low %v2710, %v2717
    %v5541 = vcombine.low %v2724, %v2731
    %v5543 = vunpack.c.l.s4 1983009808
    %v5544 = vunpack.c.0.s8 %v5543
    %v5545 = vlaneseq
    %v5546 = vshrl.u32 %v5545, 7
    %v5547 = vsub.s32 %v5544, %v5546
    %v5548 = vrot.slane %v5540, %v5547
    %v5550 = vunpack.c.l.s4 1983009808
    %v5551 = vunpack.c.0.s8 %v5550
    %v5552 = vlaneseq
    %v5553 = vshrl.u32 %v5552, 7
    %v5554 = vsub.s32 %v5551, %v5553
    %v5555 = vrot.slane %v5541, %v5554
    %v5556 = vcombine.low %v5548, %v5555
    %v5557 = vcombine.low %v2738, %v2745
    %v5558 = vcombine.low %v2752, %v2759
    %v5560 = vunpack.c.l.s4 1983009808
    %v5561 = vunpack.c.0.s8 %v5560
    %v5562 = vlaneseq
    %v5563 = vshrl.u32 %v5562, 7
    %v5564 = vsub.s32 %v5561, %v5563
    %v5565 = vrot.slane %v5557, %v5564
    %v5567 = vunpack.c.l.s4 1983009808
    %v5568 = vunpack.c.0.s8 %v5567
    %v5569 = vlaneseq
    %v5570 = vshrl.u32 %v5569, 7
    %v5571 = vsub.s32 %v5568, %v5570
    %v5572 = vrot.slane %v5558, %v5571
    %v5573 = vcombine.low %v5565, %v5572
    %v5574 = vcombine.low %v2766, %v2773
    %v5575 = vcombine.low %v2780, %v2787
    %v5577 = vunpack.c.l.s4 1983009808
    %v5578 = vunpack.c.0.s8 %v5577
    %v5579 = vlaneseq
    %v5580 = vshrl.u32 %v5579, 7
    %v5581 = vsub.s32 %v5578, %v5580
    %v5582 = vrot.slane %v5574, %v5581
    %v5584 = vunpack.c.l.s4 1983009808
    %v5585 = vunpack.c.0.s8 %v5584
    %v5586 = vlaneseq
    %v5587 = vshrl.u32 %v5586, 7
    %v5588 = vsub.s32 %v5585, %v5587
    %v5589 = vrot.slane %v5575, %v5588
    %v5590 = vcombine.low %v5582, %v5589
    %v5591 = vcombine.low %v2794, %v2801
    %v5592 = vcombine.low %v2808, %v2815
    %v5594 = vunpack.c.l.s4 1983009808
    %v5595 = vunpack.c.0.s8 %v5594
    %v5596 = vlaneseq
    %v5597 = vshrl.u32 %v5596, 7
    %v5598 = vsub.s32 %v5595, %v5597
    %v5599 = vrot.slane %v5591, %v5598
    %v5601 = vunpack.c.l.s4 1983009808
    %v5602 = vunpack.c.0.s8 %v5601
    %v5603 = vlaneseq
    %v5604 = vshrl.u32 %v5603, 7
    %v5605 = vsub.s32 %v5602, %v5604
    %v5606 = vrot.slane %v5592, %v5605
    %v5607 = vcombine.low %v5599, %v5606
    %v5608 = vcombine.low %v2822, %v2829
    %v5609 = vcombine.low %v2836, %v2843
    %v5611 = vunpack.c.l.s4 1983009808
    %v5612 = vunpack.c.0.s8 %v5611
    %v5613 = vlaneseq
    %v5614 = vshrl.u32 %v5613, 7
    %v5615 = vsub.s32 %v5612, %v5614
    %v5616 = vrot.slane %v5608, %v5615
    %v5618 = vunpack.c.l.s4 1983009808
    %v5619 = vunpack.c.0.s8 %v5618
    %v5620 = vlaneseq
    %v5621 = vshrl.u32 %v5620, 7
    %v5622 = vsub.s32 %v5619, %v5621
    %v5623 = vrot.slane %v5609, %v5622
    %v5624 = vcombine.low %v5616, %v5623
    %v5625 = vcombine.low %v2850, %v2857
    %v5626 = vcombine.low %v2864, %v2871
    %v5628 = vunpack.c.l.s4 1983009808
    %v5629 = vunpack.c.0.s8 %v5628
    %v5630 = vlaneseq
    %v5631 = vshrl.u32 %v5630, 7
    %v5632 = vsub.s32 %v5629, %v5631
    %v5633 = vrot.slane %v5625, %v5632
    %v5635 = vunpack.c.l.s4 1983009808
    %v5636 = vunpack.c.0.s8 %v5635
    %v5637 = vlaneseq
    %v5638 = vshrl.u32 %v5637, 7
    %v5639 = vsub.s32 %v5636, %v5638
    %v5640 = vrot.slane %v5626, %v5639
    %v5641 = vcombine.low %v5633, %v5640
    %v5642 = vcombine.low %v2878, %v2885
    %v5643 = vcombine.low %v2892, %v2899
    %v5645 = vunpack.c.l.s4 1983009808
    %v5646 = vunpack.c.0.s8 %v5645
    %v5647 = vlaneseq
    %v5648 = vshrl.u32 %v5647, 7
    %v5649 = vsub.s32 %v5646, %v5648
    %v5650 = vrot.slane %v5642, %v5649
    %v5652 = vunpack.c.l.s4 1983009808
    %v5653 = vunpack.c.0.s8 %v5652
    %v5654 = vlaneseq
    %v5655 = vshrl.u32 %v5654, 7
    %v5656 = vsub.s32 %v5653, %v5655
    %v5657 = vrot.slane %v5643, %v5656
    %v5658 = vcombine.low %v5650, %v5657
    %v5659 = vcombine.low %v2906, %v2913
    %v5660 = vcombine.low %v2920, %v2927
    %v5662 = vunpack.c.l.s4 1983009808
    %v5663 = vunpack.c.0.s8 %v5662
    %v5664 = vlaneseq
    %v5665 = vshrl.u32 %v5664, 7
    %v5666 = vsub.s32 %v5663, %v5665
    %v5667 = vrot.slane %v5659, %v5666
    %v5669 = vunpack.c.l.s4 1983009808
    %v5670 = vunpack.c.0.s8 %v5669
    %v5671 = vlaneseq
    %v5672 = vshrl.u32 %v5671, 7
    %v5673 = vsub.s32 %v5670, %v5672
    %v5674 = vrot.slane %v5660, %v5673
    %v5675 = vcombine.low %v5667, %v5674
    %v5676 = vcombine.low %v2934, %v2941
    %v5677 = vcombine.low %v2948, %v2955
    %v5679 = vunpack.c.l.s4 1983009808
    %v5680 = vunpack.c.0.s8 %v5679
    %v5681 = vlaneseq
    %v5682 = vshrl.u32 %v5681, 7
    %v5683 = vsub.s32 %v5680, %v5682
    %v5684 = vrot.slane %v5676, %v5683
    %v5686 = vunpack.c.l.s4 1983009808
    %v5687 = vunpack.c.0.s8 %v5686
    %v5688 = vlaneseq
    %v5689 = vshrl.u32 %v5688, 7
    %v5690 = vsub.s32 %v5687, %v5689
    %v5691 = vrot.slane %v5677, %v5690
    %v5692 = vcombine.low %v5684, %v5691
    %v5693 = vcombine.low %v2962, %v2969
    %v5694 = vcombine.low %v2976, %v2983
    %v5696 = vunpack.c.l.s4 1983009808
    %v5697 = vunpack.c.0.s8 %v5696
    %v5698 = vlaneseq
    %v5699 = vshrl.u32 %v5698, 7
    %v5700 = vsub.s32 %v5697, %v5699
    %v5701 = vrot.slane %v5693, %v5700
    %v5703 = vunpack.c.l.s4 1983009808
    %v5704 = vunpack.c.0.s8 %v5703
    %v5705 = vlaneseq
    %v5706 = vshrl.u32 %v5705, 7
    %v5707 = vsub.s32 %v5704, %v5706
    %v5708 = vrot.slane %v5694, %v5707
    %v5709 = vcombine.low %v5701, %v5708
    %v5710 = vcombine.low %v2990, %v2997
    %v5711 = vcombine.low %v3004, %v3011
    %v5713 = vunpack.c.l.s4 1983009808
    %v5714 = vunpack.c.0.s8 %v5713
    %v5715 = vlaneseq
    %v5716 = vshrl.u32 %v5715, 7
    %v5717 = vsub.s32 %v5714, %v5716
    %v5718 = vrot.slane %v5710, %v5717
    %v5720 = vunpack.c.l.s4 1983009808
    %v5721 = vunpack.c.0.s8 %v5720
    %v5722 = vlaneseq
    %v5723 = vshrl.u32 %v5722, 7
    %v5724 = vsub.s32 %v5721, %v5723
    %v5725 = vrot.slane %v5711, %v5724
    %v5726 = vcombine.low %v5718, %v5725
    %v5727 = vcombine.low %v3018, %v3025
    %v5728 = vcombine.low %v3032, %v3039
    %v5730 = vunpack.c.l.s4 1983009808
    %v5731 = vunpack.c.0.s8 %v5730
    %v5732 = vlaneseq
    %v5733 = vshrl.u32 %v5732, 7
    %v5734 = vsub.s32 %v5731, %v5733
    %v5735 = vrot.slane %v5727, %v5734
    %v5737 = vunpack.c.l.s4 1983009808
    %v5738 = vunpack.c.0.s8 %v5737
    %v5739 = vlaneseq
    %v5740 = vshrl.u32 %v5739, 7
    %v5741 = vsub.s32 %v5738, %v5740
    %v5742 = vrot.slane %v5728, %v5741
    %v5743 = vcombine.low %v5735, %v5742
    %v5744 = vcombine.low %v3046, %v3053
    %v5745 = vcombine.low %v3060, %v3067
    %v5747 = vunpack.c.l.s4 1983009808
    %v5748 = vunpack.c.0.s8 %v5747
    %v5749 = vlaneseq
    %v5750 = vshrl.u32 %v5749, 7
    %v5751 = vsub.s32 %v5748, %v5750
    %v5752 = vrot.slane %v5744, %v5751
    %v5754 = vunpack.c.l.s4 1983009808
    %v5755 = vunpack.c.0.s8 %v5754
    %v5756 = vlaneseq
    %v5757 = vshrl.u32 %v5756, 7
    %v5758 = vsub.s32 %v5755, %v5757
    %v5759 = vrot.slane %v5745, %v5758
    %v5760 = vcombine.low %v5752, %v5759
    %v5761 = vcombine.low %v3074, %v3081
    %v5762 = vcombine.low %v3088, %v3095
    %v5764 = vunpack.c.l.s4 1983009808
    %v5765 = vunpack.c.0.s8 %v5764
    %v5766 = vlaneseq
    %v5767 = vshrl.u32 %v5766, 7
    %v5768 = vsub.s32 %v5765, %v5767
    %v5769 = vrot.slane %v5761, %v5768
    %v5771 = vunpack.c.l.s4 1983009808
    %v5772 = vunpack.c.0.s8 %v5771
    %v5773 = vlaneseq
    %v5774 = vshrl.u32 %v5773, 7
    %v5775 = vsub.s32 %v5772, %v5774
    %v5776 = vrot.slane %v5762, %v5775
    %v5777 = vcombine.low %v5769, %v5776
    %v5778 = vcombine.low %v3102, %v3109
    %v5779 = vcombine.low %v3116, %v3123
    %v5781 = vunpack.c.l.s4 1983009808
    %v5782 = vunpack.c.0.s8 %v5781
    %v5783 = vlaneseq
    %v5784 = vshrl.u32 %v5783, 7
    %v5785 = vsub.s32 %v5782, %v5784
    %v5786 = vrot.slane %v5778, %v5785
    %v5788 = vunpack.c.l.s4 1983009808
    %v5789 = vunpack.c.0.s8 %v5788
    %v5790 = vlaneseq
    %v5791 = vshrl.u32 %v5790, 7
    %v5792 = vsub.s32 %v5789, %v5791
    %v5793 = vrot.slane %v5779, %v5792
    %v5794 = vcombine.low %v5786, %v5793
    %v5795 = vcombine.low %v3130, %v3137
    %v5796 = vcombine.low %v3144, %v3151
    %v5798 = vunpack.c.l.s4 1983009808
    %v5799 = vunpack.c.0.s8 %v5798
    %v5800 = vlaneseq
    %v5801 = vshrl.u32 %v5800, 7
    %v5802 = vsub.s32 %v5799, %v5801
    %v5803 = vrot.slane %v5795, %v5802
    %v5805 = vunpack.c.l.s4 1983009808
    %v5806 = vunpack.c.0.s8 %v5805
    %v5807 = vlaneseq
    %v5808 = vshrl.u32 %v5807, 7
    %v5809 = vsub.s32 %v5806, %v5808
    %v5810 = vrot.slane %v5796, %v5809
    %v5811 = vcombine.low %v5803, %v5810
    %v5812 = vcombine.low %v3158, %v3165
    %v5813 = vcombine.low %v3172, %v3179
    %v5815 = vunpack.c.l.s4 1983009808
    %v5816 = vunpack.c.0.s8 %v5815
    %v5817 = vlaneseq
    %v5818 = vshrl.u32 %v5817, 7
    %v5819 = vsub.s32 %v5816, %v5818
    %v5820 = vrot.slane %v5812, %v5819
    %v5822 = vunpack.c.l.s4 1983009808
    %v5823 = vunpack.c.0.s8 %v5822
    %v5824 = vlaneseq
    %v5825 = vshrl.u32 %v5824, 7
    %v5826 = vsub.s32 %v5823, %v5825
    %v5827 = vrot.slane %v5813, %v5826
    %v5828 = vcombine.low %v5820, %v5827
    %v5829 = vcombine.low %v3186, %v3193
    %v5830 = vcombine.low %v3200, %v3207
    %v5832 = vunpack.c.l.s4 1983009808
    %v5833 = vunpack.c.0.s8 %v5832
    %v5834 = vlaneseq
    %v5835 = vshrl.u32 %v5834, 7
    %v5836 = vsub.s32 %v5833, %v5835
    %v5837 = vrot.slane %v5829, %v5836
    %v5839 = vunpack.c.l.s4 1983009808
    %v5840 = vunpack.c.0.s8 %v5839
    %v5841 = vlaneseq
    %v5842 = vshrl.u32 %v5841, 7
    %v5843 = vsub.s32 %v5840, %v5842
    %v5844 = vrot.slane %v5830, %v5843
    %v5845 = vcombine.low %v5837, %v5844
    %v5846 = vcombine.low %v3214, %v3221
    %v5847 = vcombine.low %v3228, %v3235
    %v5849 = vunpack.c.l.s4 1983009808
    %v5850 = vunpack.c.0.s8 %v5849
    %v5851 = vlaneseq
    %v5852 = vshrl.u32 %v5851, 7
    %v5853 = vsub.s32 %v5850, %v5852
    %v5854 = vrot.slane %v5846, %v5853
    %v5856 = vunpack.c.l.s4 1983009808
    %v5857 = vunpack.c.0.s8 %v5856
    %v5858 = vlaneseq
    %v5859 = vshrl.u32 %v5858, 7
    %v5860 = vsub.s32 %v5857, %v5859
    %v5861 = vrot.slane %v5847, %v5860
    %v5862 = vcombine.low %v5854, %v5861
    %v5863 = vcombine.low %v3242, %v3249
    %v5864 = vcombine.low %v3256, %v3263
    %v5866 = vunpack.c.l.s4 1983009808
    %v5867 = vunpack.c.0.s8 %v5866
    %v5868 = vlaneseq
    %v5869 = vshrl.u32 %v5868, 7
    %v5870 = vsub.s32 %v5867, %v5869
    %v5871 = vrot.slane %v5863, %v5870
    %v5873 = vunpack.c.l.s4 1983009808
    %v5874 = vunpack.c.0.s8 %v5873
    %v5875 = vlaneseq
    %v5876 = vshrl.u32 %v5875, 7
    %v5877 = vsub.s32 %v5874, %v5876
    %v5878 = vrot.slane %v5864, %v5877
    %v5879 = vcombine.low %v5871, %v5878
    %v5880 = vcombine.low %v3270, %v3277
    %v5881 = vcombine.low %v3284, %v3291
    %v5883 = vunpack.c.l.s4 1983009808
    %v5884 = vunpack.c.0.s8 %v5883
    %v5885 = vlaneseq
    %v5886 = vshrl.u32 %v5885, 7
    %v5887 = vsub.s32 %v5884, %v5886
    %v5888 = vrot.slane %v5880, %v5887
    %v5890 = vunpack.c.l.s4 1983009808
    %v5891 = vunpack.c.0.s8 %v5890
    %v5892 = vlaneseq
    %v5893 = vshrl.u32 %v5892, 7
    %v5894 = vsub.s32 %v5891, %v5893
    %v5895 = vrot.slane %v5881, %v5894
    %v5896 = vcombine.low %v5888, %v5895
    %v5897 = vcombine.low %v3298, %v3305
    %v5898 = vcombine.low %v3312, %v3319
    %v5900 = vunpack.c.l.s4 1983009808
    %v5901 = vunpack.c.0.s8 %v5900
    %v5902 = vlaneseq
    %v5903 = vshrl.u32 %v5902, 7
    %v5904 = vsub.s32 %v5901, %v5903
    %v5905 = vrot.slane %v5897, %v5904
    %v5907 = vunpack.c.l.s4 1983009808
    %v5908 = vunpack.c.0.s8 %v5907
    %v5909 = vlaneseq
    %v5910 = vshrl.u32 %v5909, 7
    %v5911 = vsub.s32 %v5908, %v5910
    %v5912 = vrot.slane %v5898, %v5911
    %v5913 = vcombine.low %v5905, %v5912
    %v5914 = vcombine.low %v3326, %v3333
    %v5915 = vcombine.low %v3340, %v3347
    %v5917 = vunpack.c.l.s4 1983009808
    %v5918 = vunpack.c.0.s8 %v5917
    %v5919 = vlaneseq
    %v5920 = vshrl.u32 %v5919, 7
    %v5921 = vsub.s32 %v5918, %v5920
    %v5922 = vrot.slane %v5914, %v5921
    %v5924 = vunpack.c.l.s4 1983009808
    %v5925 = vunpack.c.0.s8 %v5924
    %v5926 = vlaneseq
    %v5927 = vshrl.u32 %v5926, 7
    %v5928 = vsub.s32 %v5925, %v5927
    %v5929 = vrot.slane %v5915, %v5928
    %v5930 = vcombine.low %v5922, %v5929
    %v5931 = vcombine.low %v3354, %v3361
    %v5932 = vcombine.low %v3368, %v3375
    %v5934 = vunpack.c.l.s4 1983009808
    %v5935 = vunpack.c.0.s8 %v5934
    %v5936 = vlaneseq
    %v5937 = vshrl.u32 %v5936, 7
    %v5938 = vsub.s32 %v5935, %v5937
    %v5939 = vrot.slane %v5931, %v5938
    %v5941 = vunpack.c.l.s4 1983009808
    %v5942 = vunpack.c.0.s8 %v5941
    %v5943 = vlaneseq
    %v5944 = vshrl.u32 %v5943, 7
    %v5945 = vsub.s32 %v5942, %v5944
    %v5946 = vrot.slane %v5932, %v5945
    %v5947 = vcombine.low %v5939, %v5946
    %v5948 = vcombine.low %v3382, %v3389
    %v5949 = vcombine.low %v3396, %v3403
    %v5951 = vunpack.c.l.s4 1983009808
    %v5952 = vunpack.c.0.s8 %v5951
    %v5953 = vlaneseq
    %v5954 = vshrl.u32 %v5953, 7
    %v5955 = vsub.s32 %v5952, %v5954
    %v5956 = vrot.slane %v5948, %v5955
    %v5958 = vunpack.c.l.s4 1983009808
    %v5959 = vunpack.c.0.s8 %v5958
    %v5960 = vlaneseq
    %v5961 = vshrl.u32 %v5960, 7
    %v5962 = vsub.s32 %v5959, %v5961
    %v5963 = vrot.slane %v5949, %v5962
    %v5964 = vcombine.low %v5956, %v5963
    %v5965 = vcombine.low %v3410, %v3417
    %v5966 = vcombine.low %v3424, %v3431
    %v5968 = vunpack.c.l.s4 1983009808
    %v5969 = vunpack.c.0.s8 %v5968
    %v5970 = vlaneseq
    %v5971 = vshrl.u32 %v5970, 7
    %v5972 = vsub.s32 %v5969, %v5971
    %v5973 = vrot.slane %v5965, %v5972
    %v5975 = vunpack.c.l.s4 1983009808
    %v5976 = vunpack.c.0.s8 %v5975
    %v5977 = vlaneseq
    %v5978 = vshrl.u32 %v5977, 7
    %v5979 = vsub.s32 %v5976, %v5978
    %v5980 = vrot.slane %v5966, %v5979
    %v5981 = vcombine.low %v5973, %v5980
    %v5982 = vcombine.low %v3438, %v3445
    %v5983 = vcombine.low %v3452, %v3459
    %v5985 = vunpack.c.l.s4 1983009808
    %v5986 = vunpack.c.0.s8 %v5985
    %v5987 = vlaneseq
    %v5988 = vshrl.u32 %v5987, 7
    %v5989 = vsub.s32 %v5986, %v5988
    %v5990 = vrot.slane %v5982, %v5989
    %v5992 = vunpack.c.l.s4 1983009808
    %v5993 = vunpack.c.0.s8 %v5992
    %v5994 = vlaneseq
    %v5995 = vshrl.u32 %v5994, 7
    %v5996 = vsub.s32 %v5993, %v5995
    %v5997 = vrot.slane %v5983, %v5996
    %v5998 = vcombine.low %v5990, %v5997
    %v5999 = vcombine.low %v3466, %v3473
    %v6000 = vcombine.low %v3480, %v3487
    %v6002 = vunpack.c.l.s4 1983009808
    %v6003 = vunpack.c.0.s8 %v6002
    %v6004 = vlaneseq
    %v6005 = vshrl.u32 %v6004, 7
    %v6006 = vsub.s32 %v6003, %v6005
    %v6007 = vrot.slane %v5999, %v6006
    %v6009 = vunpack.c.l.s4 1983009808
    %v6010 = vunpack.c.0.s8 %v6009
    %v6011 = vlaneseq
    %v6012 = vshrl.u32 %v6011, 7
    %v6013 = vsub.s32 %v6010, %v6012
    %v6014 = vrot.slane %v6000, %v6013
    %v6015 = vcombine.low %v6007, %v6014
    %v6016 = vcombine.low %v3494, %v3501
    %v6017 = vcombine.low %v3508, %v3515
    %v6019 = vunpack.c.l.s4 1983009808
    %v6020 = vunpack.c.0.s8 %v6019
    %v6021 = vlaneseq
    %v6022 = vshrl.u32 %v6021, 7
    %v6023 = vsub.s32 %v6020, %v6022
    %v6024 = vrot.slane %v6016, %v6023
    %v6026 = vunpack.c.l.s4 1983009808
    %v6027 = vunpack.c.0.s8 %v6026
    %v6028 = vlaneseq
    %v6029 = vshrl.u32 %v6028, 7
    %v6030 = vsub.s32 %v6027, %v6029
    %v6031 = vrot.slane %v6017, %v6030
    %v6032 = vcombine.low %v6024, %v6031
    %v6033 = vcombine.low %v3522, %v3529
    %v6034 = vcombine.low %v3536, %v3543
    %v6036 = vunpack.c.l.s4 1983009808
    %v6037 = vunpack.c.0.s8 %v6036
    %v6038 = vlaneseq
    %v6039 = vshrl.u32 %v6038, 7
    %v6040 = vsub.s32 %v6037, %v6039
    %v6041 = vrot.slane %v6033, %v6040
    %v6043 = vunpack.c.l.s4 1983009808
    %v6044 = vunpack.c.0.s8 %v6043
    %v6045 = vlaneseq
    %v6046 = vshrl.u32 %v6045, 7
    %v6047 = vsub.s32 %v6044, %v6046
    %v6048 = vrot.slane %v6034, %v6047
    %v6049 = vcombine.low %v6041, %v6048
    %v6050 = vcombine.low %v3550, %v3557
    %v6051 = vcombine.low %v3564, %v3571
    %v6053 = vunpack.c.l.s4 1983009808
    %v6054 = vunpack.c.0.s8 %v6053
    %v6055 = vlaneseq
    %v6056 = vshrl.u32 %v6055, 7
    %v6057 = vsub.s32 %v6054, %v6056
    %v6058 = vrot.slane %v6050, %v6057
    %v6060 = vunpack.c.l.s4 1983009808
    %v6061 = vunpack.c.0.s8 %v6060
    %v6062 = vlaneseq
    %v6063 = vshrl.u32 %v6062, 7
    %v6064 = vsub.s32 %v6061, %v6063
    %v6065 = vrot.slane %v6051, %v6064
    %v6066 = vcombine.low %v6058, %v6065
    %v6067 = vcombine.low %v3578, %v3585
    %v6068 = vcombine.low %v3592, %v3599
    %v6070 = vunpack.c.l.s4 1983009808
    %v6071 = vunpack.c.0.s8 %v6070
    %v6072 = vlaneseq
    %v6073 = vshrl.u32 %v6072, 7
    %v6074 = vsub.s32 %v6071, %v6073
    %v6075 = vrot.slane %v6067, %v6074
    %v6077 = vunpack.c.l.s4 1983009808
    %v6078 = vunpack.c.0.s8 %v6077
    %v6079 = vlaneseq
    %v6080 = vshrl.u32 %v6079, 7
    %v6081 = vsub.s32 %v6078, %v6080
    %v6082 = vrot.slane %v6068, %v6081
    %v6083 = vcombine.low %v6075, %v6082
    %v6084 = vcombine.low %v3606, %v3613
    %v6085 = vcombine.low %v3620, %v3627
    %v6087 = vunpack.c.l.s4 1983009808
    %v6088 = vunpack.c.0.s8 %v6087
    %v6089 = vlaneseq
    %v6090 = vshrl.u32 %v6089, 7
    %v6091 = vsub.s32 %v6088, %v6090
    %v6092 = vrot.slane %v6084, %v6091
    %v6094 = vunpack.c.l.s4 1983009808
    %v6095 = vunpack.c.0.s8 %v6094
    %v6096 = vlaneseq
    %v6097 = vshrl.u32 %v6096, 7
    %v6098 = vsub.s32 %v6095, %v6097
    %v6099 = vrot.slane %v6085, %v6098
    %v6100 = vcombine.low %v6092, %v6099
    %v6101 = vcombine.low %v3634, %v3641
    %v6102 = vcombine.low %v3648, %v3655
    %v6104 = vunpack.c.l.s4 1983009808
    %v6105 = vunpack.c.0.s8 %v6104
    %v6106 = vlaneseq
    %v6107 = vshrl.u32 %v6106, 7
    %v6108 = vsub.s32 %v6105, %v6107
    %v6109 = vrot.slane %v6101, %v6108
    %v6111 = vunpack.c.l.s4 1983009808
    %v6112 = vunpack.c.0.s8 %v6111
    %v6113 = vlaneseq
    %v6114 = vshrl.u32 %v6113, 7
    %v6115 = vsub.s32 %v6112, %v6114
    %v6116 = vrot.slane %v6102, %v6115
    %v6117 = vcombine.low %v6109, %v6116
    %v6118 = vcombine.low %v3662, %v3669
    %v6119 = vcombine.low %v3676, %v3683
    %v6121 = vunpack.c.l.s4 1983009808
    %v6122 = vunpack.c.0.s8 %v6121
    %v6123 = vlaneseq
    %v6124 = vshrl.u32 %v6123, 7
    %v6125 = vsub.s32 %v6122, %v6124
    %v6126 = vrot.slane %v6118, %v6125
    %v6128 = vunpack.c.l.s4 1983009808
    %v6129 = vunpack.c.0.s8 %v6128
    %v6130 = vlaneseq
    %v6131 = vshrl.u32 %v6130, 7
    %v6132 = vsub.s32 %v6129, %v6131
    %v6133 = vrot.slane %v6119, %v6132
    %v6134 = vcombine.low %v6126, %v6133
    %v6135 = vcombine.low %v3690, %v3697
    %v6136 = vcombine.low %v3704, %v3711
    %v6138 = vunpack.c.l.s4 1983009808
    %v6139 = vunpack.c.0.s8 %v6138
    %v6140 = vlaneseq
    %v6141 = vshrl.u32 %v6140, 7
    %v6142 = vsub.s32 %v6139, %v6141
    %v6143 = vrot.slane %v6135, %v6142
    %v6145 = vunpack.c.l.s4 1983009808
    %v6146 = vunpack.c.0.s8 %v6145
    %v6147 = vlaneseq
    %v6148 = vshrl.u32 %v6147, 7
    %v6149 = vsub.s32 %v6146, %v6148
    %v6150 = vrot.slane %v6136, %v6149
    %v6151 = vcombine.low %v6143, %v6150
    %v6152 = vcombine.low %v3718, %v3725
    %v6153 = vcombine.low %v3732, %v3739
    %v6155 = vunpack.c.l.s4 1983009808
    %v6156 = vunpack.c.0.s8 %v6155
    %v6157 = vlaneseq
    %v6158 = vshrl.u32 %v6157, 7
    %v6159 = vsub.s32 %v6156, %v6158
    %v6160 = vrot.slane %v6152, %v6159
    %v6162 = vunpack.c.l.s4 1983009808
    %v6163 = vunpack.c.0.s8 %v6162
    %v6164 = vlaneseq
    %v6165 = vshrl.u32 %v6164, 7
    %v6166 = vsub.s32 %v6163, %v6165
    %v6167 = vrot.slane %v6153, %v6166
    %v6168 = vcombine.low %v6160, %v6167
    %v6169 = vcombine.low %v3746, %v3753
    %v6170 = vcombine.low %v3760, %v3767
    %v6172 = vunpack.c.l.s4 1983009808
    %v6173 = vunpack.c.0.s8 %v6172
    %v6174 = vlaneseq
    %v6175 = vshrl.u32 %v6174, 7
    %v6176 = vsub.s32 %v6173, %v6175
    %v6177 = vrot.slane %v6169, %v6176
    %v6179 = vunpack.c.l.s4 1983009808
    %v6180 = vunpack.c.0.s8 %v6179
    %v6181 = vlaneseq
    %v6182 = vshrl.u32 %v6181, 7
    %v6183 = vsub.s32 %v6180, %v6182
    %v6184 = vrot.slane %v6170, %v6183
    %v6185 = vcombine.low %v6177, %v6184
    %v6186 = vcombine.low %v3774, %v3781
    %v6187 = vcombine.low %v3788, %v3795
    %v6189 = vunpack.c.l.s4 1983009808
    %v6190 = vunpack.c.0.s8 %v6189
    %v6191 = vlaneseq
    %v6192 = vshrl.u32 %v6191, 7
    %v6193 = vsub.s32 %v6190, %v6192
    %v6194 = vrot.slane %v6186, %v6193
    %v6196 = vunpack.c.l.s4 1983009808
    %v6197 = vunpack.c.0.s8 %v6196
    %v6198 = vlaneseq
    %v6199 = vshrl.u32 %v6198, 7
    %v6200 = vsub.s32 %v6197, %v6199
    %v6201 = vrot.slane %v6187, %v6200
    %v6202 = vcombine.low %v6194, %v6201
    %v6203 = vcombine.low %v3802, %v3809
    %v6204 = vcombine.low %v3816, %v3823
    %v6206 = vunpack.c.l.s4 1983009808
    %v6207 = vunpack.c.0.s8 %v6206
    %v6208 = vlaneseq
    %v6209 = vshrl.u32 %v6208, 7
    %v6210 = vsub.s32 %v6207, %v6209
    %v6211 = vrot.slane %v6203, %v6210
    %v6213 = vunpack.c.l.s4 1983009808
    %v6214 = vunpack.c.0.s8 %v6213
    %v6215 = vlaneseq
    %v6216 = vshrl.u32 %v6215, 7
    %v6217 = vsub.s32 %v6214, %v6216
    %v6218 = vrot.slane %v6204, %v6217
    %v6219 = vcombine.low %v6211, %v6218
    %v6220 = vcombine.low %v3830, %v3837
    %v6221 = vcombine.low %v3844, %v3851
    %v6223 = vunpack.c.l.s4 1983009808
    %v6224 = vunpack.c.0.s8 %v6223
    %v6225 = vlaneseq
    %v6226 = vshrl.u32 %v6225, 7
    %v6227 = vsub.s32 %v6224, %v6226
    %v6228 = vrot.slane %v6220, %v6227
    %v6230 = vunpack.c.l.s4 1983009808
    %v6231 = vunpack.c.0.s8 %v6230
    %v6232 = vlaneseq
    %v6233 = vshrl.u32 %v6232, 7
    %v6234 = vsub.s32 %v6231, %v6233
    %v6235 = vrot.slane %v6221, %v6234
    %v6236 = vcombine.low %v6228, %v6235
    %v6237 = vcombine.low %v3858, %v3865
    %v6238 = vcombine.low %v3872, %v3879
    %v6240 = vunpack.c.l.s4 1983009808
    %v6241 = vunpack.c.0.s8 %v6240
    %v6242 = vlaneseq
    %v6243 = vshrl.u32 %v6242, 7
    %v6244 = vsub.s32 %v6241, %v6243
    %v6245 = vrot.slane %v6237, %v6244
    %v6247 = vunpack.c.l.s4 1983009808
    %v6248 = vunpack.c.0.s8 %v6247
    %v6249 = vlaneseq
    %v6250 = vshrl.u32 %v6249, 7
    %v6251 = vsub.s32 %v6248, %v6250
    %v6252 = vrot.slane %v6238, %v6251
    %v6253 = vcombine.low %v6245, %v6252
    %v6254 = vcombine.low %v3886, %v3893
    %v6255 = vcombine.low %v3900, %v3907
    %v6257 = vunpack.c.l.s4 1983009808
    %v6258 = vunpack.c.0.s8 %v6257
    %v6259 = vlaneseq
    %v6260 = vshrl.u32 %v6259, 7
    %v6261 = vsub.s32 %v6258, %v6260
    %v6262 = vrot.slane %v6254, %v6261
    %v6264 = vunpack.c.l.s4 1983009808
    %v6265 = vunpack.c.0.s8 %v6264
    %v6266 = vlaneseq
    %v6267 = vshrl.u32 %v6266, 7
    %v6268 = vsub.s32 %v6265, %v6267
    %v6269 = vrot.slane %v6255, %v6268
    %v6270 = vcombine.low %v6262, %v6269
    %v6271 = vcombine.low %v3914, %v3921
    %v6272 = vcombine.low %v3928, %v3935
    %v6274 = vunpack.c.l.s4 1983009808
    %v6275 = vunpack.c.0.s8 %v6274
    %v6276 = vlaneseq
    %v6277 = vshrl.u32 %v6276, 7
    %v6278 = vsub.s32 %v6275, %v6277
    %v6279 = vrot.slane %v6271, %v6278
    %v6281 = vunpack.c.l.s4 1983009808
    %v6282 = vunpack.c.0.s8 %v6281
    %v6283 = vlaneseq
    %v6284 = vshrl.u32 %v6283, 7
    %v6285 = vsub.s32 %v6282, %v6284
    %v6286 = vrot.slane %v6272, %v6285
    %v6287 = vcombine.low %v6279, %v6286
    %v6288 = vcombine.low %v3942, %v3949
    %v6289 = vcombine.low %v3956, %v3963
    %v6291 = vunpack.c.l.s4 1983009808
    %v6292 = vunpack.c.0.s8 %v6291
    %v6293 = vlaneseq
    %v6294 = vshrl.u32 %v6293, 7
    %v6295 = vsub.s32 %v6292, %v6294
    %v6296 = vrot.slane %v6288, %v6295
    %v6298 = vunpack.c.l.s4 1983009808
    %v6299 = vunpack.c.0.s8 %v6298
    %v6300 = vlaneseq
    %v6301 = vshrl.u32 %v6300, 7
    %v6302 = vsub.s32 %v6299, %v6301
    %v6303 = vrot.slane %v6289, %v6302
    %v6304 = vcombine.low %v6296, %v6303
    %v6305 = vcombine.low %v3970, %v3977
    %v6306 = vcombine.low %v3984, %v3991
    %v6308 = vunpack.c.l.s4 1983009808
    %v6309 = vunpack.c.0.s8 %v6308
    %v6310 = vlaneseq
    %v6311 = vshrl.u32 %v6310, 7
    %v6312 = vsub.s32 %v6309, %v6311
    %v6313 = vrot.slane %v6305, %v6312
    %v6315 = vunpack.c.l.s4 1983009808
    %v6316 = vunpack.c.0.s8 %v6315
    %v6317 = vlaneseq
    %v6318 = vshrl.u32 %v6317, 7
    %v6319 = vsub.s32 %v6316, %v6318
    %v6320 = vrot.slane %v6306, %v6319
    %v6321 = vcombine.low %v6313, %v6320
    %v6322 = vcombine.low %v3998, %v4005
    %v6323 = vcombine.low %v4012, %v4019
    %v6325 = vunpack.c.l.s4 1983009808
    %v6326 = vunpack.c.0.s8 %v6325
    %v6327 = vlaneseq
    %v6328 = vshrl.u32 %v6327, 7
    %v6329 = vsub.s32 %v6326, %v6328
    %v6330 = vrot.slane %v6322, %v6329
    %v6332 = vunpack.c.l.s4 1983009808
    %v6333 = vunpack.c.0.s8 %v6332
    %v6334 = vlaneseq
    %v6335 = vshrl.u32 %v6334, 7
    %v6336 = vsub.s32 %v6333, %v6335
    %v6337 = vrot.slane %v6323, %v6336
    %v6338 = vcombine.low %v6330, %v6337
    %v6339 = vcombine.low %v4026, %v4033
    %v6340 = vcombine.low %v4040, %v4047
    %v6342 = vunpack.c.l.s4 1983009808
    %v6343 = vunpack.c.0.s8 %v6342
    %v6344 = vlaneseq
    %v6345 = vshrl.u32 %v6344, 7
    %v6346 = vsub.s32 %v6343, %v6345
    %v6347 = vrot.slane %v6339, %v6346
    %v6349 = vunpack.c.l.s4 1983009808
    %v6350 = vunpack.c.0.s8 %v6349
    %v6351 = vlaneseq
    %v6352 = vshrl.u32 %v6351, 7
    %v6353 = vsub.s32 %v6350, %v6352
    %v6354 = vrot.slane %v6340, %v6353
    %v6355 = vcombine.low %v6347, %v6354
    %v6356 = vcombine.low %v4054, %v4061
    %v6357 = vcombine.low %v4068, %v4075
    %v6359 = vunpack.c.l.s4 1983009808
    %v6360 = vunpack.c.0.s8 %v6359
    %v6361 = vlaneseq
    %v6362 = vshrl.u32 %v6361, 7
    %v6363 = vsub.s32 %v6360, %v6362
    %v6364 = vrot.slane %v6356, %v6363
    %v6366 = vunpack.c.l.s4 1983009808
    %v6367 = vunpack.c.0.s8 %v6366
    %v6368 = vlaneseq
    %v6369 = vshrl.u32 %v6368, 7
    %v6370 = vsub.s32 %v6367, %v6369
    %v6371 = vrot.slane %v6357, %v6370
    %v6372 = vcombine.low %v6364, %v6371
    %v6373 = vcombine.low %v4082, %v4089
    %v6374 = vcombine.low %v4096, %v4103
    %v6376 = vunpack.c.l.s4 1983009808
    %v6377 = vunpack.c.0.s8 %v6376
    %v6378 = vlaneseq
    %v6379 = vshrl.u32 %v6378, 7
    %v6380 = vsub.s32 %v6377, %v6379
    %v6381 = vrot.slane %v6373, %v6380
    %v6383 = vunpack.c.l.s4 1983009808
    %v6384 = vunpack.c.0.s8 %v6383
    %v6385 = vlaneseq
    %v6386 = vshrl.u32 %v6385, 7
    %v6387 = vsub.s32 %v6384, %v6386
    %v6388 = vrot.slane %v6374, %v6387
    %v6389 = vcombine.low %v6381, %v6388
    %v6390 = vcombine.low %v4110, %v4117
    %v6391 = vcombine.low %v4124, %v4131
    %v6393 = vunpack.c.l.s4 1983009808
    %v6394 = vunpack.c.0.s8 %v6393
    %v6395 = vlaneseq
    %v6396 = vshrl.u32 %v6395, 7
    %v6397 = vsub.s32 %v6394, %v6396
    %v6398 = vrot.slane %v6390, %v6397
    %v6400 = vunpack.c.l.s4 1983009808
    %v6401 = vunpack.c.0.s8 %v6400
    %v6402 = vlaneseq
    %v6403 = vshrl.u32 %v6402, 7
    %v6404 = vsub.s32 %v6401, %v6403
    %v6405 = vrot.slane %v6391, %v6404
    %v6406 = vcombine.low %v6398, %v6405
    %v6407 = vcombine.low %v4138, %v4145
    %v6408 = vcombine.low %v4152, %v4159
    %v6410 = vunpack.c.l.s4 1983009808
    %v6411 = vunpack.c.0.s8 %v6410
    %v6412 = vlaneseq
    %v6413 = vshrl.u32 %v6412, 7
    %v6414 = vsub.s32 %v6411, %v6413
    %v6415 = vrot.slane %v6407, %v6414
    %v6417 = vunpack.c.l.s4 1983009808
    %v6418 = vunpack.c.0.s8 %v6417
    %v6419 = vlaneseq
    %v6420 = vshrl.u32 %v6419, 7
    %v6421 = vsub.s32 %v6418, %v6420
    %v6422 = vrot.slane %v6408, %v6421
    %v6423 = vcombine.low %v6415, %v6422
    %v6424 = vcombine.low %v4166, %v4173
    %v6425 = vcombine.low %v4180, %v4187
    %v6427 = vunpack.c.l.s4 1983009808
    %v6428 = vunpack.c.0.s8 %v6427
    %v6429 = vlaneseq
    %v6430 = vshrl.u32 %v6429, 7
    %v6431 = vsub.s32 %v6428, %v6430
    %v6432 = vrot.slane %v6424, %v6431
    %v6434 = vunpack.c.l.s4 1983009808
    %v6435 = vunpack.c.0.s8 %v6434
    %v6436 = vlaneseq
    %v6437 = vshrl.u32 %v6436, 7
    %v6438 = vsub.s32 %v6435, %v6437
    %v6439 = vrot.slane %v6425, %v6438
    %v6440 = vcombine.low %v6432, %v6439
    %v6441 = vcombine.low %v4194, %v4201
    %v6442 = vcombine.low %v4208, %v4215
    %v6444 = vunpack.c.l.s4 1983009808
    %v6445 = vunpack.c.0.s8 %v6444
    %v6446 = vlaneseq
    %v6447 = vshrl.u32 %v6446, 7
    %v6448 = vsub.s32 %v6445, %v6447
    %v6449 = vrot.slane %v6441, %v6448
    %v6451 = vunpack.c.l.s4 1983009808
    %v6452 = vunpack.c.0.s8 %v6451
    %v6453 = vlaneseq
    %v6454 = vshrl.u32 %v6453, 7
    %v6455 = vsub.s32 %v6452, %v6454
    %v6456 = vrot.slane %v6442, %v6455
    %v6457 = vcombine.low %v6449, %v6456
    %v6458 = vcombine.low %v4222, %v4229
    %v6459 = vcombine.low %v4236, %v4243
    %v6461 = vunpack.c.l.s4 1983009808
    %v6462 = vunpack.c.0.s8 %v6461
    %v6463 = vlaneseq
    %v6464 = vshrl.u32 %v6463, 7
    %v6465 = vsub.s32 %v6462, %v6464
    %v6466 = vrot.slane %v6458, %v6465
    %v6468 = vunpack.c.l.s4 1983009808
    %v6469 = vunpack.c.0.s8 %v6468
    %v6470 = vlaneseq
    %v6471 = vshrl.u32 %v6470, 7
    %v6472 = vsub.s32 %v6469, %v6471
    %v6473 = vrot.slane %v6459, %v6472
    %v6474 = vcombine.low %v6466, %v6473
    %v6475 = vcombine.low %v4250, %v4257
    %v6476 = vcombine.low %v4264, %v4271
    %v6478 = vunpack.c.l.s4 1983009808
    %v6479 = vunpack.c.0.s8 %v6478
    %v6480 = vlaneseq
    %v6481 = vshrl.u32 %v6480, 7
    %v6482 = vsub.s32 %v6479, %v6481
    %v6483 = vrot.slane %v6475, %v6482
    %v6485 = vunpack.c.l.s4 1983009808
    %v6486 = vunpack.c.0.s8 %v6485
    %v6487 = vlaneseq
    %v6488 = vshrl.u32 %v6487, 7
    %v6489 = vsub.s32 %v6486, %v6488
    %v6490 = vrot.slane %v6476, %v6489
    %v6491 = vcombine.low %v6483, %v6490
    %v6492 = vcombine.low %v4278, %v4285
    %v6493 = vcombine.low %v4292, %v4299
    %v6495 = vunpack.c.l.s4 1983009808
    %v6496 = vunpack.c.0.s8 %v6495
    %v6497 = vlaneseq
    %v6498 = vshrl.u32 %v6497, 7
    %v6499 = vsub.s32 %v6496, %v6498
    %v6500 = vrot.slane %v6492, %v6499
    %v6502 = vunpack.c.l.s4 1983009808
    %v6503 = vunpack.c.0.s8 %v6502
    %v6504 = vlaneseq
    %v6505 = vshrl.u32 %v6504, 7
    %v6506 = vsub.s32 %v6503, %v6505
    %v6507 = vrot.slane %v6493, %v6506
    %v6508 = vcombine.low %v6500, %v6507
    %v6509 = vcombine.low %v4306, %v4313
    %v6510 = vcombine.low %v4320, %v4327
    %v6512 = vunpack.c.l.s4 1983009808
    %v6513 = vunpack.c.0.s8 %v6512
    %v6514 = vlaneseq
    %v6515 = vshrl.u32 %v6514, 7
    %v6516 = vsub.s32 %v6513, %v6515
    %v6517 = vrot.slane %v6509, %v6516
    %v6519 = vunpack.c.l.s4 1983009808
    %v6520 = vunpack.c.0.s8 %v6519
    %v6521 = vlaneseq
    %v6522 = vshrl.u32 %v6521, 7
    %v6523 = vsub.s32 %v6520, %v6522
    %v6524 = vrot.slane %v6510, %v6523
    %v6525 = vcombine.low %v6517, %v6524
    %v6526 = vcombine.low %v4334, %v4341
    %v6527 = vcombine.low %v4348, %v4355
    %v6529 = vunpack.c.l.s4 1983009808
    %v6530 = vunpack.c.0.s8 %v6529
    %v6531 = vlaneseq
    %v6532 = vshrl.u32 %v6531, 7
    %v6533 = vsub.s32 %v6530, %v6532
    %v6534 = vrot.slane %v6526, %v6533
    %v6536 = vunpack.c.l.s4 1983009808
    %v6537 = vunpack.c.0.s8 %v6536
    %v6538 = vlaneseq
    %v6539 = vshrl.u32 %v6538, 7
    %v6540 = vsub.s32 %v6537, %v6539
    %v6541 = vrot.slane %v6527, %v6540
    %v6542 = vcombine.low %v6534, %v6541
    %v6543 = vcombine.low %v4362, %v4369
    %v6544 = vcombine.low %v4376, %v4383
    %v6546 = vunpack.c.l.s4 1983009808
    %v6547 = vunpack.c.0.s8 %v6546
    %v6548 = vlaneseq
    %v6549 = vshrl.u32 %v6548, 7
    %v6550 = vsub.s32 %v6547, %v6549
    %v6551 = vrot.slane %v6543, %v6550
    %v6553 = vunpack.c.l.s4 1983009808
    %v6554 = vunpack.c.0.s8 %v6553
    %v6555 = vlaneseq
    %v6556 = vshrl.u32 %v6555, 7
    %v6557 = vsub.s32 %v6554, %v6556
    %v6558 = vrot.slane %v6544, %v6557
    %v6559 = vcombine.low %v6551, %v6558
    %6560 = vset.pattern.permute.xlu0 0
    %6561 = vperm.xlu0 %6560, %v4400
    %v6562 = vpop.permute.xlu0 %6561
    %6563 = vset.pattern.permute.xlu0 0
    %6564 = vperm.xlu0 %6563, %v4417
    %v6565 = vpop.permute.xlu0 %6564
    %6566 = vset.pattern.permute.xlu0 0
    %6567 = vperm.xlu0 %6566, %v4434
    %v6568 = vpop.permute.xlu0 %6567
    %6569 = vset.pattern.permute.xlu0 0
    %6570 = vperm.xlu0 %6569, %v4451
    %v6571 = vpop.permute.xlu0 %6570
    %6572 = vset.pattern.permute.xlu0 0
    %6573 = vperm.xlu0 %6572, %v4468
    %v6574 = vpop.permute.xlu0 %6573
    %6575 = vset.pattern.permute.xlu0 0
    %6576 = vperm.xlu0 %6575, %v4485
    %v6577 = vpop.permute.xlu0 %6576
    %6578 = vset.pattern.permute.xlu0 0
    %6579 = vperm.xlu0 %6578, %v4502
    %v6580 = vpop.permute.xlu0 %6579
    %6581 = vset.pattern.permute.xlu0 0
    %6582 = vperm.xlu0 %6581, %v4519
    %v6583 = vpop.permute.xlu0 %6582
    %6584 = vset.pattern.permute.xlu0 0
    %6585 = vperm.xlu0 %6584, %v4536
    %v6586 = vpop.permute.xlu0 %6585
    %6587 = vset.pattern.permute.xlu0 0
    %6588 = vperm.xlu0 %6587, %v4553
    %v6589 = vpop.permute.xlu0 %6588
    %6590 = vset.pattern.permute.xlu0 0
    %6591 = vperm.xlu0 %6590, %v4570
    %v6592 = vpop.permute.xlu0 %6591
    %6593 = vset.pattern.permute.xlu0 0
    %6594 = vperm.xlu0 %6593, %v4587
    %v6595 = vpop.permute.xlu0 %6594
    %6596 = vset.pattern.permute.xlu0 0
    %6597 = vperm.xlu0 %6596, %v4604
    %v6598 = vpop.permute.xlu0 %6597
    %6599 = vset.pattern.permute.xlu0 0
    %6600 = vperm.xlu0 %6599, %v4621
    %v6601 = vpop.permute.xlu0 %6600
    %6602 = vset.pattern.permute.xlu0 0
    %6603 = vperm.xlu0 %6602, %v4638
    %v6604 = vpop.permute.xlu0 %6603
    %6605 = vset.pattern.permute.xlu0 0
    %6606 = vperm.xlu0 %6605, %v4655
    %v6607 = vpop.permute.xlu0 %6606
    %6608 = vset.pattern.permute.xlu0 0
    %6609 = vperm.xlu0 %6608, %v4672
    %v6610 = vpop.permute.xlu0 %6609
    %6611 = vset.pattern.permute.xlu0 0
    %6612 = vperm.xlu0 %6611, %v4689
    %v6613 = vpop.permute.xlu0 %6612
    %6614 = vset.pattern.permute.xlu0 0
    %6615 = vperm.xlu0 %6614, %v4706
    %v6616 = vpop.permute.xlu0 %6615
    %6617 = vset.pattern.permute.xlu0 0
    %6618 = vperm.xlu0 %6617, %v4723
    %v6619 = vpop.permute.xlu0 %6618
    %6620 = vset.pattern.permute.xlu0 0
    %6621 = vperm.xlu0 %6620, %v4740
    %v6622 = vpop.permute.xlu0 %6621
    %6623 = vset.pattern.permute.xlu0 0
    %6624 = vperm.xlu0 %6623, %v4757
    %v6625 = vpop.permute.xlu0 %6624
    %6626 = vset.pattern.permute.xlu0 0
    %6627 = vperm.xlu0 %6626, %v4774
    %v6628 = vpop.permute.xlu0 %6627
    %6629 = vset.pattern.permute.xlu0 0
    %6630 = vperm.xlu0 %6629, %v4791
    %v6631 = vpop.permute.xlu0 %6630
    %6632 = vset.pattern.permute.xlu0 0
    %6633 = vperm.xlu0 %6632, %v4808
    %v6634 = vpop.permute.xlu0 %6633
    %6635 = vset.pattern.permute.xlu0 0
    %6636 = vperm.xlu0 %6635, %v4825
    %v6637 = vpop.permute.xlu0 %6636
    %6638 = vset.pattern.permute.xlu0 0
    %6639 = vperm.xlu0 %6638, %v4842
    %v6640 = vpop.permute.xlu0 %6639
    %6641 = vset.pattern.permute.xlu0 0
    %6642 = vperm.xlu0 %6641, %v4859
    %v6643 = vpop.permute.xlu0 %6642
    %6644 = vset.pattern.permute.xlu0 0
    %6645 = vperm.xlu0 %6644, %v4876
    %v6646 = vpop.permute.xlu0 %6645
    %6647 = vset.pattern.permute.xlu0 0
    %6648 = vperm.xlu0 %6647, %v4893
    %v6649 = vpop.permute.xlu0 %6648
    %6650 = vset.pattern.permute.xlu0 0
    %6651 = vperm.xlu0 %6650, %v4910
    %v6652 = vpop.permute.xlu0 %6651
    %6653 = vset.pattern.permute.xlu0 0
    %6654 = vperm.xlu0 %6653, %v4927
    %v6655 = vpop.permute.xlu0 %6654
    %6656 = vset.pattern.permute.xlu0 0
    %6657 = vperm.xlu0 %6656, %v4944
    %v6658 = vpop.permute.xlu0 %6657
    %6659 = vset.pattern.permute.xlu0 0
    %6660 = vperm.xlu0 %6659, %v4961
    %v6661 = vpop.permute.xlu0 %6660
    %6662 = vset.pattern.permute.xlu0 0
    %6663 = vperm.xlu0 %6662, %v4978
    %v6664 = vpop.permute.xlu0 %6663
    %6665 = vset.pattern.permute.xlu0 0
    %6666 = vperm.xlu0 %6665, %v4995
    %v6667 = vpop.permute.xlu0 %6666
    %6668 = vset.pattern.permute.xlu0 0
    %6669 = vperm.xlu0 %6668, %v5012
    %v6670 = vpop.permute.xlu0 %6669
    %6671 = vset.pattern.permute.xlu0 0
    %6672 = vperm.xlu0 %6671, %v5029
    %v6673 = vpop.permute.xlu0 %6672
    %6674 = vset.pattern.permute.xlu0 0
    %6675 = vperm.xlu0 %6674, %v5046
    %v6676 = vpop.permute.xlu0 %6675
    %6677 = vset.pattern.permute.xlu0 0
    %6678 = vperm.xlu0 %6677, %v5063
    %v6679 = vpop.permute.xlu0 %6678
    %6680 = vset.pattern.permute.xlu0 0
    %6681 = vperm.xlu0 %6680, %v5080
    %v6682 = vpop.permute.xlu0 %6681
    %6683 = vset.pattern.permute.xlu0 0
    %6684 = vperm.xlu0 %6683, %v5097
    %v6685 = vpop.permute.xlu0 %6684
    %6686 = vset.pattern.permute.xlu0 0
    %6687 = vperm.xlu0 %6686, %v5114
    %v6688 = vpop.permute.xlu0 %6687
    %6689 = vset.pattern.permute.xlu0 0
    %6690 = vperm.xlu0 %6689, %v5131
    %v6691 = vpop.permute.xlu0 %6690
    %6692 = vset.pattern.permute.xlu0 0
    %6693 = vperm.xlu0 %6692, %v5148
    %v6694 = vpop.permute.xlu0 %6693
    %6695 = vset.pattern.permute.xlu0 0
    %6696 = vperm.xlu0 %6695, %v5165
    %v6697 = vpop.permute.xlu0 %6696
    %6698 = vset.pattern.permute.xlu0 0
    %6699 = vperm.xlu0 %6698, %v5182
    %v6700 = vpop.permute.xlu0 %6699
    %6701 = vset.pattern.permute.xlu0 0
    %6702 = vperm.xlu0 %6701, %v5199
    %v6703 = vpop.permute.xlu0 %6702
    %6704 = vset.pattern.permute.xlu0 0
    %6705 = vperm.xlu0 %6704, %v5216
    %v6706 = vpop.permute.xlu0 %6705
    %6707 = vset.pattern.permute.xlu0 0
    %6708 = vperm.xlu0 %6707, %v5233
    %v6709 = vpop.permute.xlu0 %6708
    %6710 = vset.pattern.permute.xlu0 0
    %6711 = vperm.xlu0 %6710, %v5250
    %v6712 = vpop.permute.xlu0 %6711
    %6713 = vset.pattern.permute.xlu0 0
    %6714 = vperm.xlu0 %6713, %v5267
    %v6715 = vpop.permute.xlu0 %6714
    %6716 = vset.pattern.permute.xlu0 0
    %6717 = vperm.xlu0 %6716, %v5284
    %v6718 = vpop.permute.xlu0 %6717
    %6719 = vset.pattern.permute.xlu0 0
    %6720 = vperm.xlu0 %6719, %v5301
    %v6721 = vpop.permute.xlu0 %6720
    %6722 = vset.pattern.permute.xlu0 0
    %6723 = vperm.xlu0 %6722, %v5318
    %v6724 = vpop.permute.xlu0 %6723
    %6725 = vset.pattern.permute.xlu0 0
    %6726 = vperm.xlu0 %6725, %v5335
    %v6727 = vpop.permute.xlu0 %6726
    %6728 = vset.pattern.permute.xlu0 0
    %6729 = vperm.xlu0 %6728, %v5352
    %v6730 = vpop.permute.xlu0 %6729
    %6731 = vset.pattern.permute.xlu0 0
    %6732 = vperm.xlu0 %6731, %v5369
    %v6733 = vpop.permute.xlu0 %6732
    %6734 = vset.pattern.permute.xlu0 0
    %6735 = vperm.xlu0 %6734, %v5386
    %v6736 = vpop.permute.xlu0 %6735
    %6737 = vset.pattern.permute.xlu0 0
    %6738 = vperm.xlu0 %6737, %v5403
    %v6739 = vpop.permute.xlu0 %6738
    %6740 = vset.pattern.permute.xlu0 0
    %6741 = vperm.xlu0 %6740, %v5420
    %v6742 = vpop.permute.xlu0 %6741
    %6743 = vset.pattern.permute.xlu0 0
    %6744 = vperm.xlu0 %6743, %v5437
    %v6745 = vpop.permute.xlu0 %6744
    %6746 = vset.pattern.permute.xlu0 0
    %6747 = vperm.xlu0 %6746, %v5454
    %v6748 = vpop.permute.xlu0 %6747
    %6749 = vset.pattern.permute.xlu0 0
    %6750 = vperm.xlu0 %6749, %v5471
    %v6751 = vpop.permute.xlu0 %6750
    %6752 = vset.pattern.permute.xlu0 0
    %6753 = vperm.xlu0 %6752, %v5488
    %v6754 = vpop.permute.xlu0 %6753
    %6755 = vset.pattern.permute.xlu0 0
    %6756 = vperm.xlu0 %6755, %v5505
    %v6757 = vpop.permute.xlu0 %6756
    %6758 = vset.pattern.permute.xlu0 0
    %6759 = vperm.xlu0 %6758, %v5522
    %v6760 = vpop.permute.xlu0 %6759
    %6761 = vset.pattern.permute.xlu0 0
    %6762 = vperm.xlu0 %6761, %v5539
    %v6763 = vpop.permute.xlu0 %6762
    %6764 = vset.pattern.permute.xlu0 0
    %6765 = vperm.xlu0 %6764, %v5556
    %v6766 = vpop.permute.xlu0 %6765
    %6767 = vset.pattern.permute.xlu0 0
    %6768 = vperm.xlu0 %6767, %v5573
    %v6769 = vpop.permute.xlu0 %6768
    %6770 = vset.pattern.permute.xlu0 0
    %6771 = vperm.xlu0 %6770, %v5590
    %v6772 = vpop.permute.xlu0 %6771
    %6773 = vset.pattern.permute.xlu0 0
    %6774 = vperm.xlu0 %6773, %v5607
    %v6775 = vpop.permute.xlu0 %6774
    %6776 = vset.pattern.permute.xlu0 0
    %6777 = vperm.xlu0 %6776, %v5624
    %v6778 = vpop.permute.xlu0 %6777
    %6779 = vset.pattern.permute.xlu0 0
    %6780 = vperm.xlu0 %6779, %v5641
    %v6781 = vpop.permute.xlu0 %6780
    %6782 = vset.pattern.permute.xlu0 0
    %6783 = vperm.xlu0 %6782, %v5658
    %v6784 = vpop.permute.xlu0 %6783
    %6785 = vset.pattern.permute.xlu0 0
    %6786 = vperm.xlu0 %6785, %v5675
    %v6787 = vpop.permute.xlu0 %6786
    %6788 = vset.pattern.permute.xlu0 0
    %6789 = vperm.xlu0 %6788, %v5692
    %v6790 = vpop.permute.xlu0 %6789
    %6791 = vset.pattern.permute.xlu0 0
    %6792 = vperm.xlu0 %6791, %v5709
    %v6793 = vpop.permute.xlu0 %6792
    %6794 = vset.pattern.permute.xlu0 0
    %6795 = vperm.xlu0 %6794, %v5726
    %v6796 = vpop.permute.xlu0 %6795
    %6797 = vset.pattern.permute.xlu0 0
    %6798 = vperm.xlu0 %6797, %v5743
    %v6799 = vpop.permute.xlu0 %6798
    %6800 = vset.pattern.permute.xlu0 0
    %6801 = vperm.xlu0 %6800, %v5760
    %v6802 = vpop.permute.xlu0 %6801
    %6803 = vset.pattern.permute.xlu0 0
    %6804 = vperm.xlu0 %6803, %v5777
    %v6805 = vpop.permute.xlu0 %6804
    %6806 = vset.pattern.permute.xlu0 0
    %6807 = vperm.xlu0 %6806, %v5794
    %v6808 = vpop.permute.xlu0 %6807
    %6809 = vset.pattern.permute.xlu0 0
    %6810 = vperm.xlu0 %6809, %v5811
    %v6811 = vpop.permute.xlu0 %6810
    %6812 = vset.pattern.permute.xlu0 0
    %6813 = vperm.xlu0 %6812, %v5828
    %v6814 = vpop.permute.xlu0 %6813
    %6815 = vset.pattern.permute.xlu0 0
    %6816 = vperm.xlu0 %6815, %v5845
    %v6817 = vpop.permute.xlu0 %6816
    %6818 = vset.pattern.permute.xlu0 0
    %6819 = vperm.xlu0 %6818, %v5862
    %v6820 = vpop.permute.xlu0 %6819
    %6821 = vset.pattern.permute.xlu0 0
    %6822 = vperm.xlu0 %6821, %v5879
    %v6823 = vpop.permute.xlu0 %6822
    %6824 = vset.pattern.permute.xlu0 0
    %6825 = vperm.xlu0 %6824, %v5896
    %v6826 = vpop.permute.xlu0 %6825
    %6827 = vset.pattern.permute.xlu0 0
    %6828 = vperm.xlu0 %6827, %v5913
    %v6829 = vpop.permute.xlu0 %6828
    %6830 = vset.pattern.permute.xlu0 0
    %6831 = vperm.xlu0 %6830, %v5930
    %v6832 = vpop.permute.xlu0 %6831
    %6833 = vset.pattern.permute.xlu0 0
    %6834 = vperm.xlu0 %6833, %v5947
    %v6835 = vpop.permute.xlu0 %6834
    %6836 = vset.pattern.permute.xlu0 0
    %6837 = vperm.xlu0 %6836, %v5964
    %v6838 = vpop.permute.xlu0 %6837
    %6839 = vset.pattern.permute.xlu0 0
    %6840 = vperm.xlu0 %6839, %v5981
    %v6841 = vpop.permute.xlu0 %6840
    %6842 = vset.pattern.permute.xlu0 0
    %6843 = vperm.xlu0 %6842, %v5998
    %v6844 = vpop.permute.xlu0 %6843
    %6845 = vset.pattern.permute.xlu0 0
    %6846 = vperm.xlu0 %6845, %v6015
    %v6847 = vpop.permute.xlu0 %6846
    %6848 = vset.pattern.permute.xlu0 0
    %6849 = vperm.xlu0 %6848, %v6032
    %v6850 = vpop.permute.xlu0 %6849
    %6851 = vset.pattern.permute.xlu0 0
    %6852 = vperm.xlu0 %6851, %v6049
    %v6853 = vpop.permute.xlu0 %6852
    %6854 = vset.pattern.permute.xlu0 0
    %6855 = vperm.xlu0 %6854, %v6066
    %v6856 = vpop.permute.xlu0 %6855
    %6857 = vset.pattern.permute.xlu0 0
    %6858 = vperm.xlu0 %6857, %v6083
    %v6859 = vpop.permute.xlu0 %6858
    %6860 = vset.pattern.permute.xlu0 0
    %6861 = vperm.xlu0 %6860, %v6100
    %v6862 = vpop.permute.xlu0 %6861
    %6863 = vset.pattern.permute.xlu0 0
    %6864 = vperm.xlu0 %6863, %v6117
    %v6865 = vpop.permute.xlu0 %6864
    %6866 = vset.pattern.permute.xlu0 0
    %6867 = vperm.xlu0 %6866, %v6134
    %v6868 = vpop.permute.xlu0 %6867
    %6869 = vset.pattern.permute.xlu0 0
    %6870 = vperm.xlu0 %6869, %v6151
    %v6871 = vpop.permute.xlu0 %6870
    %6872 = vset.pattern.permute.xlu0 0
    %6873 = vperm.xlu0 %6872, %v6168
    %v6874 = vpop.permute.xlu0 %6873
    %6875 = vset.pattern.permute.xlu0 0
    %6876 = vperm.xlu0 %6875, %v6185
    %v6877 = vpop.permute.xlu0 %6876
    %6878 = vset.pattern.permute.xlu0 0
    %6879 = vperm.xlu0 %6878, %v6202
    %v6880 = vpop.permute.xlu0 %6879
    %6881 = vset.pattern.permute.xlu0 0
    %6882 = vperm.xlu0 %6881, %v6219
    %v6883 = vpop.permute.xlu0 %6882
    %6884 = vset.pattern.permute.xlu0 0
    %6885 = vperm.xlu0 %6884, %v6236
    %v6886 = vpop.permute.xlu0 %6885
    %6887 = vset.pattern.permute.xlu0 0
    %6888 = vperm.xlu0 %6887, %v6253
    %v6889 = vpop.permute.xlu0 %6888
    %6890 = vset.pattern.permute.xlu0 0
    %6891 = vperm.xlu0 %6890, %v6270
    %v6892 = vpop.permute.xlu0 %6891
    %6893 = vset.pattern.permute.xlu0 0
    %6894 = vperm.xlu0 %6893, %v6287
    %v6895 = vpop.permute.xlu0 %6894
    %6896 = vset.pattern.permute.xlu0 0
    %6897 = vperm.xlu0 %6896, %v6304
    %v6898 = vpop.permute.xlu0 %6897
    %6899 = vset.pattern.permute.xlu0 0
    %6900 = vperm.xlu0 %6899, %v6321
    %v6901 = vpop.permute.xlu0 %6900
    %6902 = vset.pattern.permute.xlu0 0
    %6903 = vperm.xlu0 %6902, %v6338
    %v6904 = vpop.permute.xlu0 %6903
    %6905 = vset.pattern.permute.xlu0 0
    %6906 = vperm.xlu0 %6905, %v6355
    %v6907 = vpop.permute.xlu0 %6906
    %6908 = vset.pattern.permute.xlu0 0
    %6909 = vperm.xlu0 %6908, %v6372
    %v6910 = vpop.permute.xlu0 %6909
    %6911 = vset.pattern.permute.xlu0 0
    %6912 = vperm.xlu0 %6911, %v6389
    %v6913 = vpop.permute.xlu0 %6912
    %6914 = vset.pattern.permute.xlu0 0
    %6915 = vperm.xlu0 %6914, %v6406
    %v6916 = vpop.permute.xlu0 %6915
    %6917 = vset.pattern.permute.xlu0 0
    %6918 = vperm.xlu0 %6917, %v6423
    %v6919 = vpop.permute.xlu0 %6918
    %6920 = vset.pattern.permute.xlu0 0
    %6921 = vperm.xlu0 %6920, %v6440
    %v6922 = vpop.permute.xlu0 %6921
    %6923 = vset.pattern.permute.xlu0 0
    %6924 = vperm.xlu0 %6923, %v6457
    %v6925 = vpop.permute.xlu0 %6924
    %6926 = vset.pattern.permute.xlu0 0
    %6927 = vperm.xlu0 %6926, %v6474
    %v6928 = vpop.permute.xlu0 %6927
    %6929 = vset.pattern.permute.xlu0 0
    %6930 = vperm.xlu0 %6929, %v6491
    %v6931 = vpop.permute.xlu0 %6930
    %6932 = vset.pattern.permute.xlu0 0
    %6933 = vperm.xlu0 %6932, %v6508
    %v6934 = vpop.permute.xlu0 %6933
    %6935 = vset.pattern.permute.xlu0 0
    %6936 = vperm.xlu0 %6935, %v6525
    %v6937 = vpop.permute.xlu0 %6936
    %6938 = vset.pattern.permute.xlu0 0
    %6939 = vperm.xlu0 %6938, %v6542
    %v6940 = vpop.permute.xlu0 %6939
    %6941 = vset.pattern.permute.xlu0 0
    %6942 = vperm.xlu0 %6941, %v6559
    %v6943 = vpop.permute.xlu0 %6942
    %v6944 = vlaneseq
    %v6945 = vand.u32 %v6944, 127
    %v6946 = vlaneseq
    %v6947 = vshrl.u32 %v6946, 7
    %v6948 = vsub.s32 %v6945, %v6947
    %v6949 = vrot.slane %v6562, %v6948
    %v6950 = vadd.s32 %v6945, 4294967288
    %v6951 = vlaneseq
    %v6952 = vshrl.u32 %v6951, 7
    %v6953 = vsub.s32 %v6950, %v6952
    %v6954 = vrot.slane %v6565, %v6953
    %vm6955 = vcmask 130112
    %v6956 = vsel %vm6955, %v6954, %v6949
    %v6957 = vadd.s32 %v6945, 4294967280
    %v6958 = vlaneseq
    %v6959 = vshrl.u32 %v6958, 7
    %v6960 = vsub.s32 %v6957, %v6959
    %v6961 = vrot.slane %v6568, %v6960
    %vm6962 = vcmask 195712
    %v6963 = vsel %vm6962, %v6961, %v6956
    %v6964 = vadd.s32 %v6945, 4294967272
    %v6965 = vlaneseq
    %v6966 = vshrl.u32 %v6965, 7
    %v6967 = vsub.s32 %v6964, %v6966
    %v6968 = vrot.slane %v6571, %v6967
    %vm6969 = vcmask 261312
    %v6970 = vsel %vm6969, %v6968, %v6963
    %v6971 = vadd.s32 %v6945, 4294967264
    %v6972 = vlaneseq
    %v6973 = vshrl.u32 %v6972, 7
    %v6974 = vsub.s32 %v6971, %v6973
    %v6975 = vrot.slane %v6574, %v6974
    %vm6976 = vcmask 326912
    %v6977 = vsel %vm6976, %v6975, %v6970
    %v6978 = vadd.s32 %v6945, 4294967256
    %v6979 = vlaneseq
    %v6980 = vshrl.u32 %v6979, 7
    %v6981 = vsub.s32 %v6978, %v6980
    %v6982 = vrot.slane %v6577, %v6981
    %vm6983 = vcmask 392512
    %v6984 = vsel %vm6983, %v6982, %v6977
    %v6985 = vadd.s32 %v6945, 4294967248
    %v6986 = vlaneseq
    %v6987 = vshrl.u32 %v6986, 7
    %v6988 = vsub.s32 %v6985, %v6987
    %v6989 = vrot.slane %v6580, %v6988
    %vm6990 = vcmask 458112
    %v6991 = vsel %vm6990, %v6989, %v6984
    %v6992 = vadd.s32 %v6945, 4294967240
    %v6993 = vlaneseq
    %v6994 = vshrl.u32 %v6993, 7
    %v6995 = vsub.s32 %v6992, %v6994
    %v6996 = vrot.slane %v6583, %v6995
    %vm6997 = vcmask 523712
    %v6998 = vsel %vm6997, %v6996, %v6991
    %v6999 = vadd.s32 %v6945, 4294967232
    %v7000 = vlaneseq
    %v7001 = vshrl.u32 %v7000, 7
    %v7002 = vsub.s32 %v6999, %v7001
    %v7003 = vrot.slane %v6586, %v7002
    %vm7004 = vcmask 589312
    %v7005 = vsel %vm7004, %v7003, %v6998
    %v7006 = vadd.s32 %v6945, 4294967224
    %v7007 = vlaneseq
    %v7008 = vshrl.u32 %v7007, 7
    %v7009 = vsub.s32 %v7006, %v7008
    %v7010 = vrot.slane %v6589, %v7009
    %vm7011 = vcmask 654912
    %v7012 = vsel %vm7011, %v7010, %v7005
    %v7013 = vadd.s32 %v6945, 4294967216
    %v7014 = vlaneseq
    %v7015 = vshrl.u32 %v7014, 7
    %v7016 = vsub.s32 %v7013, %v7015
    %v7017 = vrot.slane %v6592, %v7016
    %vm7018 = vcmask 720512
    %v7019 = vsel %vm7018, %v7017, %v7012
    %v7020 = vadd.s32 %v6945, 4294967208
    %v7021 = vlaneseq
    %v7022 = vshrl.u32 %v7021, 7
    %v7023 = vsub.s32 %v7020, %v7022
    %v7024 = vrot.slane %v6595, %v7023
    %vm7025 = vcmask 786112
    %v7026 = vsel %vm7025, %v7024, %v7019
    %v7027 = vadd.s32 %v6945, 4294967200
    %v7028 = vlaneseq
    %v7029 = vshrl.u32 %v7028, 7
    %v7030 = vsub.s32 %v7027, %v7029
    %v7031 = vrot.slane %v6598, %v7030
    %vm7032 = vcmask 851712
    %v7033 = vsel %vm7032, %v7031, %v7026
    %v7034 = vadd.s32 %v6945, 4294967192
    %v7035 = vlaneseq
    %v7036 = vshrl.u32 %v7035, 7
    %v7037 = vsub.s32 %v7034, %v7036
    %v7038 = vrot.slane %v6601, %v7037
    %vm7039 = vcmask 917312
    %v7040 = vsel %vm7039, %v7038, %v7033
    %v7041 = vadd.s32 %v6945, 4294967184
    %v7042 = vlaneseq
    %v7043 = vshrl.u32 %v7042, 7
    %v7044 = vsub.s32 %v7041, %v7043
    %v7045 = vrot.slane %v6604, %v7044
    %vm7046 = vcmask 982912
    %v7047 = vsel %vm7046, %v7045, %v7040
    %v7048 = vadd.s32 %v6945, 4294967176
    %v7049 = vlaneseq
    %v7050 = vshrl.u32 %v7049, 7
    %v7051 = vsub.s32 %v7048, %v7050
    %v7052 = vrot.slane %v6607, %v7051
    %vm7053 = vcmask 1048512
    %v7054 = vsel %vm7053, %v7052, %v7047
    %v7055 = vlaneseq
    %v7056 = vshrl.u32 %v7055, 7
    %v7057 = vsub.s32 %v6945, %v7056
    %v7058 = vrot.slane %v6610, %v7057
    %v7059 = vlaneseq
    %v7060 = vshrl.u32 %v7059, 7
    %v7061 = vsub.s32 %v6950, %v7060
    %v7062 = vrot.slane %v6613, %v7061
    %v7063 = vsel %vm6955, %v7062, %v7058
    %v7064 = vlaneseq
    %v7065 = vshrl.u32 %v7064, 7
    %v7066 = vsub.s32 %v6957, %v7065
    %v7067 = vrot.slane %v6616, %v7066
    %v7068 = vsel %vm6962, %v7067, %v7063
    %v7069 = vlaneseq
    %v7070 = vshrl.u32 %v7069, 7
    %v7071 = vsub.s32 %v6964, %v7070
    %v7072 = vrot.slane %v6619, %v7071
    %v7073 = vsel %vm6969, %v7072, %v7068
    %v7074 = vlaneseq
    %v7075 = vshrl.u32 %v7074, 7
    %v7076 = vsub.s32 %v6971, %v7075
    %v7077 = vrot.slane %v6622, %v7076
    %v7078 = vsel %vm6976, %v7077, %v7073
    %v7079 = vlaneseq
    %v7080 = vshrl.u32 %v7079, 7
    %v7081 = vsub.s32 %v6978, %v7080
    %v7082 = vrot.slane %v6625, %v7081
    %v7083 = vsel %vm6983, %v7082, %v7078
    %v7084 = vlaneseq
    %v7085 = vshrl.u32 %v7084, 7
    %v7086 = vsub.s32 %v6985, %v7085
    %v7087 = vrot.slane %v6628, %v7086
    %v7088 = vsel %vm6990, %v7087, %v7083
    %v7089 = vlaneseq
    %v7090 = vshrl.u32 %v7089, 7
    %v7091 = vsub.s32 %v6992, %v7090
    %v7092 = vrot.slane %v6631, %v7091
    %v7093 = vsel %vm6997, %v7092, %v7088
    %v7094 = vlaneseq
    %v7095 = vshrl.u32 %v7094, 7
    %v7096 = vsub.s32 %v6999, %v7095
    %v7097 = vrot.slane %v6634, %v7096
    %v7098 = vsel %vm7004, %v7097, %v7093
    %v7099 = vlaneseq
    %v7100 = vshrl.u32 %v7099, 7
    %v7101 = vsub.s32 %v7006, %v7100
    %v7102 = vrot.slane %v6637, %v7101
    %v7103 = vsel %vm7011, %v7102, %v7098
    %v7104 = vlaneseq
    %v7105 = vshrl.u32 %v7104, 7
    %v7106 = vsub.s32 %v7013, %v7105
    %v7107 = vrot.slane %v6640, %v7106
    %v7108 = vsel %vm7018, %v7107, %v7103
    %v7109 = vlaneseq
    %v7110 = vshrl.u32 %v7109, 7
    %v7111 = vsub.s32 %v7020, %v7110
    %v7112 = vrot.slane %v6643, %v7111
    %v7113 = vsel %vm7025, %v7112, %v7108
    %v7114 = vlaneseq
    %v7115 = vshrl.u32 %v7114, 7
    %v7116 = vsub.s32 %v7027, %v7115
    %v7117 = vrot.slane %v6646, %v7116
    %v7118 = vsel %vm7032, %v7117, %v7113
    %v7119 = vlaneseq
    %v7120 = vshrl.u32 %v7119, 7
    %v7121 = vsub.s32 %v7034, %v7120
    %v7122 = vrot.slane %v6649, %v7121
    %v7123 = vsel %vm7039, %v7122, %v7118
    %v7124 = vlaneseq
    %v7125 = vshrl.u32 %v7124, 7
    %v7126 = vsub.s32 %v7041, %v7125
    %v7127 = vrot.slane %v6652, %v7126
    %v7128 = vsel %vm7046, %v7127, %v7123
    %v7129 = vlaneseq
    %v7130 = vshrl.u32 %v7129, 7
    %v7131 = vsub.s32 %v7048, %v7130
    %v7132 = vrot.slane %v6655, %v7131
    %v7133 = vsel %vm7053, %v7132, %v7128
    %v7134 = vlaneseq
    %v7135 = vshrl.u32 %v7134, 7
    %v7136 = vsub.s32 %v6945, %v7135
    %v7137 = vrot.slane %v6658, %v7136
    %v7138 = vlaneseq
    %v7139 = vshrl.u32 %v7138, 7
    %v7140 = vsub.s32 %v6950, %v7139
    %v7141 = vrot.slane %v6661, %v7140
    %v7142 = vsel %vm6955, %v7141, %v7137
    %v7143 = vlaneseq
    %v7144 = vshrl.u32 %v7143, 7
    %v7145 = vsub.s32 %v6957, %v7144
    %v7146 = vrot.slane %v6664, %v7145
    %v7147 = vsel %vm6962, %v7146, %v7142
    %v7148 = vlaneseq
    %v7149 = vshrl.u32 %v7148, 7
    %v7150 = vsub.s32 %v6964, %v7149
    %v7151 = vrot.slane %v6667, %v7150
    %v7152 = vsel %vm6969, %v7151, %v7147
    %v7153 = vlaneseq
    %v7154 = vshrl.u32 %v7153, 7
    %v7155 = vsub.s32 %v6971, %v7154
    %v7156 = vrot.slane %v6670, %v7155
    %v7157 = vsel %vm6976, %v7156, %v7152
    %v7158 = vlaneseq
    %v7159 = vshrl.u32 %v7158, 7
    %v7160 = vsub.s32 %v6978, %v7159
    %v7161 = vrot.slane %v6673, %v7160
    %v7162 = vsel %vm6983, %v7161, %v7157
    %v7163 = vlaneseq
    %v7164 = vshrl.u32 %v7163, 7
    %v7165 = vsub.s32 %v6985, %v7164
    %v7166 = vrot.slane %v6676, %v7165
    %v7167 = vsel %vm6990, %v7166, %v7162
    %v7168 = vlaneseq
    %v7169 = vshrl.u32 %v7168, 7
    %v7170 = vsub.s32 %v6992, %v7169
    %v7171 = vrot.slane %v6679, %v7170
    %v7172 = vsel %vm6997, %v7171, %v7167
    %v7173 = vlaneseq
    %v7174 = vshrl.u32 %v7173, 7
    %v7175 = vsub.s32 %v6999, %v7174
    %v7176 = vrot.slane %v6682, %v7175
    %v7177 = vsel %vm7004, %v7176, %v7172
    %v7178 = vlaneseq
    %v7179 = vshrl.u32 %v7178, 7
    %v7180 = vsub.s32 %v7006, %v7179
    %v7181 = vrot.slane %v6685, %v7180
    %v7182 = vsel %vm7011, %v7181, %v7177
    %v7183 = vlaneseq
    %v7184 = vshrl.u32 %v7183, 7
    %v7185 = vsub.s32 %v7013, %v7184
    %v7186 = vrot.slane %v6688, %v7185
    %v7187 = vsel %vm7018, %v7186, %v7182
    %v7188 = vlaneseq
    %v7189 = vshrl.u32 %v7188, 7
    %v7190 = vsub.s32 %v7020, %v7189
    %v7191 = vrot.slane %v6691, %v7190
    %v7192 = vsel %vm7025, %v7191, %v7187
    %v7193 = vlaneseq
    %v7194 = vshrl.u32 %v7193, 7
    %v7195 = vsub.s32 %v7027, %v7194
    %v7196 = vrot.slane %v6694, %v7195
    %v7197 = vsel %vm7032, %v7196, %v7192
    %v7198 = vlaneseq
    %v7199 = vshrl.u32 %v7198, 7
    %v7200 = vsub.s32 %v7034, %v7199
    %v7201 = vrot.slane %v6697, %v7200
    %v7202 = vsel %vm7039, %v7201, %v7197
    %v7203 = vlaneseq
    %v7204 = vshrl.u32 %v7203, 7
    %v7205 = vsub.s32 %v7041, %v7204
    %v7206 = vrot.slane %v6700, %v7205
    %v7207 = vsel %vm7046, %v7206, %v7202
    %v7208 = vlaneseq
    %v7209 = vshrl.u32 %v7208, 7
    %v7210 = vsub.s32 %v7048, %v7209
    %v7211 = vrot.slane %v6703, %v7210
    %v7212 = vsel %vm7053, %v7211, %v7207
    %v7213 = vlaneseq
    %v7214 = vshrl.u32 %v7213, 7
    %v7215 = vsub.s32 %v6945, %v7214
    %v7216 = vrot.slane %v6706, %v7215
    %v7217 = vlaneseq
    %v7218 = vshrl.u32 %v7217, 7
    %v7219 = vsub.s32 %v6950, %v7218
    %v7220 = vrot.slane %v6709, %v7219
    %v7221 = vsel %vm6955, %v7220, %v7216
    %v7222 = vlaneseq
    %v7223 = vshrl.u32 %v7222, 7
    %v7224 = vsub.s32 %v6957, %v7223
    %v7225 = vrot.slane %v6712, %v7224
    %v7226 = vsel %vm6962, %v7225, %v7221
    %v7227 = vlaneseq
    %v7228 = vshrl.u32 %v7227, 7
    %v7229 = vsub.s32 %v6964, %v7228
    %v7230 = vrot.slane %v6715, %v7229
    %v7231 = vsel %vm6969, %v7230, %v7226
    %v7232 = vlaneseq
    %v7233 = vshrl.u32 %v7232, 7
    %v7234 = vsub.s32 %v6971, %v7233
    %v7235 = vrot.slane %v6718, %v7234
    %v7236 = vsel %vm6976, %v7235, %v7231
    %v7237 = vlaneseq
    %v7238 = vshrl.u32 %v7237, 7
    %v7239 = vsub.s32 %v6978, %v7238
    %v7240 = vrot.slane %v6721, %v7239
    %v7241 = vsel %vm6983, %v7240, %v7236
    %v7242 = vlaneseq
    %v7243 = vshrl.u32 %v7242, 7
    %v7244 = vsub.s32 %v6985, %v7243
    %v7245 = vrot.slane %v6724, %v7244
    %v7246 = vsel %vm6990, %v7245, %v7241
    %v7247 = vlaneseq
    %v7248 = vshrl.u32 %v7247, 7
    %v7249 = vsub.s32 %v6992, %v7248
    %v7250 = vrot.slane %v6727, %v7249
    %v7251 = vsel %vm6997, %v7250, %v7246
    %v7252 = vlaneseq
    %v7253 = vshrl.u32 %v7252, 7
    %v7254 = vsub.s32 %v6999, %v7253
    %v7255 = vrot.slane %v6730, %v7254
    %v7256 = vsel %vm7004, %v7255, %v7251
    %v7257 = vlaneseq
    %v7258 = vshrl.u32 %v7257, 7
    %v7259 = vsub.s32 %v7006, %v7258
    %v7260 = vrot.slane %v6733, %v7259
    %v7261 = vsel %vm7011, %v7260, %v7256
    %v7262 = vlaneseq
    %v7263 = vshrl.u32 %v7262, 7
    %v7264 = vsub.s32 %v7013, %v7263
    %v7265 = vrot.slane %v6736, %v7264
    %v7266 = vsel %vm7018, %v7265, %v7261
    %v7267 = vlaneseq
    %v7268 = vshrl.u32 %v7267, 7
    %v7269 = vsub.s32 %v7020, %v7268
    %v7270 = vrot.slane %v6739, %v7269
    %v7271 = vsel %vm7025, %v7270, %v7266
    %v7272 = vlaneseq
    %v7273 = vshrl.u32 %v7272, 7
    %v7274 = vsub.s32 %v7027, %v7273
    %v7275 = vrot.slane %v6742, %v7274
    %v7276 = vsel %vm7032, %v7275, %v7271
    %v7277 = vlaneseq
    %v7278 = vshrl.u32 %v7277, 7
    %v7279 = vsub.s32 %v7034, %v7278
    %v7280 = vrot.slane %v6745, %v7279
    %v7281 = vsel %vm7039, %v7280, %v7276
    %v7282 = vlaneseq
    %v7283 = vshrl.u32 %v7282, 7
    %v7284 = vsub.s32 %v7041, %v7283
    %v7285 = vrot.slane %v6748, %v7284
    %v7286 = vsel %vm7046, %v7285, %v7281
    %v7287 = vlaneseq
    %v7288 = vshrl.u32 %v7287, 7
    %v7289 = vsub.s32 %v7048, %v7288
    %v7290 = vrot.slane %v6751, %v7289
    %v7291 = vsel %vm7053, %v7290, %v7286
    %v7292 = vlaneseq
    %v7293 = vshrl.u32 %v7292, 7
    %v7294 = vsub.s32 %v6945, %v7293
    %v7295 = vrot.slane %v6754, %v7294
    %v7296 = vlaneseq
    %v7297 = vshrl.u32 %v7296, 7
    %v7298 = vsub.s32 %v6950, %v7297
    %v7299 = vrot.slane %v6757, %v7298
    %v7300 = vsel %vm6955, %v7299, %v7295
    %v7301 = vlaneseq
    %v7302 = vshrl.u32 %v7301, 7
    %v7303 = vsub.s32 %v6957, %v7302
    %v7304 = vrot.slane %v6760, %v7303
    %v7305 = vsel %vm6962, %v7304, %v7300
    %v7306 = vlaneseq
    %v7307 = vshrl.u32 %v7306, 7
    %v7308 = vsub.s32 %v6964, %v7307
    %v7309 = vrot.slane %v6763, %v7308
    %v7310 = vsel %vm6969, %v7309, %v7305
    %v7311 = vlaneseq
    %v7312 = vshrl.u32 %v7311, 7
    %v7313 = vsub.s32 %v6971, %v7312
    %v7314 = vrot.slane %v6766, %v7313
    %v7315 = vsel %vm6976, %v7314, %v7310
    %v7316 = vlaneseq
    %v7317 = vshrl.u32 %v7316, 7
    %v7318 = vsub.s32 %v6978, %v7317
    %v7319 = vrot.slane %v6769, %v7318
    %v7320 = vsel %vm6983, %v7319, %v7315
    %v7321 = vlaneseq
    %v7322 = vshrl.u32 %v7321, 7
    %v7323 = vsub.s32 %v6985, %v7322
    %v7324 = vrot.slane %v6772, %v7323
    %v7325 = vsel %vm6990, %v7324, %v7320
    %v7326 = vlaneseq
    %v7327 = vshrl.u32 %v7326, 7
    %v7328 = vsub.s32 %v6992, %v7327
    %v7329 = vrot.slane %v6775, %v7328
    %v7330 = vsel %vm6997, %v7329, %v7325
    %v7331 = vlaneseq
    %v7332 = vshrl.u32 %v7331, 7
    %v7333 = vsub.s32 %v6999, %v7332
    %v7334 = vrot.slane %v6778, %v7333
    %v7335 = vsel %vm7004, %v7334, %v7330
    %v7336 = vlaneseq
    %v7337 = vshrl.u32 %v7336, 7
    %v7338 = vsub.s32 %v7006, %v7337
    %v7339 = vrot.slane %v6781, %v7338
    %v7340 = vsel %vm7011, %v7339, %v7335
    %v7341 = vlaneseq
    %v7342 = vshrl.u32 %v7341, 7
    %v7343 = vsub.s32 %v7013, %v7342
    %v7344 = vrot.slane %v6784, %v7343
    %v7345 = vsel %vm7018, %v7344, %v7340
    %v7346 = vlaneseq
    %v7347 = vshrl.u32 %v7346, 7
    %v7348 = vsub.s32 %v7020, %v7347
    %v7349 = vrot.slane %v6787, %v7348
    %v7350 = vsel %vm7025, %v7349, %v7345
    %v7351 = vlaneseq
    %v7352 = vshrl.u32 %v7351, 7
    %v7353 = vsub.s32 %v7027, %v7352
    %v7354 = vrot.slane %v6790, %v7353
    %v7355 = vsel %vm7032, %v7354, %v7350
    %v7356 = vlaneseq
    %v7357 = vshrl.u32 %v7356, 7
    %v7358 = vsub.s32 %v7034, %v7357
    %v7359 = vrot.slane %v6793, %v7358
    %v7360 = vsel %vm7039, %v7359, %v7355
    %v7361 = vlaneseq
    %v7362 = vshrl.u32 %v7361, 7
    %v7363 = vsub.s32 %v7041, %v7362
    %v7364 = vrot.slane %v6796, %v7363
    %v7365 = vsel %vm7046, %v7364, %v7360
    %v7366 = vlaneseq
    %v7367 = vshrl.u32 %v7366, 7
    %v7368 = vsub.s32 %v7048, %v7367
    %v7369 = vrot.slane %v6799, %v7368
    %v7370 = vsel %vm7053, %v7369, %v7365
    %v7371 = vlaneseq
    %v7372 = vshrl.u32 %v7371, 7
    %v7373 = vsub.s32 %v6945, %v7372
    %v7374 = vrot.slane %v6802, %v7373
    %v7375 = vlaneseq
    %v7376 = vshrl.u32 %v7375, 7
    %v7377 = vsub.s32 %v6950, %v7376
    %v7378 = vrot.slane %v6805, %v7377
    %v7379 = vsel %vm6955, %v7378, %v7374
    %v7380 = vlaneseq
    %v7381 = vshrl.u32 %v7380, 7
    %v7382 = vsub.s32 %v6957, %v7381
    %v7383 = vrot.slane %v6808, %v7382
    %v7384 = vsel %vm6962, %v7383, %v7379
    %v7385 = vlaneseq
    %v7386 = vshrl.u32 %v7385, 7
    %v7387 = vsub.s32 %v6964, %v7386
    %v7388 = vrot.slane %v6811, %v7387
    %v7389 = vsel %vm6969, %v7388, %v7384
    %v7390 = vlaneseq
    %v7391 = vshrl.u32 %v7390, 7
    %v7392 = vsub.s32 %v6971, %v7391
    %v7393 = vrot.slane %v6814, %v7392
    %v7394 = vsel %vm6976, %v7393, %v7389
    %v7395 = vlaneseq
    %v7396 = vshrl.u32 %v7395, 7
    %v7397 = vsub.s32 %v6978, %v7396
    %v7398 = vrot.slane %v6817, %v7397
    %v7399 = vsel %vm6983, %v7398, %v7394
    %v7400 = vlaneseq
    %v7401 = vshrl.u32 %v7400, 7
    %v7402 = vsub.s32 %v6985, %v7401
    %v7403 = vrot.slane %v6820, %v7402
    %v7404 = vsel %vm6990, %v7403, %v7399
    %v7405 = vlaneseq
    %v7406 = vshrl.u32 %v7405, 7
    %v7407 = vsub.s32 %v6992, %v7406
    %v7408 = vrot.slane %v6823, %v7407
    %v7409 = vsel %vm6997, %v7408, %v7404
    %v7410 = vlaneseq
    %v7411 = vshrl.u32 %v7410, 7
    %v7412 = vsub.s32 %v6999, %v7411
    %v7413 = vrot.slane %v6826, %v7412
    %v7414 = vsel %vm7004, %v7413, %v7409
    %v7415 = vlaneseq
    %v7416 = vshrl.u32 %v7415, 7
    %v7417 = vsub.s32 %v7006, %v7416
    %v7418 = vrot.slane %v6829, %v7417
    %v7419 = vsel %vm7011, %v7418, %v7414
    %v7420 = vlaneseq
    %v7421 = vshrl.u32 %v7420, 7
    %v7422 = vsub.s32 %v7013, %v7421
    %v7423 = vrot.slane %v6832, %v7422
    %v7424 = vsel %vm7018, %v7423, %v7419
    %v7425 = vlaneseq
    %v7426 = vshrl.u32 %v7425, 7
    %v7427 = vsub.s32 %v7020, %v7426
    %v7428 = vrot.slane %v6835, %v7427
    %v7429 = vsel %vm7025, %v7428, %v7424
    %v7430 = vlaneseq
    %v7431 = vshrl.u32 %v7430, 7
    %v7432 = vsub.s32 %v7027, %v7431
    %v7433 = vrot.slane %v6838, %v7432
    %v7434 = vsel %vm7032, %v7433, %v7429
    %v7435 = vlaneseq
    %v7436 = vshrl.u32 %v7435, 7
    %v7437 = vsub.s32 %v7034, %v7436
    %v7438 = vrot.slane %v6841, %v7437
    %v7439 = vsel %vm7039, %v7438, %v7434
    %v7440 = vlaneseq
    %v7441 = vshrl.u32 %v7440, 7
    %v7442 = vsub.s32 %v7041, %v7441
    %v7443 = vrot.slane %v6844, %v7442
    %v7444 = vsel %vm7046, %v7443, %v7439
    %v7445 = vlaneseq
    %v7446 = vshrl.u32 %v7445, 7
    %v7447 = vsub.s32 %v7048, %v7446
    %v7448 = vrot.slane %v6847, %v7447
    %v7449 = vsel %vm7053, %v7448, %v7444
    %v7450 = vlaneseq
    %v7451 = vshrl.u32 %v7450, 7
    %v7452 = vsub.s32 %v6945, %v7451
    %v7453 = vrot.slane %v6850, %v7452
    %v7454 = vlaneseq
    %v7455 = vshrl.u32 %v7454, 7
    %v7456 = vsub.s32 %v6950, %v7455
    %v7457 = vrot.slane %v6853, %v7456
    %v7458 = vsel %vm6955, %v7457, %v7453
    %v7459 = vlaneseq
    %v7460 = vshrl.u32 %v7459, 7
    %v7461 = vsub.s32 %v6957, %v7460
    %v7462 = vrot.slane %v6856, %v7461
    %v7463 = vsel %vm6962, %v7462, %v7458
    %v7464 = vlaneseq
    %v7465 = vshrl.u32 %v7464, 7
    %v7466 = vsub.s32 %v6964, %v7465
    %v7467 = vrot.slane %v6859, %v7466
    %v7468 = vsel %vm6969, %v7467, %v7463
    %v7469 = vlaneseq
    %v7470 = vshrl.u32 %v7469, 7
    %v7471 = vsub.s32 %v6971, %v7470
    %v7472 = vrot.slane %v6862, %v7471
    %v7473 = vsel %vm6976, %v7472, %v7468
    %v7474 = vlaneseq
    %v7475 = vshrl.u32 %v7474, 7
    %v7476 = vsub.s32 %v6978, %v7475
    %v7477 = vrot.slane %v6865, %v7476
    %v7478 = vsel %vm6983, %v7477, %v7473
    %v7479 = vlaneseq
    %v7480 = vshrl.u32 %v7479, 7
    %v7481 = vsub.s32 %v6985, %v7480
    %v7482 = vrot.slane %v6868, %v7481
    %v7483 = vsel %vm6990, %v7482, %v7478
    %v7484 = vlaneseq
    %v7485 = vshrl.u32 %v7484, 7
    %v7486 = vsub.s32 %v6992, %v7485
    %v7487 = vrot.slane %v6871, %v7486
    %v7488 = vsel %vm6997, %v7487, %v7483
    %v7489 = vlaneseq
    %v7490 = vshrl.u32 %v7489, 7
    %v7491 = vsub.s32 %v6999, %v7490
    %v7492 = vrot.slane %v6874, %v7491
    %v7493 = vsel %vm7004, %v7492, %v7488
    %v7494 = vlaneseq
    %v7495 = vshrl.u32 %v7494, 7
    %v7496 = vsub.s32 %v7006, %v7495
    %v7497 = vrot.slane %v6877, %v7496
    %v7498 = vsel %vm7011, %v7497, %v7493
    %v7499 = vlaneseq
    %v7500 = vshrl.u32 %v7499, 7
    %v7501 = vsub.s32 %v7013, %v7500
    %v7502 = vrot.slane %v6880, %v7501
    %v7503 = vsel %vm7018, %v7502, %v7498
    %v7504 = vlaneseq
    %v7505 = vshrl.u32 %v7504, 7
    %v7506 = vsub.s32 %v7020, %v7505
    %v7507 = vrot.slane %v6883, %v7506
    %v7508 = vsel %vm7025, %v7507, %v7503
    %v7509 = vlaneseq
    %v7510 = vshrl.u32 %v7509, 7
    %v7511 = vsub.s32 %v7027, %v7510
    %v7512 = vrot.slane %v6886, %v7511
    %v7513 = vsel %vm7032, %v7512, %v7508
    %v7514 = vlaneseq
    %v7515 = vshrl.u32 %v7514, 7
    %v7516 = vsub.s32 %v7034, %v7515
    %v7517 = vrot.slane %v6889, %v7516
    %v7518 = vsel %vm7039, %v7517, %v7513
    %v7519 = vlaneseq
    %v7520 = vshrl.u32 %v7519, 7
    %v7521 = vsub.s32 %v7041, %v7520
    %v7522 = vrot.slane %v6892, %v7521
    %v7523 = vsel %vm7046, %v7522, %v7518
    %v7524 = vlaneseq
    %v7525 = vshrl.u32 %v7524, 7
    %v7526 = vsub.s32 %v7048, %v7525
    %v7527 = vrot.slane %v6895, %v7526
    %v7528 = vsel %vm7053, %v7527, %v7523
    %v7529 = vlaneseq
    %v7530 = vshrl.u32 %v7529, 7
    %v7531 = vsub.s32 %v6945, %v7530
    %v7532 = vrot.slane %v6898, %v7531
    %v7533 = vlaneseq
    %v7534 = vshrl.u32 %v7533, 7
    %v7535 = vsub.s32 %v6950, %v7534
    %v7536 = vrot.slane %v6901, %v7535
    %v7537 = vsel %vm6955, %v7536, %v7532
    %v7538 = vlaneseq
    %v7539 = vshrl.u32 %v7538, 7
    %v7540 = vsub.s32 %v6957, %v7539
    %v7541 = vrot.slane %v6904, %v7540
    %v7542 = vsel %vm6962, %v7541, %v7537
    %v7543 = vlaneseq
    %v7544 = vshrl.u32 %v7543, 7
    %v7545 = vsub.s32 %v6964, %v7544
    %v7546 = vrot.slane %v6907, %v7545
    %v7547 = vsel %vm6969, %v7546, %v7542
    %v7548 = vlaneseq
    %v7549 = vshrl.u32 %v7548, 7
    %v7550 = vsub.s32 %v6971, %v7549
    %v7551 = vrot.slane %v6910, %v7550
    %v7552 = vsel %vm6976, %v7551, %v7547
    %v7553 = vlaneseq
    %v7554 = vshrl.u32 %v7553, 7
    %v7555 = vsub.s32 %v6978, %v7554
    %v7556 = vrot.slane %v6913, %v7555
    %v7557 = vsel %vm6983, %v7556, %v7552
    %v7558 = vlaneseq
    %v7559 = vshrl.u32 %v7558, 7
    %v7560 = vsub.s32 %v6985, %v7559
    %v7561 = vrot.slane %v6916, %v7560
    %v7562 = vsel %vm6990, %v7561, %v7557
    %v7563 = vlaneseq
    %v7564 = vshrl.u32 %v7563, 7
    %v7565 = vsub.s32 %v6992, %v7564
    %v7566 = vrot.slane %v6919, %v7565
    %v7567 = vsel %vm6997, %v7566, %v7562
    %v7568 = vlaneseq
    %v7569 = vshrl.u32 %v7568, 7
    %v7570 = vsub.s32 %v6999, %v7569
    %v7571 = vrot.slane %v6922, %v7570
    %v7572 = vsel %vm7004, %v7571, %v7567
    %v7573 = vlaneseq
    %v7574 = vshrl.u32 %v7573, 7
    %v7575 = vsub.s32 %v7006, %v7574
    %v7576 = vrot.slane %v6925, %v7575
    %v7577 = vsel %vm7011, %v7576, %v7572
    %v7578 = vlaneseq
    %v7579 = vshrl.u32 %v7578, 7
    %v7580 = vsub.s32 %v7013, %v7579
    %v7581 = vrot.slane %v6928, %v7580
    %v7582 = vsel %vm7018, %v7581, %v7577
    %v7583 = vlaneseq
    %v7584 = vshrl.u32 %v7583, 7
    %v7585 = vsub.s32 %v7020, %v7584
    %v7586 = vrot.slane %v6931, %v7585
    %v7587 = vsel %vm7025, %v7586, %v7582
    %v7588 = vlaneseq
    %v7589 = vshrl.u32 %v7588, 7
    %v7590 = vsub.s32 %v7027, %v7589
    %v7591 = vrot.slane %v6934, %v7590
    %v7592 = vsel %vm7032, %v7591, %v7587
    %v7593 = vlaneseq
    %v7594 = vshrl.u32 %v7593, 7
    %v7595 = vsub.s32 %v7034, %v7594
    %v7596 = vrot.slane %v6937, %v7595
    %v7597 = vsel %vm7039, %v7596, %v7592
    %v7598 = vlaneseq
    %v7599 = vshrl.u32 %v7598, 7
    %v7600 = vsub.s32 %v7041, %v7599
    %v7601 = vrot.slane %v6940, %v7600
    %v7602 = vsel %vm7046, %v7601, %v7597
    %v7603 = vlaneseq
    %v7604 = vshrl.u32 %v7603, 7
    %v7605 = vsub.s32 %v7048, %v7604
    %v7606 = vrot.slane %v6943, %v7605
    %v7607 = vsel %vm7053, %v7606, %v7602
    %vm7608 = vcmask 1041409
    %v7609 = vsel %vm7608, %v7370, %v7054
    %v7610 = vsel %vm7608, %v7449, %v7133
    %v7611 = vsel %vm7608, %v7528, %v7212
    %v7612 = vsel %vm7608, %v7607, %v7291
    %v7613 = vcombine.low %v7609, %v7610
    %v7614 = vcombine.low %v7611, %v7612
    %v7616 = vunpack.c.l.s4 1983009808
    %v7617 = vunpack.c.0.s8 %v7616
    %v7618 = vlaneseq
    %v7619 = vshrl.u32 %v7618, 7
    %v7620 = vsub.s32 %v7617, %v7619
    %v7621 = vrot.slane %v7613, %v7620
    %v7623 = vunpack.c.l.s4 1983009808
    %v7624 = vunpack.c.0.s8 %v7623
    %v7625 = vlaneseq
    %v7626 = vshrl.u32 %v7625, 7
    %v7627 = vsub.s32 %v7624, %v7626
    %v7628 = vrot.slane %v7614, %v7627
    %v7629 = vcombine.low %v7621, %v7628
    %v7631 = vadd.f32 %v671, %v7629
    %7632 = vst [vmem:[#allocation2] sm:$0xff] %v7631
    // Predicated region
    $region18: #{tpu_custom_call.1} parent=1 // pred_check
      %p7633 = pneg %p26
    $region19: #{tpu_custom_call.1} parent=1 // pred_check_branch
      %7635 = sbr.rel (%p7633) target = $region21
    $region20: #{tpu_custom_call.1} parent=1 // pred_region
      %v7636 = vld [vmem:[#allocation2] sm:$0xff]
      %v7637 = vmul.f32 %v7636, 0.00390625
      %v7638 = vld [vmem:[%s1] sm:$0xff]
      %v7639 = vld [vmem:[%s1 + $0x8] sm:$0xff]
      %v7640 = vld [vmem:[%s1 + $0x10] sm:$0xff]
      %v7641 = vld [vmem:[%s1 + $0x18] sm:$0xff]
      %v7642 = vld [vmem:[%s1 + $0x20] sm:$0xff]
      %v7643 = vld [vmem:[%s1 + $0x28] sm:$0xff]
      %v7644 = vld [vmem:[%s1 + $0x30] sm:$0xff]
      %v7645 = vld [vmem:[%s1 + $0x38] sm:$0xff]
      %v7646 = vld [vmem:[%s1 + $0x40] sm:$0xff]
      %v7647 = vld [vmem:[%s1 + $0x48] sm:$0xff]
      %v7648 = vld [vmem:[%s1 + $0x50] sm:$0xff]
      %v7649 = vld [vmem:[%s1 + $0x58] sm:$0xff]
      %v7650 = vld [vmem:[%s1 + $0x60] sm:$0xff]
      %v7651 = vld [vmem:[%s1 + $0x68] sm:$0xff]
      %v7652 = vld [vmem:[%s1 + $0x70] sm:$0xff]
      %v7653 = vld [vmem:[%s1 + $0x78] sm:$0xff]
      %v7654 = vld [vmem:[%s1 + $0x80] sm:$0xff]
      %v7655 = vld [vmem:[%s1 + $0x88] sm:$0xff]
      %v7656 = vld [vmem:[%s1 + $0x90] sm:$0xff]
      %v7657 = vld [vmem:[%s1 + $0x98] sm:$0xff]
      %v7658 = vld [vmem:[%s1 + $0xa0] sm:$0xff]
      %v7659 = vld [vmem:[%s1 + $0xa8] sm:$0xff]
      %v7660 = vld [vmem:[%s1 + $0xb0] sm:$0xff]
      %v7661 = vld [vmem:[%s1 + $0xb8] sm:$0xff]
      %v7662 = vld [vmem:[%s1 + $0xc0] sm:$0xff]
      %v7663 = vld [vmem:[%s1 + $0xc8] sm:$0xff]
      %v7664 = vld [vmem:[%s1 + $0xd0] sm:$0xff]
      %v7665 = vld [vmem:[%s1 + $0xd8] sm:$0xff]
      %v7666 = vld [vmem:[%s1 + $0xe0] sm:$0xff]
      %v7667 = vld [vmem:[%s1 + $0xe8] sm:$0xff]
      %v7668 = vld [vmem:[%s1 + $0xf0] sm:$0xff]
      %v7669 = vld [vmem:[%s1 + $0xf8] sm:$0xff]
      %v7670 = vld [vmem:[%s1 + $0x100] sm:$0xff]
      %v7671 = vld [vmem:[%s1 + $0x108] sm:$0xff]
      %v7672 = vld [vmem:[%s1 + $0x110] sm:$0xff]
      %v7673 = vld [vmem:[%s1 + $0x118] sm:$0xff]
      %v7674 = vld [vmem:[%s1 + $0x120] sm:$0xff]
      %v7675 = vld [vmem:[%s1 + $0x128] sm:$0xff]
      %v7676 = vld [vmem:[%s1 + $0x130] sm:$0xff]
      %v7677 = vld [vmem:[%s1 + $0x138] sm:$0xff]
      %v7678 = vld [vmem:[%s1 + $0x140] sm:$0xff]
      %v7679 = vld [vmem:[%s1 + $0x148] sm:$0xff]
      %v7680 = vld [vmem:[%s1 + $0x150] sm:$0xff]
      %v7681 = vld [vmem:[%s1 + $0x158] sm:$0xff]
      %v7682 = vld [vmem:[%s1 + $0x160] sm:$0xff]
      %v7683 = vld [vmem:[%s1 + $0x168] sm:$0xff]
      %v7684 = vld [vmem:[%s1 + $0x170] sm:$0xff]
      %v7685 = vld [vmem:[%s1 + $0x178] sm:$0xff]
      %v7686 = vld [vmem:[%s1 + $0x180] sm:$0xff]
      %v7687 = vld [vmem:[%s1 + $0x188] sm:$0xff]
      %v7688 = vld [vmem:[%s1 + $0x190] sm:$0xff]
      %v7689 = vld [vmem:[%s1 + $0x198] sm:$0xff]
      %v7690 = vld [vmem:[%s1 + $0x1a0] sm:$0xff]
      %v7691 = vld [vmem:[%s1 + $0x1a8] sm:$0xff]
      %v7692 = vld [vmem:[%s1 + $0x1b0] sm:$0xff]
      %v7693 = vld [vmem:[%s1 + $0x1b8] sm:$0xff]
      %v7694 = vld [vmem:[%s1 + $0x1c0] sm:$0xff]
      %v7695 = vld [vmem:[%s1 + $0x1c8] sm:$0xff]
      %v7696 = vld [vmem:[%s1 + $0x1d0] sm:$0xff]
      %v7697 = vld [vmem:[%s1 + $0x1d8] sm:$0xff]
      %v7698 = vld [vmem:[%s1 + $0x1e0] sm:$0xff]
      %v7699 = vld [vmem:[%s1 + $0x1e8] sm:$0xff]
      %v7700 = vld [vmem:[%s1 + $0x1f0] sm:$0xff]
      %v7701 = vld [vmem:[%s1 + $0x1f8] sm:$0xff]
      %v7703 = vcombine.high %v7637, %v7637
      %v7705 = vunpack.c.l.s4 1983009808
      %v7706 = vunpack.c.0.s8 %v7705
      %v7707 = vlaneseq
      %v7708 = vshrl.u32 %v7707, 7
      %v7709 = vsub.s32 %v7706, %v7708
      %v7710 = vrot.slane %v7637, %v7709
      %v7712 = vunpack.c.l.s4 1983009808
      %v7713 = vunpack.c.0.s8 %v7712
      %v7714 = vlaneseq
      %v7715 = vshrl.u32 %v7714, 7
      %v7716 = vsub.s32 %v7713, %v7715
      %v7717 = vrot.slane %v7703, %v7716
      %v7718 = vcombine.high %v7710, %v7710
      %v7719 = vcombine.high %v7717, %v7717
      %7724 = vmatprep.subr.mxu0 0.0
      %7725 = vmatpush1.msra.mxu0 %v7638
      %7726 = vmatprep.subr.mxu0 0.0
      %7727 = vmatpush1.msra.mxu0 %v7639
      %7728 = vmatprep.subr.mxu0 0.0
      %7729 = vmatpush1.msra.mxu0 %v7640
      %7730 = vmatprep.subr.mxu0 0.0
      %7731 = vmatpush1.msra.mxu0 %v7641
      %7732 = vmatprep.subr.mxu0 0.0
      %7733 = vmatpush1.msra.mxu0 %v7642
      %7734 = vmatprep.subr.mxu0 0.0
      %7735 = vmatpush1.msra.mxu0 %v7643
      %7736 = vmatprep.subr.mxu0 0.0
      %7737 = vmatpush1.msra.mxu0 %v7644
      %7738 = vmatprep.subr.mxu0 0.0
      %7739 = vmatpush1.msra.mxu0 %v7645
      %7740 = vmatprep.subr.mxu0 0.0
      %7741 = vmatpush1.msra.mxu0 %v7646
      %7742 = vmatprep.subr.mxu0 0.0
      %7743 = vmatpush1.msra.mxu0 %v7647
      %7744 = vmatprep.subr.mxu0 0.0
      %7745 = vmatpush1.msra.mxu0 %v7648
      %7746 = vmatprep.subr.mxu0 0.0
      %7747 = vmatpush1.msra.mxu0 %v7649
      %7748 = vmatprep.subr.mxu0 0.0
      %7749 = vmatpush1.msra.mxu0 %v7650
      %7750 = vmatprep.subr.mxu0 0.0
      %7751 = vmatpush1.msra.mxu0 %v7651
      %7752 = vmatprep.subr.mxu0 0.0
      %7753 = vmatpush1.msra.mxu0 %v7652
      %7754 = vmatprep.subr.mxu0 0.0
      %7755 = vmatpush1.msra.mxu0 %v7653
      %7756 = vmatprep.subr.mxu0 0.0
      %7757 = vmatpush1.msra.mxu0 %v7654
      %7758 = vmatprep.subr.mxu0 0.0
      %7759 = vmatpush1.msra.mxu0 %v7655
      %7760 = vmatprep.subr.mxu0 0.0
      %7761 = vmatpush1.msra.mxu0 %v7656
      %7762 = vmatprep.subr.mxu0 0.0
      %7763 = vmatpush1.msra.mxu0 %v7657
      %7764 = vmatprep.subr.mxu0 0.0
      %7765 = vmatpush1.msra.mxu0 %v7658
      %7766 = vmatprep.subr.mxu0 0.0
      %7767 = vmatpush1.msra.mxu0 %v7659
      %7768 = vmatprep.subr.mxu0 0.0
      %7769 = vmatpush1.msra.mxu0 %v7660
      %7770 = vmatprep.subr.mxu0 0.0
      %7771 = vmatpush1.msra.mxu0 %v7661
      %7772 = vmatprep.subr.mxu0 0.0
      %7773 = vmatpush1.msra.mxu0 %v7662
      %7774 = vmatprep.subr.mxu0 0.0
      %7775 = vmatpush1.msra.mxu0 %v7663
      %7776 = vmatprep.subr.mxu0 0.0
      %7777 = vmatpush1.msra.mxu0 %v7664
      %7778 = vmatprep.subr.mxu0 0.0
      %7779 = vmatpush1.msra.mxu0 %v7665
      %7780 = vmatprep.subr.mxu0 0.0
      %7781 = vmatpush1.msra.mxu0 %v7666
      %7782 = vmatprep.subr.mxu0 0.0
      %7783 = vmatpush1.msra.mxu0 %v7667
      %7784 = vmatprep.subr.mxu0 0.0
      %7785 = vmatpush1.msra.mxu0 %v7668
      %7786 = vmatprep.subr.mxu0 0.0
      %7787 = vmatpush1.msra.mxu0 %v7669
      %7788 = vmatprep.mubr.f32.mxu0 %v7718
      %7789 = vmatmul.mubr.f32.gmra.mrb[0].mxu0 %v7710
      %v7790 = vpop.f32.mrb[0].mxu0
      %v7791 = vadd.f32 0.0, %v7790
      %v7792 = vpop.f32.mrb[0].mxu0
      %7793 = vdwg.mxu0
      %7794 = vmatprep.subr.mxu0 0.0
      %7795 = vmatpush1.msra.mxu0 %v7670
      %7796 = vmatprep.subr.mxu0 0.0
      %7797 = vmatpush1.msra.mxu0 %v7671
      %7798 = vmatprep.subr.mxu0 0.0
      %7799 = vmatpush1.msra.mxu0 %v7672
      %7800 = vmatprep.subr.mxu0 0.0
      %7801 = vmatpush1.msra.mxu0 %v7673
      %7802 = vmatprep.subr.mxu0 0.0
      %7803 = vmatpush1.msra.mxu0 %v7674
      %7804 = vmatprep.subr.mxu0 0.0
      %7805 = vmatpush1.msra.mxu0 %v7675
      %7806 = vmatprep.subr.mxu0 0.0
      %7807 = vmatpush1.msra.mxu0 %v7676
      %7808 = vmatprep.subr.mxu0 0.0
      %7809 = vmatpush1.msra.mxu0 %v7677
      %7810 = vmatprep.subr.mxu0 0.0
      %7811 = vmatpush1.msra.mxu0 %v7678
      %7812 = vmatprep.subr.mxu0 0.0
      %7813 = vmatpush1.msra.mxu0 %v7679
      %7814 = vmatprep.subr.mxu0 0.0
      %7815 = vmatpush1.msra.mxu0 %v7680
      %7816 = vmatprep.subr.mxu0 0.0
      %7817 = vmatpush1.msra.mxu0 %v7681
      %7818 = vmatprep.subr.mxu0 0.0
      %7819 = vmatpush1.msra.mxu0 %v7682
      %7820 = vmatprep.subr.mxu0 0.0
      %7821 = vmatpush1.msra.mxu0 %v7683
      %7822 = vmatprep.subr.mxu0 0.0
      %7823 = vmatpush1.msra.mxu0 %v7684
      %7824 = vmatprep.subr.mxu0 0.0
      %7825 = vmatpush1.msra.mxu0 %v7685
      %7826 = vmatprep.subr.mxu0 0.0
      %7827 = vmatpush1.msra.mxu0 %v7686
      %7828 = vmatprep.subr.mxu0 0.0
      %7829 = vmatpush1.msra.mxu0 %v7687
      %7830 = vmatprep.subr.mxu0 0.0
      %7831 = vmatpush1.msra.mxu0 %v7688
      %7832 = vmatprep.subr.mxu0 0.0
      %7833 = vmatpush1.msra.mxu0 %v7689
      %7834 = vmatprep.subr.mxu0 0.0
      %7835 = vmatpush1.msra.mxu0 %v7690
      %7836 = vmatprep.subr.mxu0 0.0
      %7837 = vmatpush1.msra.mxu0 %v7691
      %7838 = vmatprep.subr.mxu0 0.0
      %7839 = vmatpush1.msra.mxu0 %v7692
      %7840 = vmatprep.subr.mxu0 0.0
      %7841 = vmatpush1.msra.mxu0 %v7693
      %7842 = vmatprep.subr.mxu0 0.0
      %7843 = vmatpush1.msra.mxu0 %v7694
      %7844 = vmatprep.subr.mxu0 0.0
      %7845 = vmatpush1.msra.mxu0 %v7695
      %7846 = vmatprep.subr.mxu0 0.0
      %7847 = vmatpush1.msra.mxu0 %v7696
      %7848 = vmatprep.subr.mxu0 0.0
      %7849 = vmatpush1.msra.mxu0 %v7697
      %7850 = vmatprep.subr.mxu0 0.0
      %7851 = vmatpush1.msra.mxu0 %v7698
      %7852 = vmatprep.subr.mxu0 0.0
      %7853 = vmatpush1.msra.mxu0 %v7699
      %7854 = vmatprep.subr.mxu0 0.0
      %7855 = vmatpush1.msra.mxu0 %v7700
      %7856 = vmatprep.subr.mxu0 0.0
      %7857 = vmatpush1.msra.mxu0 %v7701
      %7858 = vmatprep.mubr.f32.mxu0 %v7719
      %7859 = vmatmul.mubr.f32.gmra.mrb[0].mxu0 %v7717
      %v7860 = vpop.f32.mrb[0].mxu0
      %v7861 = vadd.f32 %v7791, %v7860
      %v7862 = vpop.f32.mrb[0].mxu0
      %7863 = vdwg.mxu0
      %vm7864 = vcmask 41984
      %7865 = vst.msk [vmem:[#allocation6] sm:$0x3] %vm7864, %v7861
    $region21: #{tpu_custom_call.1} parent=1 // pred_fallthru
      _
    // Predicated region
    $region22: #{tpu_custom_call.1} parent=1 // pred_check
      _
    $region23: #{tpu_custom_call.1} parent=1 // pred_check_branch
      %7867 = sbr.rel (0) target = $region25
    $region24: #{tpu_custom_call.1} parent=1 // pred_region
      %s7869 = ssub.s32 32, 32
      %7870 = vsyncadd [#allocation5], %s7869
      %s7872 = sshll.u32 [#allocation6], 4
      %s7873 = int_to_ptr.vmem [resolvable:$true] %s7872
      %7875 = dma.vmem_to_hbm [thread:$0]  %s7873, 32, %s2, [#allocation5]
    $region25: #{tpu_custom_call.1} parent=1 // pred_fallthru
      _
    // Predicated region
    $region26: #{tpu_custom_call.1} parent=1 // pred_check
      _
    $region27: #{tpu_custom_call.1} parent=1 // pred_check_branch
      %7877 = sbr.rel (0) target = $region29
    $region28: #{tpu_custom_call.1} parent=1 // pred_region
      %7878 = dma.done [#allocation5], 32
    $region29: #{tpu_custom_call.1} parent=1 // pred_fallthru
      _
    %7879 = vsyncpa [#allocation4], 1
    %7880 = vsyncpa [#allocation5], 1

</llo_original>
